<compile_context>
chip_gen: v5e
topology: v5e:2x2
jax: 0.10.0
libtpu: 0.0.40
codegen_flags: <defaults>
</compile_context>

<pallas_src>
import functools
import math

import jax
import jax.numpy as jnp
from jax import lax
from jax.experimental import pallas as pl
from jax.experimental.pallas import tpu as pltpu

NEG_MAX = -jnp.finfo(jnp.float32).max
LN_EPS = 1e-5


# ----------------------------- in-kernel helpers ----------------------------

def _layernorm(x, g, b):
    x = x.astype(jnp.float32)
    mean = jnp.mean(x, axis=-1, keepdims=True)
    var = jnp.mean((x - mean) ** 2, axis=-1, keepdims=True)
    return (x - mean) * lax.rsqrt(var + LN_EPS) * g + b


# ----------------------------- Pallas kernels ------------------------------

def _dense_kernel(x_ref, w_ref, b_ref, o_ref):
    o_ref[...] = (jnp.dot(x_ref[...], w_ref[...],
                          preferred_element_type=jnp.float32)
                  + b_ref[...]).astype(o_ref.dtype)


def _ln_dense_kernel(x_ref, g_ref, bt_ref, w_ref, b_ref, o_ref):
    # PreNorm LayerNorm fused with the consuming Linear (q/k/v projection).
    xn = _layernorm(x_ref[...], g_ref[...], bt_ref[...])
    o_ref[...] = (jnp.dot(xn, w_ref[...], preferred_element_type=jnp.float32)
                  + b_ref[...]).astype(o_ref.dtype)


def _ln_ff_kernel(x_ref, g_ref, bt_ref, w1_ref, b1_ref, w2_ref, b2_ref, o_ref):
    # PreNorm LayerNorm fused with FeedForward: LN -> Linear -> GELU -> Linear.
    xn = _layernorm(x_ref[...], g_ref[...], bt_ref[...])
    h = jnp.dot(xn, w1_ref[...], preferred_element_type=jnp.float32) + b1_ref[...]
    # exact GELU (erf form), matching torch.nn.GELU() default
    h = 0.5 * h * (1.0 + lax.erf(h * (1.0 / math.sqrt(2.0))))
    o_ref[...] = (jnp.dot(h, w2_ref[...], preferred_element_type=jnp.float32)
                  + b2_ref[...]).astype(o_ref.dtype)


def _gated_residual_kernel(x_ref, r_ref, wa_ref, wb_ref, o_ref):
    # cat([x, res, x-res], -1) @ Wg  ==  x @ (w1+w3) + r @ (w2-w3)
    x = x_ref[...].astype(jnp.float32)
    r = r_ref[...].astype(jnp.float32)
    logit = (jnp.dot(x, wa_ref[...], preferred_element_type=jnp.float32)
             + jnp.dot(r, wb_ref[...], preferred_element_type=jnp.float32))
    gate = jax.nn.sigmoid(logit)                               # (M, 1)
    o_ref[...] = (x * gate + r * (1.0 - gate)).astype(o_ref.dtype)


def _graph_attn_kernel(qkv_ref, e_ref, m_ref, o_ref, *, heads, dim_head, scale):
    # One batch per grid step, all heads processed in VMEM (lane-dense output).
    inner = heads * dim_head
    qkv = qkv_ref[0].astype(jnp.float32)      # (N, 3*inner)
    e = e_ref[0].astype(jnp.float32)          # (N, N, inner)  (not per-head split)
    m = m_ref[0]                              # (N, N) float 0/1

    outs = []
    for h in range(heads):                    # static unroll (heads is small)
        lo = h * dim_head
        q = qkv[:, lo:lo + dim_head]                          # (N, dh)
        k = qkv[:, inner + lo:inner + lo + dim_head]          # (N, dh)
        v = qkv[:, 2 * inner + lo:2 * inner + lo + dim_head]  # (N, dh)
        eh = e[:, :, lo:lo + dim_head]                        # (N, N, dh)

        # dominant contraction on the MXU: q @ k^T
        sim = jnp.einsum("id,jd->ij", q, k,
                         preferred_element_type=jnp.float32)
        # edge interaction is diagonal in i -> VPU/XLU reduce (no k+e temp)
        sim = sim + jnp.sum(q[:, None, :] * eh, axis=-1)
        sim = sim * scale
        sim = jnp.where(m > 0, sim, NEG_MAX)

        sim_max = jnp.max(sim, axis=-1, keepdims=True)
        p = jnp.exp(sim - sim_max)
        attn = p / jnp.sum(p, axis=-1, keepdims=True)          # softmax over j

        # dominant contraction on the MXU: attn @ v  (no v+e temp)
        out_h = jnp.dot(attn, v, preferred_element_type=jnp.float32)
        out_h = out_h + jnp.sum(attn[:, :, None] * eh, axis=1)
        outs.append(out_h)

    # single lane-dense (N, heads*dh) store
    o_ref[0] = jnp.concatenate(outs, axis=-1).astype(o_ref.dtype)


# ----------------------------- Pallas wrappers ------------------------------

def _row_tile(M, block_rows):
    return M if M <= block_rows else block_rows


def dense(x2d, w, b, *, block_rows=256):
    M, K = x2d.shape
    N = w.shape[1]
    tm = _row_tile(M, block_rows)
    return pl.pallas_call(
        _dense_kernel,
        out_shape=jax.ShapeDtypeStruct((M, N), jnp.float32),
        grid=(pl.cdiv(M, tm),),
        in_specs=[pl.BlockSpec((tm, K), lambda i: (i, 0)),
                  pl.BlockSpec((K, N), lambda i: (0, 0)),
                  pl.BlockSpec((1, N), lambda i: (0, 0))],
        out_specs=pl.BlockSpec((tm, N), lambda i: (i, 0)),
        compiler_params=pltpu.CompilerParams(
            dimension_semantics=("parallel",)),
    )(x2d, w, b.reshape(1, N))


def ln_dense(x2d, g, bt, w, b, *, block_rows=256):
    M, K = x2d.shape
    N = w.shape[1]
    tm = _row_tile(M, block_rows)
    return pl.pallas_call(
        _ln_dense_kernel,
        out_shape=jax.ShapeDtypeStruct((M, N), jnp.float32),
        grid=(pl.cdiv(M, tm),),
        in_specs=[pl.BlockSpec((tm, K), lambda i: (i, 0)),
                  pl.BlockSpec((1, K), lambda i: (0, 0)),
                  pl.BlockSpec((1, K), lambda i: (0, 0)),
                  pl.BlockSpec((K, N), lambda i: (0, 0)),
                  pl.BlockSpec((1, N), lambda i: (0, 0))],
        out_specs=pl.BlockSpec((tm, N), lambda i: (i, 0)),
        compiler_params=pltpu.CompilerParams(
            dimension_semantics=("parallel",)),
    )(x2d, g.reshape(1, K), bt.reshape(1, K), w, b.reshape(1, N))


def ln_feedforward(x2d, g, bt, w1, b1, w2, b2, *, block_rows=256):
    M, D = x2d.shape
    H = w1.shape[1]
    tm = _row_tile(M, block_rows)
    return pl.pallas_call(
        _ln_ff_kernel,
        out_shape=jax.ShapeDtypeStruct((M, D), jnp.float32),
        grid=(pl.cdiv(M, tm),),
        in_specs=[pl.BlockSpec((tm, D), lambda i: (i, 0)),
                  pl.BlockSpec((1, D), lambda i: (0, 0)),
                  pl.BlockSpec((1, D), lambda i: (0, 0)),
                  pl.BlockSpec((D, H), lambda i: (0, 0)),
                  pl.BlockSpec((1, H), lambda i: (0, 0)),
                  pl.BlockSpec((H, D), lambda i: (0, 0)),
                  pl.BlockSpec((1, D), lambda i: (0, 0))],
        out_specs=pl.BlockSpec((tm, D), lambda i: (i, 0)),
        compiler_params=pltpu.CompilerParams(
            dimension_semantics=("parallel",)),
    )(x2d, g.reshape(1, D), bt.reshape(1, D),
      w1, b1.reshape(1, H), w2, b2.reshape(1, D))


def gated_residual(x2d, r2d, wg, *, block_rows=256):
    M, D = x2d.shape
    w1, w2, w3 = wg[:D], wg[D:2 * D], wg[2 * D:]
    wa = w1 + w3        # multiplies x
    wb = w2 - w3        # multiplies res
    tm = _row_tile(M, block_rows)
    return pl.pallas_call(
        _gated_residual_kernel,
        out_shape=jax.ShapeDtypeStruct((M, D), jnp.float32),
        grid=(pl.cdiv(M, tm),),
        in_specs=[pl.BlockSpec((tm, D), lambda i: (i, 0)),
                  pl.BlockSpec((tm, D), lambda i: (i, 0)),
                  pl.BlockSpec((D, 1), lambda i: (0, 0)),
                  pl.BlockSpec((D, 1), lambda i: (0, 0))],
        out_specs=pl.BlockSpec((tm, D), lambda i: (i, 0)),
        compiler_params=pltpu.CompilerParams(
            dimension_semantics=("parallel",)),
    )(x2d, r2d, wa, wb)


def graph_attn_core(qkv, e, mask2d, heads, dim_head, scale):
    B, N, _ = qkv.shape
    inner = heads * dim_head
    kernel = functools.partial(_graph_attn_kernel, heads=heads,
                               dim_head=dim_head, scale=scale)
    return pl.pallas_call(
        kernel,
        out_shape=jax.ShapeDtypeStruct((B, N, inner), jnp.float32),
        grid=(B,),
        in_specs=[pl.BlockSpec((1, N, 3 * inner), lambda b: (b, 0, 0)),
                  pl.BlockSpec((1, N, N, inner), lambda b: (b, 0, 0, 0)),
                  pl.BlockSpec((1, N, N), lambda b: (b, 0, 0))],
        out_specs=pl.BlockSpec((1, N, inner), lambda b: (b, 0, 0)),
        compiler_params=pltpu.CompilerParams(
            dimension_semantics=("parallel",)),
    )(qkv, e, mask2d)


# -------------------------- GraphTransformer model --------------------------

def attention_block(nodes, edges, mask2d, p, heads, dim_head):
    B, N, D = nodes.shape
    inner = heads * dim_head
    De = edges.shape[-1]
    scale = dim_head ** (-0.5)

    # fused q + kv projection weights (layout: [q | k | v] on the output axis)
    wqkv = jnp.concatenate([p["wq"], p["wkv"]], axis=1)        # (D, 3*inner)
    bqkv = jnp.concatenate([p["bq"], p["bkv"]], axis=0)        # (3*inner,)

    # PreNorm LayerNorm fused with the qkv projection (one pallas_call)
    qkv = ln_dense(nodes.reshape(B * N, D), p["ln1_g"], p["ln1_b"],
                   wqkv, bqkv).reshape(B, N, 3 * inner)

    # edge projection, row-tiled over B*N*N rows; kept in (B,N,N,inner) layout
    # (no per-head transpose / extra HBM pass of the dominant tensor)
    e = dense(edges.reshape(B * N * N, De), p["we"], p["be"],
              block_rows=512).reshape(B, N, N, inner)

    out = graph_attn_core(qkv, e, mask2d, heads, dim_head, scale)  # (B,N,inner)
    out = dense(out.reshape(B * N, inner), p["wo"], p["bo"]).reshape(B, N, D)
    return out


def graph_transformer_forward(params, nodes, edges, mask, heads, dim_head,
                              with_feedforwards):
    # norm_edges=False -> Identity on edges
    B, N, D = nodes.shape
    # (B,N,N) pair mask, NOT repeated per head (heads sliced in-kernel)
    mask2d = (mask[:, :, None] & mask[:, None, :]).astype(jnp.float32)

    for lp in params["layers"]:
        attn_out = attention_block(nodes, edges, mask2d, lp, heads, dim_head)
        nodes = gated_residual(attn_out.reshape(B * N, D),
                               nodes.reshape(B * N, D),
                               lp["gr1_w"]).reshape(B, N, D)
        if with_feedforwards:
            ff_out = ln_feedforward(nodes.reshape(B * N, D),
                                    lp["ln2_g"], lp["ln2_b"],
                                    lp["w1"], lp["b1"], lp["w2"], lp["b2"])
            nodes = gated_residual(ff_out, nodes.reshape(B * N, D),
                                   lp["gr2_w"]).reshape(B, N, D)
    return nodes, edges


# --------------------------- parameter construction -------------------------

def _linear(key, fan_in, fan_out):
    k1, k2 = jax.random.split(key)
    w = jax.random.normal(k1, (fan_in, fan_out), jnp.float32) / math.sqrt(fan_in)
    b = jax.random.normal(k2, (fan_out,), jnp.float32) * 0.02
    return w, b


def init_params(key, dim, depth, dim_head, heads, edge_dim, ff_mult,
                with_feedforwards):
    inner = dim_head * heads
    layers = []
    for _ in range(depth):
        keys = jax.random.split(key, 10)
        key = keys[0]
        lp = {}
        lp["ln1_g"] = jnp.ones((dim,), jnp.float32)
        lp["ln1_b"] = jnp.zeros((dim,), jnp.float32)
        lp["wq"], lp["bq"] = _linear(keys[1], dim, inner)
        lp["wkv"], lp["bkv"] = _linear(keys[2], dim, 2 * inner)
        lp["we"], lp["be"] = _linear(keys[3], edge_dim, inner)
        lp["wo"], lp["bo"] = _linear(keys[4], inner, dim)
        lp["gr1_w"] = jax.random.normal(keys[5], (3 * dim, 1), jnp.float32) \
            / math.sqrt(3 * dim)
        if with_feedforwards:
            lp["ln2_g"] = jnp.ones((dim,), jnp.float32)
            lp["ln2_b"] = jnp.zeros((dim,), jnp.float32)
            lp["w1"], lp["b1"] = _linear(keys[6], dim, dim * ff_mult)
            lp["w2"], lp["b2"] = _linear(keys[7], dim * ff_mult, dim)
            lp["gr2_w"] = jax.random.normal(keys[8], (3 * dim, 1), jnp.float32) \
                / math.sqrt(3 * dim)
        layers.append(lp)
    return {"layers": layers}


# ------------------------------ pure-JAX reference ---------------------------

def reference_forward(params, nodes, edges, mask, heads, dim_head,
                      with_feedforwards):
    def ln(x, g, b):
        m = x.mean(-1, keepdims=True)
        v = ((x - m) ** 2).mean(-1, keepdims=True)
        return (x - m) / jnp.sqrt(v + LN_EPS) * g + b

    def gated(x, r, w):
        gi = jnp.concatenate([x, r, x - r], axis=-1)
        gate = jax.nn.sigmoid(gi @ w)
        return x * gate + r * (1 - gate)

    B, N, D = nodes.shape
    inner = heads * dim_head
    for lp in params["layers"]:
        x = ln(nodes, lp["ln1_g"], lp["ln1_b"])
        q = x @ lp["wq"] + lp["bq"]
        kv = x @ lp["wkv"] + lp["bkv"]
        k, v = kv[..., :inner], kv[..., inner:]
        e = edges @ lp["we"] + lp["be"]
        q = q.reshape(B, N, heads, dim_head).transpose(0, 2, 1, 3)
        k = k.reshape(B, N, heads, dim_head).transpose(0, 2, 1, 3)
        v = v.reshape(B, N, heads, dim_head).transpose(0, 2, 1, 3)
        eh = e.reshape(B, N, N, heads, dim_head).transpose(0, 3, 1, 2, 4)
        kk = k[:, :, None, :, :] + eh
        vv = v[:, :, None, :, :] + eh
        sim = jnp.einsum("bhid,bhijd->bhij", q, kk) * (dim_head ** -0.5)
        m2 = (mask[:, :, None] & mask[:, None, :])[:, None, :, :]
        sim = jnp.where(m2, sim, NEG_MAX)
        attn = jax.nn.softmax(sim, axis=-1)
        out = jnp.einsum("bhij,bhijd->bhid", attn, vv)
        out = out.transpose(0, 2, 1, 3).reshape(B, N, inner)
        out = out @ lp["wo"] + lp["bo"]
        nodes = gated(out, nodes, lp["gr1_w"])
        if with_feedforwards:
            x = ln(nodes, lp["ln2_g"], lp["ln2_b"])
            h = x @ lp["w1"] + lp["b1"]
            h = 0.5 * h * (1.0 + lax.erf(h / jnp.sqrt(2.0)))
            ffo = h @ lp["w2"] + lp["b2"]
            nodes = gated(ffo, nodes, lp["gr2_w"])
    return nodes, edges


# ----------------------------------- main ------------------------------------

if __name__ == "__main__":
    B, N, D = 2, 8, 32
    heads, dim_head = 4, 16
    depth = 2
    edge_dim = D          # default(edge_dim, dim)
    ff_mult = 4
    with_feedforwards = True

    key = jax.random.PRNGKey(0)
    k_nodes, k_edges, k_params = jax.random.split(key, 3)

    nodes = jax.random.normal(k_nodes, (B, N, D), jnp.float32)
    edges = jax.random.normal(k_edges, (B, N, N, edge_dim), jnp.float32)
    # batch 0: all valid, batch 1: first 6 positions valid
    mask = jnp.arange(N)[None, :] < jnp.array([[N], [6]])

    params = init_params(k_params, D, depth, dim_head, heads, edge_dim,
                         ff_mult, with_feedforwards)

    fwd = jax.jit(graph_transformer_forward, static_argnums=(4, 5, 6))
    out_nodes, out_edges = fwd(params, nodes, edges, mask,
                               heads, dim_head, with_feedforwards)
    out_nodes = jax.block_until_ready(out_nodes)
    out_edges = jax.block_until_ready(out_edges)

    ref_nodes, ref_edges = reference_forward(
        params, nodes, edges, mask, heads, dim_head, with_feedforwards)

    assert out_nodes.shape == (B, N, D)
    assert out_edges.shape == (B, N, N, edge_dim)
    assert jnp.allclose(out_nodes, ref_nodes, atol=2e-3, rtol=2e-3)
    assert jnp.allclose(out_edges, ref_edges)

    print("KERNEL_OK")
</pallas_src>

<mosaic_0001>
module attributes {stable_mosaic.version = 11 : i64} {
  func.func @_dense_kernel(%arg0: i32, %arg1: memref<128x32xf32, #tpu.memory_space<vmem>>, %arg2: memref<32x64xf32, #tpu.memory_space<vmem>>, %arg3: memref<1x64xf32, #tpu.memory_space<vmem>>, %arg4: memref<128x64xf32, #tpu.memory_space<vmem>>) attributes {dimension_semantics = [#tpu.dimension_semantics<parallel>], iteration_bounds = array<i64: 1>, scalar_prefetch = 0 : i64, scratch_operands = 0 : i64, tpu.core_type = #tpu.core_type<tc>, window_params = [{transform_indices = @transform_0, window_bounds = array<i64: 128, 32>}, {pipeline_mode = #tpu.pipeline_mode<synchronous>, transform_indices = @transform_1, window_bounds = array<i64: 32, 64>}, {pipeline_mode = #tpu.pipeline_mode<synchronous>, transform_indices = @transform_2, window_bounds = array<i64: 1, 64>}, {transform_indices = @transform_3, window_bounds = array<i64: 128, 64>}]} {
    %c0 = arith.constant 0 : index
    %c0_0 = arith.constant 0 : index
    %0 = vector.load %arg1[%c0, %c0_0] : memref<128x32xf32, #tpu.memory_space<vmem>>, vector<128x32xf32>
    %c0_1 = arith.constant 0 : index
    %c0_2 = arith.constant 0 : index
    %1 = vector.load %arg2[%c0_1, %c0_2] : memref<32x64xf32, #tpu.memory_space<vmem>>, vector<32x64xf32>
    %cst = arith.constant dense<0.000000e+00> : vector<128x64xf32>
    %2 = tpu.matmul %0, %1, %cst {dimension_numbers = #tpu.dot_dimension_numbers<[1], [0], [0], [1], [0, 0, 1, 1], [], []>} : vector<128x32xf32>, vector<32x64xf32>, vector<128x64xf32> -> vector<128x64xf32>
    %c0_3 = arith.constant 0 : index
    %c0_4 = arith.constant 0 : index
    %3 = vector.load %arg3[%c0_3, %c0_4] : memref<1x64xf32, #tpu.memory_space<vmem>>, vector<1x64xf32>
    %4 = vector.broadcast %3 : vector<1x64xf32> to vector<128x64xf32>
    %5 = arith.addf %2, %4 : vector<128x64xf32>
    %c0_5 = arith.constant 0 : index
    %c0_6 = arith.constant 0 : index
    %6 = vector.load %arg4[%c0_5, %c0_6] : memref<128x64xf32, #tpu.memory_space<vmem>>, vector<128x64xf32>
    tpu.vector_store %arg4[%c0_5, %c0_6], %5 {strides = array<i32>} : memref<128x64xf32, #tpu.memory_space<vmem>>, vector<128x64xf32>,
    return
  }
  func.func @transform_0(%arg0: i32) -> (i32, i32) {
    %c0_i32 = arith.constant 0 : i32
    %c0_i32_0 = arith.constant 0 : i32
    return %arg0, %c0_i32 : i32, i32
  }
  func.func @transform_1(%arg0: i32) -> (i32, i32) {
    %c0_i32 = arith.constant 0 : i32
    %c0_i32_0 = arith.constant 0 : i32
    %c0_i32_1 = arith.constant 0 : i32
    return %c0_i32, %c0_i32_0 : i32, i32
  }
  func.func @transform_2(%arg0: i32) -> (i32, i32) {
    %c0_i32 = arith.constant 0 : i32
    %c0_i32_0 = arith.constant 0 : i32
    %c0_i32_1 = arith.constant 0 : i32
    return %c0_i32, %c0_i32_0 : i32, i32
  }
  func.func @transform_3(%arg0: i32) -> (i32, i32) {
    %c0_i32 = arith.constant 0 : i32
    %c0_i32_0 = arith.constant 0 : i32
    return %arg0, %c0_i32 : i32, i32
  }
}

module attributes {stable_mosaic.version = 11 : i64} {
  func.func @_ln_dense_kernel(%arg0: i32, %arg1: memref<16x32xf32, #tpu.memory_space<vmem>>, %arg2: memref<1x32xf32, #tpu.memory_space<vmem>>, %arg3: memref<1x32xf32, #tpu.memory_space<vmem>>, %arg4: memref<32x192xf32, #tpu.memory_space<vmem>>, %arg5: memref<1x192xf32, #tpu.memory_space<vmem>>, %arg6: memref<16x192xf32, #tpu.memory_space<vmem>>) attributes {dimension_semantics = [#tpu.dimension_semantics<parallel>], iteration_bounds = array<i64: 1>, scalar_prefetch = 0 : i64, scratch_operands = 0 : i64, tpu.core_type = #tpu.core_type<tc>, window_params = [{transform_indices = @transform_0, window_bounds = array<i64: 16, 32>}, {pipeline_mode = #tpu.pipeline_mode<synchronous>, transform_indices = @transform_1, window_bounds = array<i64: 1, 32>}, {pipeline_mode = #tpu.pipeline_mode<synchronous>, transform_indices = @transform_2, window_bounds = array<i64: 1, 32>}, {pipeline_mode = #tpu.pipeline_mode<synchronous>, transform_indices = @transform_3, window_bounds = array<i64: 32, 192>}, {pipeline_mode = #tpu.pipeline_mode<synchronous>, transform_indices = @transform_4, window_bounds = array<i64: 1, 192>}, {transform_indices = @transform_5, window_bounds = array<i64: 16, 192>}]} {
    %c0 = arith.constant 0 : index
    %c0_0 = arith.constant 0 : index
    %0 = vector.load %arg1[%c0, %c0_0] : memref<16x32xf32, #tpu.memory_space<vmem>>, vector<16x32xf32>
    %c0_1 = arith.constant 0 : index
    %c0_2 = arith.constant 0 : index
    %1 = vector.load %arg2[%c0_1, %c0_2] : memref<1x32xf32, #tpu.memory_space<vmem>>, vector<1x32xf32>
    %c0_3 = arith.constant 0 : index
    %c0_4 = arith.constant 0 : index
    %2 = vector.load %arg3[%c0_3, %c0_4] : memref<1x32xf32, #tpu.memory_space<vmem>>, vector<1x32xf32>
    %cst = arith.constant dense<0.000000e+00> : vector<16xf32>
    %3 = vector.multi_reduction <add>, %0, %cst [1] : vector<16x32xf32> to vector<16xf32>
    %4 = vector.shape_cast %3 : vector<16xf32> to vector<16x1xf32>
    %cst_5 = arith.constant 3.200000e+01 : f32
    %5 = vector.broadcast %cst_5 : f32 to vector<16x1xf32>
    %6 = arith.divf %4, %5 : vector<16x1xf32>
    %7 = vector.broadcast %6 : vector<16x1xf32> to vector<16x32xf32>
    %8 = arith.subf %0, %7 : vector<16x32xf32>
    %9 = arith.mulf %8, %8 : vector<16x32xf32>
    %cst_6 = arith.constant dense<0.000000e+00> : vector<16xf32>
    %10 = vector.multi_reduction <add>, %9, %cst_6 [1] : vector<16x32xf32> to vector<16xf32>
    %11 = vector.shape_cast %10 : vector<16xf32> to vector<16x1xf32>
    %cst_7 = arith.constant 3.200000e+01 : f32
    %12 = vector.broadcast %cst_7 : f32 to vector<16x1xf32>
    %13 = arith.divf %11, %12 : vector<16x1xf32>
    %14 = vector.broadcast %6 : vector<16x1xf32> to vector<16x32xf32>
    %15 = arith.subf %0, %14 : vector<16x32xf32>
    %cst_8 = arith.constant 9.99999974E-6 : f32
    %16 = vector.broadcast %cst_8 : f32 to vector<16x1xf32>
    %17 = arith.addf %13, %16 : vector<16x1xf32>
    %18 = math.rsqrt %17 : vector<16x1xf32>
    %19 = vector.broadcast %18 : vector<16x1xf32> to vector<16x32xf32>
    %20 = arith.mulf %15, %19 : vector<16x32xf32>
    %21 = vector.broadcast %1 : vector<1x32xf32> to vector<16x32xf32>
    %22 = arith.mulf %20, %21 : vector<16x32xf32>
    %23 = vector.broadcast %2 : vector<1x32xf32> to vector<16x32xf32>
    %24 = arith.addf %22, %23 : vector<16x32xf32>
    %c0_9 = arith.constant 0 : index
    %c0_10 = arith.constant 0 : index
    %25 = vector.load %arg4[%c0_9, %c0_10] : memref<32x192xf32, #tpu.memory_space<vmem>>, vector<32x192xf32>
    %cst_11 = arith.constant dense<0.000000e+00> : vector<16x192xf32>
    %26 = tpu.matmul %24, %25, %cst_11 {dimension_numbers = #tpu.dot_dimension_numbers<[1], [0], [0], [1], [0, 0, 1, 1], [], []>} : vector<16x32xf32>, vector<32x192xf32>, vector<16x192xf32> -> vector<16x192xf32>
    %c0_12 = arith.constant 0 : index
    %c0_13 = arith.constant 0 : index
    %27 = vector.load %arg5[%c0_12, %c0_13] : memref<1x192xf32, #tpu.memory_space<vmem>>, vector<1x192xf32>
    %28 = vector.broadcast %27 : vector<1x192xf32> to vector<16x192xf32>
    %29 = arith.addf %26, %28 : vector<16x192xf32>
    %c0_14 = arith.constant 0 : index
    %c0_15 = arith.constant 0 : index
    %30 = vector.load %arg6[%c0_14, %c0_15] : memref<16x192xf32, #tpu.memory_space<vmem>>, vector<16x192xf32>
    tpu.vector_store %arg6[%c0_14, %c0_15], %29 {strides = array<i32>} : memref<16x192xf32, #tpu.memory_space<vmem>>, vector<16x192xf32>,
    return
  }
  func.func @transform_0(%arg0: i32) -> (i32, i32) {
    %c0_i32 = arith.constant 0 : i32
    %c0_i32_0 = arith.constant 0 : i32
    return %arg0, %c0_i32 : i32, i32
  }
  func.func @transform_1(%arg0: i32) -> (i32, i32) {
    %c0_i32 = arith.constant 0 : i32
    %c0_i32_0 = arith.constant 0 : i32
    %c0_i32_1 = arith.constant 0 : i32
    return %c0_i32, %c0_i32_0 : i32, i32
  }
  func.func @transform_2(%arg0: i32) -> (i32, i32) {
    %c0_i32 = arith.constant 0 : i32
    %c0_i32_0 = arith.constant 0 : i32
    %c0_i32_1 = arith.constant 0 : i32
    return %c0_i32, %c0_i32_0 : i32, i32
  }
  func.func @transform_3(%arg0: i32) -> (i32, i32) {
    %c0_i32 = arith.constant 0 : i32
    %c0_i32_0 = arith.constant 0 : i32
    %c0_i32_1 = arith.constant 0 : i32
    return %c0_i32, %c0_i32_0 : i32, i32
  }
  func.func @transform_4(%arg0: i32) -> (i32, i32) {
    %c0_i32 = arith.constant 0 : i32
    %c0_i32_0 = arith.constant 0 : i32
    %c0_i32_1 = arith.constant 0 : i32
    return %c0_i32, %c0_i32_0 : i32, i32
  }
  func.func @transform_5(%arg0: i32) -> (i32, i32) {
    %c0_i32 = arith.constant 0 : i32
    %c0_i32_0 = arith.constant 0 : i32
    return %arg0, %c0_i32 : i32, i32
  }
}

module attributes {stable_mosaic.version = 11 : i64} {
  func.func @_dense_kernel(%arg0: i32, %arg1: memref<16x64xf32, #tpu.memory_space<vmem>>, %arg2: memref<64x32xf32, #tpu.memory_space<vmem>>, %arg3: memref<1x32xf32, #tpu.memory_space<vmem>>, %arg4: memref<16x32xf32, #tpu.memory_space<vmem>>) attributes {dimension_semantics = [#tpu.dimension_semantics<parallel>], iteration_bounds = array<i64: 1>, scalar_prefetch = 0 : i64, scratch_operands = 0 : i64, tpu.core_type = #tpu.core_type<tc>, window_params = [{transform_indices = @transform_0, window_bounds = array<i64: 16, 64>}, {pipeline_mode = #tpu.pipeline_mode<synchronous>, transform_indices = @transform_1, window_bounds = array<i64: 64, 32>}, {pipeline_mode = #tpu.pipeline_mode<synchronous>, transform_indices = @transform_2, window_bounds = array<i64: 1, 32>}, {transform_indices = @transform_3, window_bounds = array<i64: 16, 32>}]} {
    %c0 = arith.constant 0 : index
    %c0_0 = arith.constant 0 : index
    %0 = vector.load %arg1[%c0, %c0_0] : memref<16x64xf32, #tpu.memory_space<vmem>>, vector<16x64xf32>
    %c0_1 = arith.constant 0 : index
    %c0_2 = arith.constant 0 : index
    %1 = vector.load %arg2[%c0_1, %c0_2] : memref<64x32xf32, #tpu.memory_space<vmem>>, vector<64x32xf32>
    %cst = arith.constant dense<0.000000e+00> : vector<16x32xf32>
    %2 = tpu.matmul %0, %1, %cst {dimension_numbers = #tpu.dot_dimension_numbers<[1], [0], [0], [1], [0, 0, 1, 1], [], []>} : vector<16x64xf32>, vector<64x32xf32>, vector<16x32xf32> -> vector<16x32xf32>
    %c0_3 = arith.constant 0 : index
    %c0_4 = arith.constant 0 : index
    %3 = vector.load %arg3[%c0_3, %c0_4] : memref<1x32xf32, #tpu.memory_space<vmem>>, vector<1x32xf32>
    %4 = vector.broadcast %3 : vector<1x32xf32> to vector<16x32xf32>
    %5 = arith.addf %2, %4 : vector<16x32xf32>
    %c0_5 = arith.constant 0 : index
    %c0_6 = arith.constant 0 : index
    %6 = vector.load %arg4[%c0_5, %c0_6] : memref<16x32xf32, #tpu.memory_space<vmem>>, vector<16x32xf32>
    tpu.vector_store %arg4[%c0_5, %c0_6], %5 {strides = array<i32>} : memref<16x32xf32, #tpu.memory_space<vmem>>, vector<16x32xf32>,
    return
  }
  func.func @transform_0(%arg0: i32) -> (i32, i32) {
    %c0_i32 = arith.constant 0 : i32
    %c0_i32_0 = arith.constant 0 : i32
    return %arg0, %c0_i32 : i32, i32
  }
  func.func @transform_1(%arg0: i32) -> (i32, i32) {
    %c0_i32 = arith.constant 0 : i32
    %c0_i32_0 = arith.constant 0 : i32
    %c0_i32_1 = arith.constant 0 : i32
    return %c0_i32, %c0_i32_0 : i32, i32
  }
  func.func @transform_2(%arg0: i32) -> (i32, i32) {
    %c0_i32 = arith.constant 0 : i32
    %c0_i32_0 = arith.constant 0 : i32
    %c0_i32_1 = arith.constant 0 : i32
    return %c0_i32, %c0_i32_0 : i32, i32
  }
  func.func @transform_3(%arg0: i32) -> (i32, i32) {
    %c0_i32 = arith.constant 0 : i32
    %c0_i32_0 = arith.constant 0 : i32
    return %arg0, %c0_i32 : i32, i32
  }
}

module attributes {stable_mosaic.version = 11 : i64} {
  func.func @_graph_attn_kernel(%arg0: i32, %arg1: memref<1x8x192xf32, #tpu.memory_space<vmem>>, %arg2: memref<1x8x8x64xf32, #tpu.memory_space<vmem>>, %arg3: memref<1x8x8xf32, #tpu.memory_space<vmem>>, %arg4: memref<1x8x64xf32, #tpu.memory_space<vmem>>) attributes {dimension_semantics = [#tpu.dimension_semantics<parallel>], iteration_bounds = array<i64: 2>, scalar_prefetch = 0 : i64, scratch_operands = 0 : i64, tpu.core_type = #tpu.core_type<tc>, window_params = [{transform_indices = @transform_0, window_bounds = array<i64: 1, 8, 192>}, {transform_indices = @transform_1, window_bounds = array<i64: 1, 8, 8, 64>}, {transform_indices = @transform_2, window_bounds = array<i64: 1, 8, 8>}, {transform_indices = @transform_3, window_bounds = array<i64: 1, 8, 64>}]} {
    %c0 = arith.constant 0 : index
    %c0_0 = arith.constant 0 : index
    %c0_1 = arith.constant 0 : index
    %0 = vector.load %arg1[%c0, %c0_0, %c0_1] : memref<1x8x192xf32, #tpu.memory_space<vmem>>, vector<1x8x192xf32>
    %1 = vector.shape_cast %0 : vector<1x8x192xf32> to vector<8x192xf32>
    %c0_2 = arith.constant 0 : index
    %c0_3 = arith.constant 0 : index
    %c0_4 = arith.constant 0 : index
    %c0_5 = arith.constant 0 : index
    %2 = vector.load %arg2[%c0_2, %c0_3, %c0_4, %c0_5] : memref<1x8x8x64xf32, #tpu.memory_space<vmem>>, vector<1x8x8x64xf32>
    %3 = vector.shape_cast %2 : vector<1x8x8x64xf32> to vector<8x8x64xf32>
    %c0_6 = arith.constant 0 : index
    %c0_7 = arith.constant 0 : index
    %c0_8 = arith.constant 0 : index
    %4 = vector.load %arg3[%c0_6, %c0_7, %c0_8] : memref<1x8x8xf32, #tpu.memory_space<vmem>>, vector<1x8x8xf32>
    %5 = vector.shape_cast %4 : vector<1x8x8xf32> to vector<8x8xf32>
    %6 = vector.extract_strided_slice %1 {offsets = [0, 0], sizes = [8, 16], strides = [1, 1]} : vector<8x192xf32> to vector<8x16xf32>
    %7 = vector.extract_strided_slice %1 {offsets = [0, 64], sizes = [8, 16], strides = [1, 1]} : vector<8x192xf32> to vector<8x16xf32>
    %8 = vector.extract_strided_slice %1 {offsets = [0, 128], sizes = [8, 16], strides = [1, 1]} : vector<8x192xf32> to vector<8x16xf32>
    %9 = vector.extract_strided_slice %3 {offsets = [0, 0, 0], sizes = [8, 8, 16], strides = [1, 1, 1]} : vector<8x8x64xf32> to vector<8x8x16xf32>
    "tpu.trace_start"() <{level = 10 : i32, message = "id,jd->ij"}> : () -> ()
    %cst = arith.constant dense<0.000000e+00> : vector<8x8xf32>
    %10 = tpu.matmul %6, %7, %cst {dimension_numbers = #tpu.dot_dimension_numbers<[1], [1], [0], [0], [0, 0, 1, 0], [], []>} : vector<8x16xf32>, vector<8x16xf32>, vector<8x8xf32> -> vector<8x8xf32>
    "tpu.trace_stop"() : () -> ()
    %11 = vector.shape_cast %6 : vector<8x16xf32> to vector<8x1x16xf32>
    %12 = vector.broadcast %11 : vector<8x1x16xf32> to vector<8x8x16xf32>
    %13 = arith.mulf %12, %9 : vector<8x8x16xf32>
    %cst_9 = arith.constant dense<0.000000e+00> : vector<8x8xf32>
    %14 = vector.multi_reduction <add>, %13, %cst_9 [2] : vector<8x8x16xf32> to vector<8x8xf32>
    %15 = arith.addf %10, %14 : vector<8x8xf32>
    %cst_10 = arith.constant 2.500000e-01 : f32
    %16 = vector.broadcast %cst_10 : f32 to vector<8x8xf32>
    %17 = arith.mulf %15, %16 : vector<8x8xf32>
    %cst_11 = arith.constant 0.000000e+00 : f32
    %18 = vector.broadcast %cst_11 : f32 to vector<8x8xf32>
    %19 = arith.cmpf ogt, %5, %18 : vector<8x8xf32>
    %cst_12 = arith.constant -3.40282347E+38 : f32
    %20 = vector.broadcast %cst_12 : f32 to vector<8x8xf32>
    %21 = arith.select %19, %17, %20 : vector<8x8xi1>, vector<8x8xf32>
    %cst_13 = arith.constant dense<0xFF800000> : vector<8xf32>
    %22 = vector.multi_reduction <maximumf>, %21, %cst_13 [1] : vector<8x8xf32> to vector<8xf32>
    %23 = vector.shape_cast %22 : vector<8xf32> to vector<8x1xf32>
    %24 = vector.broadcast %23 : vector<8x1xf32> to vector<8x8xf32>
    %25 = arith.subf %21, %24 : vector<8x8xf32>
    %26 = math.exp %25 : vector<8x8xf32>
    %cst_14 = arith.constant dense<0.000000e+00> : vector<8xf32>
    %27 = vector.multi_reduction <add>, %26, %cst_14 [1] : vector<8x8xf32> to vector<8xf32>
    %28 = vector.shape_cast %27 : vector<8xf32> to vector<8x1xf32>
    %29 = vector.broadcast %28 : vector<8x1xf32> to vector<8x8xf32>
    %30 = arith.divf %26, %29 : vector<8x8xf32>
    %cst_15 = arith.constant dense<0.000000e+00> : vector<8x16xf32>
    %31 = tpu.matmul %30, %8, %cst_15 {dimension_numbers = #tpu.dot_dimension_numbers<[1], [0], [0], [1], [0, 0, 1, 1], [], []>} : vector<8x8xf32>, vector<8x16xf32>, vector<8x16xf32> -> vector<8x16xf32>
    %32 = vector.shape_cast %30 : vector<8x8xf32> to vector<8x8x1xf32>
    %33 = vector.broadcast %32 : vector<8x8x1xf32> to vector<8x8x16xf32>
    %34 = arith.mulf %33, %9 : vector<8x8x16xf32>
    %cst_16 = arith.constant dense<0.000000e+00> : vector<8x16xf32>
    %35 = vector.multi_reduction <add>, %34, %cst_16 [1] : vector<8x8x16xf32> to vector<8x16xf32>
    %36 = arith.addf %31, %35 : vector<8x16xf32>
    %37 = vector.extract_strided_slice %1 {offsets = [0, 16], sizes = [8, 16], strides = [1, 1]} : vector<8x192xf32> to vector<8x16xf32>
    %38 = vector.extract_strided_slice %1 {offsets = [0, 80], sizes = [8, 16], strides = [1, 1]} : vector<8x192xf32> to vector<8x16xf32>
    %39 = vector.extract_strided_slice %1 {offsets = [0, 144], sizes = [8, 16], strides = [1, 1]} : vector<8x192xf32> to vector<8x16xf32>
    %40 = vector.extract_strided_slice %3 {offsets = [0, 0, 16], sizes = [8, 8, 16], strides = [1, 1, 1]} : vector<8x8x64xf32> to vector<8x8x16xf32>
    "tpu.trace_start"() <{level = 10 : i32, message = "id,jd->ij"}> : () -> ()
    %cst_17 = arith.constant dense<0.000000e+00> : vector<8x8xf32>
    %41 = tpu.matmul %37, %38, %cst_17 {dimension_numbers = #tpu.dot_dimension_numbers<[1], [1], [0], [0], [0, 0, 1, 0], [], []>} : vector<8x16xf32>, vector<8x16xf32>, vector<8x8xf32> -> vector<8x8xf32>
    "tpu.trace_stop"() : () -> ()
    %42 = vector.shape_cast %37 : vector<8x16xf32> to vector<8x1x16xf32>
    %43 = vector.broadcast %42 : vector<8x1x16xf32> to vector<8x8x16xf32>
    %44 = arith.mulf %43, %40 : vector<8x8x16xf32>
    %cst_18 = arith.constant dense<0.000000e+00> : vector<8x8xf32>
    %45 = vector.multi_reduction <add>, %44, %cst_18 [2] : vector<8x8x16xf32> to vector<8x8xf32>
    %46 = arith.addf %41, %45 : vector<8x8xf32>
    %cst_19 = arith.constant 2.500000e-01 : f32
    %47 = vector.broadcast %cst_19 : f32 to vector<8x8xf32>
    %48 = arith.mulf %46, %47 : vector<8x8xf32>
    %cst_20 = arith.constant 0.000000e+00 : f32
    %49 = vector.broadcast %cst_20 : f32 to vector<8x8xf32>
    %50 = arith.cmpf ogt, %5, %49 : vector<8x8xf32>
    %cst_21 = arith.constant -3.40282347E+38 : f32
    %51 = vector.broadcast %cst_21 : f32 to vector<8x8xf32>
    %52 = arith.select %50, %48, %51 : vector<8x8xi1>, vector<8x8xf32>
    %cst_22 = arith.constant dense<0xFF800000> : vector<8xf32>
    %53 = vector.multi_reduction <maximumf>, %52, %cst_22 [1] : vector<8x8xf32> to vector<8xf32>
    %54 = vector.shape_cast %53 : vector<8xf32> to vector<8x1xf32>
    %55 = vector.broadcast %54 : vector<8x1xf32> to vector<8x8xf32>
    %56 = arith.subf %52, %55 : vector<8x8xf32>
    %57 = math.exp %56 : vector<8x8xf32>
    %cst_23 = arith.constant dense<0.000000e+00> : vector<8xf32>
    %58 = vector.multi_reduction <add>, %57, %cst_23 [1] : vector<8x8xf32> to vector<8xf32>
    %59 = vector.shape_cast %58 : vector<8xf32> to vector<8x1xf32>
    %60 = vector.broadcast %59 : vector<8x1xf32> to vector<8x8xf32>
    %61 = arith.divf %57, %60 : vector<8x8xf32>
    %cst_24 = arith.constant dense<0.000000e+00> : vector<8x16xf32>
    %62 = tpu.matmul %61, %39, %cst_24 {dimension_numbers = #tpu.dot_dimension_numbers<[1], [0], [0], [1], [0, 0, 1, 1], [], []>} : vector<8x8xf32>, vector<8x16xf32>, vector<8x16xf32> -> vector<8x16xf32>
    %63 = vector.shape_cast %61 : vector<8x8xf32> to vector<8x8x1xf32>
    %64 = vector.broadcast %63 : vector<8x8x1xf32> to vector<8x8x16xf32>
    %65 = arith.mulf %64, %40 : vector<8x8x16xf32>
    %cst_25 = arith.constant dense<0.000000e+00> : vector<8x16xf32>
    %66 = vector.multi_reduction <add>, %65, %cst_25 [1] : vector<8x8x16xf32> to vector<8x16xf32>
    %67 = arith.addf %62, %66 : vector<8x16xf32>
    %68 = vector.extract_strided_slice %1 {offsets = [0, 32], sizes = [8, 16], strides = [1, 1]} : vector<8x192xf32> to vector<8x16xf32>
    %69 = vector.extract_strided_slice %1 {offsets = [0, 96], sizes = [8, 16], strides = [1, 1]} : vector<8x192xf32> to vector<8x16xf32>
    %70 = vector.extract_strided_slice %1 {offsets = [0, 160], sizes = [8, 16], strides = [1, 1]} : vector<8x192xf32> to vector<8x16xf32>
    %71 = vector.extract_strided_slice %3 {offsets = [0, 0, 32], sizes = [8, 8, 16], strides = [1, 1, 1]} : vector<8x8x64xf32> to vector<8x8x16xf32>
    "tpu.trace_start"() <{level = 10 : i32, message = "id,jd->ij"}> : () -> ()
    %cst_26 = arith.constant dense<0.000000e+00> : vector<8x8xf32>
    %72 = tpu.matmul %68, %69, %cst_26 {dimension_numbers = #tpu.dot_dimension_numbers<[1], [1], [0], [0], [0, 0, 1, 0], [], []>} : vector<8x16xf32>, vector<8x16xf32>, vector<8x8xf32> -> vector<8x8xf32>
    "tpu.trace_stop"() : () -> ()
    %73 = vector.shape_cast %68 : vector<8x16xf32> to vector<8x1x16xf32>
    %74 = vector.broadcast %73 : vector<8x1x16xf32> to vector<8x8x16xf32>
    %75 = arith.mulf %74, %71 : vector<8x8x16xf32>
    %cst_27 = arith.constant dense<0.000000e+00> : vector<8x8xf32>
    %76 = vector.multi_reduction <add>, %75, %cst_27 [2] : vector<8x8x16xf32> to vector<8x8xf32>
    %77 = arith.addf %72, %76 : vector<8x8xf32>
    %cst_28 = arith.constant 2.500000e-01 : f32
    %78 = vector.broadcast %cst_28 : f32 to vector<8x8xf32>
    %79 = arith.mulf %77, %78 : vector<8x8xf32>
    %cst_29 = arith.constant 0.000000e+00 : f32
    %80 = vector.broadcast %cst_29 : f32 to vector<8x8xf32>
    %81 = arith.cmpf ogt, %5, %80 : vector<8x8xf32>
    %cst_30 = arith.constant -3.40282347E+38 : f32
    %82 = vector.broadcast %cst_30 : f32 to vector<8x8xf32>
    %83 = arith.select %81, %79, %82 : vector<8x8xi1>, vector<8x8xf32>
    %cst_31 = arith.constant dense<0xFF800000> : vector<8xf32>
    %84 = vector.multi_reduction <maximumf>, %83, %cst_31 [1] : vector<8x8xf32> to vector<8xf32>
    %85 = vector.shape_cast %84 : vector<8xf32> to vector<8x1xf32>
    %86 = vector.broadcast %85 : vector<8x1xf32> to vector<8x8xf32>
    %87 = arith.subf %83, %86 : vector<8x8xf32>
    %88 = math.exp %87 : vector<8x8xf32>
    %cst_32 = arith.constant dense<0.000000e+00> : vector<8xf32>
    %89 = vector.multi_reduction <add>, %88, %cst_32 [1] : vector<8x8xf32> to vector<8xf32>
    %90 = vector.shape_cast %89 : vector<8xf32> to vector<8x1xf32>
    %91 = vector.broadcast %90 : vector<8x1xf32> to vector<8x8xf32>
    %92 = arith.divf %88, %91 : vector<8x8xf32>
    %cst_33 = arith.constant dense<0.000000e+00> : vector<8x16xf32>
    %93 = tpu.matmul %92, %70, %cst_33 {dimension_numbers = #tpu.dot_dimension_numbers<[1], [0], [0], [1], [0, 0, 1, 1], [], []>} : vector<8x8xf32>, vector<8x16xf32>, vector<8x16xf32> -> vector<8x16xf32>
    %94 = vector.shape_cast %92 : vector<8x8xf32> to vector<8x8x1xf32>
    %95 = vector.broadcast %94 : vector<8x8x1xf32> to vector<8x8x16xf32>
    %96 = arith.mulf %95, %71 : vector<8x8x16xf32>
    %cst_34 = arith.constant dense<0.000000e+00> : vector<8x16xf32>
    %97 = vector.multi_reduction <add>, %96, %cst_34 [1] : vector<8x8x16xf32> to vector<8x16xf32>
    %98 = arith.addf %93, %97 : vector<8x16xf32>
    %99 = vector.extract_strided_slice %1 {offsets = [0, 48], sizes = [8, 16], strides = [1, 1]} : vector<8x192xf32> to vector<8x16xf32>
    %100 = vector.extract_strided_slice %1 {offsets = [0, 112], sizes = [8, 16], strides = [1, 1]} : vector<8x192xf32> to vector<8x16xf32>
    %101 = vector.extract_strided_slice %1 {offsets = [0, 176], sizes = [8, 16], strides = [1, 1]} : vector<8x192xf32> to vector<8x16xf32>
    %102 = vector.extract_strided_slice %3 {offsets = [0, 0, 48], sizes = [8, 8, 16], strides = [1, 1, 1]} : vector<8x8x64xf32> to vector<8x8x16xf32>
    "tpu.trace_start"() <{level = 10 : i32, message = "id,jd->ij"}> : () -> ()
    %cst_35 = arith.constant dense<0.000000e+00> : vector<8x8xf32>
    %103 = tpu.matmul %99, %100, %cst_35 {dimension_numbers = #tpu.dot_dimension_numbers<[1], [1], [0], [0], [0, 0, 1, 0], [], []>} : vector<8x16xf32>, vector<8x16xf32>, vector<8x8xf32> -> vector<8x8xf32>
    "tpu.trace_stop"() : () -> ()
    %104 = vector.shape_cast %99 : vector<8x16xf32> to vector<8x1x16xf32>
    %105 = vector.broadcast %104 : vector<8x1x16xf32> to vector<8x8x16xf32>
    %106 = arith.mulf %105, %102 : vector<8x8x16xf32>
    %cst_36 = arith.constant dense<0.000000e+00> : vector<8x8xf32>
    %107 = vector.multi_reduction <add>, %106, %cst_36 [2] : vector<8x8x16xf32> to vector<8x8xf32>
    %108 = arith.addf %103, %107 : vector<8x8xf32>
    %cst_37 = arith.constant 2.500000e-01 : f32
    %109 = vector.broadcast %cst_37 : f32 to vector<8x8xf32>
    %110 = arith.mulf %108, %109 : vector<8x8xf32>
    %cst_38 = arith.constant 0.000000e+00 : f32
    %111 = vector.broadcast %cst_38 : f32 to vector<8x8xf32>
    %112 = arith.cmpf ogt, %5, %111 : vector<8x8xf32>
    %cst_39 = arith.constant -3.40282347E+38 : f32
    %113 = vector.broadcast %cst_39 : f32 to vector<8x8xf32>
    %114 = arith.select %112, %110, %113 : vector<8x8xi1>, vector<8x8xf32>
    %cst_40 = arith.constant dense<0xFF800000> : vector<8xf32>
    %115 = vector.multi_reduction <maximumf>, %114, %cst_40 [1] : vector<8x8xf32> to vector<8xf32>
    %116 = vector.shape_cast %115 : vector<8xf32> to vector<8x1xf32>
    %117 = vector.broadcast %116 : vector<8x1xf32> to vector<8x8xf32>
    %118 = arith.subf %114, %117 : vector<8x8xf32>
    %119 = math.exp %118 : vector<8x8xf32>
    %cst_41 = arith.constant dense<0.000000e+00> : vector<8xf32>
    %120 = vector.multi_reduction <add>, %119, %cst_41 [1] : vector<8x8xf32> to vector<8xf32>
    %121 = vector.shape_cast %120 : vector<8xf32> to vector<8x1xf32>
    %122 = vector.broadcast %121 : vector<8x1xf32> to vector<8x8xf32>
    %123 = arith.divf %119, %122 : vector<8x8xf32>
    %cst_42 = arith.constant dense<0.000000e+00> : vector<8x16xf32>
    %124 = tpu.matmul %123, %101, %cst_42 {dimension_numbers = #tpu.dot_dimension_numbers<[1], [0], [0], [1], [0, 0, 1, 1], [], []>} : vector<8x8xf32>, vector<8x16xf32>, vector<8x16xf32> -> vector<8x16xf32>
    %125 = vector.shape_cast %123 : vector<8x8xf32> to vector<8x8x1xf32>
    %126 = vector.broadcast %125 : vector<8x8x1xf32> to vector<8x8x16xf32>
    %127 = arith.mulf %126, %102 : vector<8x8x16xf32>
    %cst_43 = arith.constant dense<0.000000e+00> : vector<8x16xf32>
    %128 = vector.multi_reduction <add>, %127, %cst_43 [1] : vector<8x8x16xf32> to vector<8x16xf32>
    %129 = arith.addf %124, %128 : vector<8x16xf32>
    %130 = tpu.concatenate %36, %67, %98, %129 in 1 : vector<8x16xf32>, vector<8x16xf32>, vector<8x16xf32>, vector<8x16xf32> -> vector<8x64xf32>
    %c0_44 = arith.constant 0 : index
    %c0_45 = arith.constant 0 : index
    %c0_46 = arith.constant 0 : index
    %131 = vector.load %arg4[%c0_44, %c0_45, %c0_46] : memref<1x8x64xf32, #tpu.memory_space<vmem>>, vector<1x8x64xf32>
    %132 = vector.shape_cast %131 : vector<1x8x64xf32> to vector<8x64xf32>
    %133 = vector.shape_cast %130 : vector<8x64xf32> to vector<1x8x64xf32>
    tpu.vector_store %arg4[%c0_44, %c0_45, %c0_46], %133 {strides = array<i32>} : memref<1x8x64xf32, #tpu.memory_space<vmem>>, vector<1x8x64xf32>,
    return
  }
  func.func @transform_0(%arg0: i32) -> (i32, i32, i32) {
    %c0_i32 = arith.constant 0 : i32
    %c0_i32_0 = arith.constant 0 : i32
    %c0_i32_1 = arith.constant 0 : i32
    return %arg0, %c0_i32, %c0_i32_0 : i32, i32, i32
  }
  func.func @transform_1(%arg0: i32) -> (i32, i32, i32, i32) {
    %c0_i32 = arith.constant 0 : i32
    %c0_i32_0 = arith.constant 0 : i32
    %c0_i32_1 = arith.constant 0 : i32
    %c0_i32_2 = arith.constant 0 : i32
    return %arg0, %c0_i32, %c0_i32_0, %c0_i32_1 : i32, i32, i32, i32
  }
  func.func @transform_2(%arg0: i32) -> (i32, i32, i32) {
    %c0_i32 = arith.constant 0 : i32
    %c0_i32_0 = arith.constant 0 : i32
    %c0_i32_1 = arith.constant 0 : i32
    return %arg0, %c0_i32, %c0_i32_0 : i32, i32, i32
  }
  func.func @transform_3(%arg0: i32) -> (i32, i32, i32) {
    %c0_i32 = arith.constant 0 : i32
    %c0_i32_0 = arith.constant 0 : i32
    %c0_i32_1 = arith.constant 0 : i32
    return %arg0, %c0_i32, %c0_i32_0 : i32, i32, i32
  }
}

module attributes {stable_mosaic.version = 11 : i64} {
  func.func @_gated_residual_kernel(%arg0: i32, %arg1: memref<16x32xf32, #tpu.memory_space<vmem>>, %arg2: memref<16x32xf32, #tpu.memory_space<vmem>>, %arg3: memref<32x1xf32, #tpu.memory_space<vmem>>, %arg4: memref<32x1xf32, #tpu.memory_space<vmem>>, %arg5: memref<16x32xf32, #tpu.memory_space<vmem>>) attributes {dimension_semantics = [#tpu.dimension_semantics<parallel>], iteration_bounds = array<i64: 1>, scalar_prefetch = 0 : i64, scratch_operands = 0 : i64, tpu.core_type = #tpu.core_type<tc>, window_params = [{transform_indices = @transform_0, window_bounds = array<i64: 16, 32>}, {transform_indices = @transform_1, window_bounds = array<i64: 16, 32>}, {pipeline_mode = #tpu.pipeline_mode<synchronous>, transform_indices = @transform_2, window_bounds = array<i64: 32, 1>}, {pipeline_mode = #tpu.pipeline_mode<synchronous>, transform_indices = @transform_3, window_bounds = array<i64: 32, 1>}, {transform_indices = @transform_4, window_bounds = array<i64: 16, 32>}]} {
    %c0 = arith.constant 0 : index
    %c0_0 = arith.constant 0 : index
    %0 = vector.load %arg1[%c0, %c0_0] : memref<16x32xf32, #tpu.memory_space<vmem>>, vector<16x32xf32>
    %c0_1 = arith.constant 0 : index
    %c0_2 = arith.constant 0 : index
    %1 = vector.load %arg2[%c0_1, %c0_2] : memref<16x32xf32, #tpu.memory_space<vmem>>, vector<16x32xf32>
    %c0_3 = arith.constant 0 : index
    %c0_4 = arith.constant 0 : index
    %2 = vector.load %arg3[%c0_3, %c0_4] : memref<32x1xf32, #tpu.memory_space<vmem>>, vector<32x1xf32>
    %cst = arith.constant dense<0.000000e+00> : vector<16x1xf32>
    %3 = tpu.matmul %0, %2, %cst {dimension_numbers = #tpu.dot_dimension_numbers<[1], [0], [0], [1], [0, 0, 1, 1], [], []>} : vector<16x32xf32>, vector<32x1xf32>, vector<16x1xf32> -> vector<16x1xf32>
    %c0_5 = arith.constant 0 : index
    %c0_6 = arith.constant 0 : index
    %4 = vector.load %arg4[%c0_5, %c0_6] : memref<32x1xf32, #tpu.memory_space<vmem>>, vector<32x1xf32>
    %cst_7 = arith.constant dense<0.000000e+00> : vector<16x1xf32>
    %5 = tpu.matmul %1, %4, %cst_7 {dimension_numbers = #tpu.dot_dimension_numbers<[1], [0], [0], [1], [0, 0, 1, 1], [], []>} : vector<16x32xf32>, vector<32x1xf32>, vector<16x1xf32> -> vector<16x1xf32>
    %6 = arith.addf %3, %5 : vector<16x1xf32>
    %7 = arith.negf %6 : vector<16x1xf32>
    %8 = math.exp %7 : vector<16x1xf32>
    %cst_8 = arith.constant 1.000000e+00 : f32
    %9 = vector.broadcast %cst_8 : f32 to vector<16x1xf32>
    %10 = arith.addf %9, %8 : vector<16x1xf32>
    %11 = arith.divf %9, %10 : vector<16x1xf32>
    %12 = vector.broadcast %11 : vector<16x1xf32> to vector<16x32xf32>
    %13 = arith.mulf %0, %12 : vector<16x32xf32>
    %cst_9 = arith.constant 1.000000e+00 : f32
    %14 = vector.broadcast %cst_9 : f32 to vector<16x1xf32>
    %15 = arith.subf %14, %11 : vector<16x1xf32>
    %16 = vector.broadcast %15 : vector<16x1xf32> to vector<16x32xf32>
    %17 = arith.mulf %1, %16 : vector<16x32xf32>
    %18 = arith.addf %13, %17 : vector<16x32xf32>
    %c0_10 = arith.constant 0 : index
    %c0_11 = arith.constant 0 : index
    %19 = vector.load %arg5[%c0_10, %c0_11] : memref<16x32xf32, #tpu.memory_space<vmem>>, vector<16x32xf32>
    tpu.vector_store %arg5[%c0_10, %c0_11], %18 {strides = array<i32>} : memref<16x32xf32, #tpu.memory_space<vmem>>, vector<16x32xf32>,
    return
  }
  func.func @transform_0(%arg0: i32) -> (i32, i32) {
    %c0_i32 = arith.constant 0 : i32
    %c0_i32_0 = arith.constant 0 : i32
    return %arg0, %c0_i32 : i32, i32
  }
  func.func @transform_1(%arg0: i32) -> (i32, i32) {
    %c0_i32 = arith.constant 0 : i32
    %c0_i32_0 = arith.constant 0 : i32
    return %arg0, %c0_i32 : i32, i32
  }
  func.func @transform_2(%arg0: i32) -> (i32, i32) {
    %c0_i32 = arith.constant 0 : i32
    %c0_i32_0 = arith.constant 0 : i32
    %c0_i32_1 = arith.constant 0 : i32
    return %c0_i32, %c0_i32_0 : i32, i32
  }
  func.func @transform_3(%arg0: i32) -> (i32, i32) {
    %c0_i32 = arith.constant 0 : i32
    %c0_i32_0 = arith.constant 0 : i32
    %c0_i32_1 = arith.constant 0 : i32
    return %c0_i32, %c0_i32_0 : i32, i32
  }
  func.func @transform_4(%arg0: i32) -> (i32, i32) {
    %c0_i32 = arith.constant 0 : i32
    %c0_i32_0 = arith.constant 0 : i32
    return %arg0, %c0_i32 : i32, i32
  }
}

module attributes {stable_mosaic.version = 11 : i64} {
  func.func @_ln_dense_kernel(%arg0: i32, %arg1: memref<16x32xf32, #tpu.memory_space<vmem>>, %arg2: memref<1x32xf32, #tpu.memory_space<vmem>>, %arg3: memref<1x32xf32, #tpu.memory_space<vmem>>, %arg4: memref<32x192xf32, #tpu.memory_space<vmem>>, %arg5: memref<1x192xf32, #tpu.memory_space<vmem>>, %arg6: memref<16x192xf32, #tpu.memory_space<vmem>>) attributes {dimension_semantics = [#tpu.dimension_semantics<parallel>], iteration_bounds = array<i64: 1>, scalar_prefetch = 0 : i64, scratch_operands = 0 : i64, tpu.core_type = #tpu.core_type<tc>, window_params = [{transform_indices = @transform_0, window_bounds = array<i64: 16, 32>}, {pipeline_mode = #tpu.pipeline_mode<synchronous>, transform_indices = @transform_1, window_bounds = array<i64: 1, 32>}, {pipeline_mode = #tpu.pipeline_mode<synchronous>, transform_indices = @transform_2, window_bounds = array<i64: 1, 32>}, {pipeline_mode = #tpu.pipeline_mode<synchronous>, transform_indices = @transform_3, window_bounds = array<i64: 32, 192>}, {pipeline_mode = #tpu.pipeline_mode<synchronous>, transform_indices = @transform_4, window_bounds = array<i64: 1, 192>}, {transform_indices = @transform_5, window_bounds = array<i64: 16, 192>}]} {
    %c0 = arith.constant 0 : index
    %c0_0 = arith.constant 0 : index
    %0 = vector.load %arg1[%c0, %c0_0] : memref<16x32xf32, #tpu.memory_space<vmem>>, vector<16x32xf32>
    %c0_1 = arith.constant 0 : index
    %c0_2 = arith.constant 0 : index
    %1 = vector.load %arg2[%c0_1, %c0_2] : memref<1x32xf32, #tpu.memory_space<vmem>>, vector<1x32xf32>
    %c0_3 = arith.constant 0 : index
    %c0_4 = arith.constant 0 : index
    %2 = vector.load %arg3[%c0_3, %c0_4] : memref<1x32xf32, #tpu.memory_space<vmem>>, vector<1x32xf32>
    %cst = arith.constant dense<0.000000e+00> : vector<16xf32>
    %3 = vector.multi_reduction <add>, %0, %cst [1] : vector<16x32xf32> to vector<16xf32>
    %4 = vector.shape_cast %3 : vector<16xf32> to vector<16x1xf32>
    %cst_5 = arith.constant 3.200000e+01 : f32
    %5 = vector.broadcast %cst_5 : f32 to vector<16x1xf32>
    %6 = arith.divf %4, %5 : vector<16x1xf32>
    %7 = vector.broadcast %6 : vector<16x1xf32> to vector<16x32xf32>
    %8 = arith.subf %0, %7 : vector<16x32xf32>
    %9 = arith.mulf %8, %8 : vector<16x32xf32>
    %cst_6 = arith.constant dense<0.000000e+00> : vector<16xf32>
    %10 = vector.multi_reduction <add>, %9, %cst_6 [1] : vector<16x32xf32> to vector<16xf32>
    %11 = vector.shape_cast %10 : vector<16xf32> to vector<16x1xf32>
    %cst_7 = arith.constant 3.200000e+01 : f32
    %12 = vector.broadcast %cst_7 : f32 to vector<16x1xf32>
    %13 = arith.divf %11, %12 : vector<16x1xf32>
    %14 = vector.broadcast %6 : vector<16x1xf32> to vector<16x32xf32>
    %15 = arith.subf %0, %14 : vector<16x32xf32>
    %cst_8 = arith.constant 9.99999974E-6 : f32
    %16 = vector.broadcast %cst_8 : f32 to vector<16x1xf32>
    %17 = arith.addf %13, %16 : vector<16x1xf32>
    %18 = math.rsqrt %17 : vector<16x1xf32>
    %19 = vector.broadcast %18 : vector<16x1xf32> to vector<16x32xf32>
    %20 = arith.mulf %15, %19 : vector<16x32xf32>
    %21 = vector.broadcast %1 : vector<1x32xf32> to vector<16x32xf32>
    %22 = arith.mulf %20, %21 : vector<16x32xf32>
    %23 = vector.broadcast %2 : vector<1x32xf32> to vector<16x32xf32>
    %24 = arith.addf %22, %23 : vector<16x32xf32>
    %c0_9 = arith.constant 0 : index
    %c0_10 = arith.constant 0 : index
    %25 = vector.load %arg4[%c0_9, %c0_10] : memref<32x192xf32, #tpu.memory_space<vmem>>, vector<32x192xf32>
    %cst_11 = arith.constant dense<0.000000e+00> : vector<16x192xf32>
    %26 = tpu.matmul %24, %25, %cst_11 {dimension_numbers = #tpu.dot_dimension_numbers<[1], [0], [0], [1], [0, 0, 1, 1], [], []>} : vector<16x32xf32>, vector<32x192xf32>, vector<16x192xf32> -> vector<16x192xf32>
    %c0_12 = arith.constant 0 : index
    %c0_13 = arith.constant 0 : index
    %27 = vector.load %arg5[%c0_12, %c0_13] : memref<1x192xf32, #tpu.memory_space<vmem>>, vector<1x192xf32>
    %28 = vector.broadcast %27 : vector<1x192xf32> to vector<16x192xf32>
    %29 = arith.addf %26, %28 : vector<16x192xf32>
    %c0_14 = arith.constant 0 : index
    %c0_15 = arith.constant 0 : index
    %30 = vector.load %arg6[%c0_14, %c0_15] : memref<16x192xf32, #tpu.memory_space<vmem>>, vector<16x192xf32>
    tpu.vector_store %arg6[%c0_14, %c0_15], %29 {strides = array<i32>} : memref<16x192xf32, #tpu.memory_space<vmem>>, vector<16x192xf32>,
    return
  }
  func.func @transform_0(%arg0: i32) -> (i32, i32) {
    %c0_i32 = arith.constant 0 : i32
    %c0_i32_0 = arith.constant 0 : i32
    return %arg0, %c0_i32 : i32, i32
  }
  func.func @transform_1(%arg0: i32) -> (i32, i32) {
    %c0_i32 = arith.constant 0 : i32
    %c0_i32_0 = arith.constant 0 : i32
    %c0_i32_1 = arith.constant 0 : i32
    return %c0_i32, %c0_i32_0 : i32, i32
  }
  func.func @transform_2(%arg0: i32) -> (i32, i32) {
    %c0_i32 = arith.constant 0 : i32
    %c0_i32_0 = arith.constant 0 : i32
    %c0_i32_1 = arith.constant 0 : i32
    return %c0_i32, %c0_i32_0 : i32, i32
  }
  func.func @transform_3(%arg0: i32) -> (i32, i32) {
    %c0_i32 = arith.constant 0 : i32
    %c0_i32_0 = arith.constant 0 : i32
    %c0_i32_1 = arith.constant 0 : i32
    return %c0_i32, %c0_i32_0 : i32, i32
  }
  func.func @transform_4(%arg0: i32) -> (i32, i32) {
    %c0_i32 = arith.constant 0 : i32
    %c0_i32_0 = arith.constant 0 : i32
    %c0_i32_1 = arith.constant 0 : i32
    return %c0_i32, %c0_i32_0 : i32, i32
  }
  func.func @transform_5(%arg0: i32) -> (i32, i32) {
    %c0_i32 = arith.constant 0 : i32
    %c0_i32_0 = arith.constant 0 : i32
    return %arg0, %c0_i32 : i32, i32
  }
}

module attributes {stable_mosaic.version = 11 : i64} {
  func.func @_ln_ff_kernel(%arg0: i32, %arg1: memref<16x32xf32, #tpu.memory_space<vmem>>, %arg2: memref<1x32xf32, #tpu.memory_space<vmem>>, %arg3: memref<1x32xf32, #tpu.memory_space<vmem>>, %arg4: memref<32x128xf32, #tpu.memory_space<vmem>>, %arg5: memref<1x128xf32, #tpu.memory_space<vmem>>, %arg6: memref<128x32xf32, #tpu.memory_space<vmem>>, %arg7: memref<1x32xf32, #tpu.memory_space<vmem>>, %arg8: memref<16x32xf32, #tpu.memory_space<vmem>>) attributes {dimension_semantics = [#tpu.dimension_semantics<parallel>], iteration_bounds = array<i64: 1>, scalar_prefetch = 0 : i64, scratch_operands = 0 : i64, tpu.core_type = #tpu.core_type<tc>, window_params = [{transform_indices = @transform_0, window_bounds = array<i64: 16, 32>}, {pipeline_mode = #tpu.pipeline_mode<synchronous>, transform_indices = @transform_1, window_bounds = array<i64: 1, 32>}, {pipeline_mode = #tpu.pipeline_mode<synchronous>, transform_indices = @transform_2, window_bounds = array<i64: 1, 32>}, {pipeline_mode = #tpu.pipeline_mode<synchronous>, transform_indices = @transform_3, window_bounds = array<i64: 32, 128>}, {pipeline_mode = #tpu.pipeline_mode<synchronous>, transform_indices = @transform_4, window_bounds = array<i64: 1, 128>}, {pipeline_mode = #tpu.pipeline_mode<synchronous>, transform_indices = @transform_5, window_bounds = array<i64: 128, 32>}, {pipeline_mode = #tpu.pipeline_mode<synchronous>, transform_indices = @transform_6, window_bounds = array<i64: 1, 32>}, {transform_indices = @transform_7, window_bounds = array<i64: 16, 32>}]} {
    %c0 = arith.constant 0 : index
    %c0_0 = arith.constant 0 : index
    %0 = vector.load %arg1[%c0, %c0_0] : memref<16x32xf32, #tpu.memory_space<vmem>>, vector<16x32xf32>
    %c0_1 = arith.constant 0 : index
    %c0_2 = arith.constant 0 : index
    %1 = vector.load %arg2[%c0_1, %c0_2] : memref<1x32xf32, #tpu.memory_space<vmem>>, vector<1x32xf32>
    %c0_3 = arith.constant 0 : index
    %c0_4 = arith.constant 0 : index
    %2 = vector.load %arg3[%c0_3, %c0_4] : memref<1x32xf32, #tpu.memory_space<vmem>>, vector<1x32xf32>
    %cst = arith.constant dense<0.000000e+00> : vector<16xf32>
    %3 = vector.multi_reduction <add>, %0, %cst [1] : vector<16x32xf32> to vector<16xf32>
    %4 = vector.shape_cast %3 : vector<16xf32> to vector<16x1xf32>
    %cst_5 = arith.constant 3.200000e+01 : f32
    %5 = vector.broadcast %cst_5 : f32 to vector<16x1xf32>
    %6 = arith.divf %4, %5 : vector<16x1xf32>
    %7 = vector.broadcast %6 : vector<16x1xf32> to vector<16x32xf32>
    %8 = arith.subf %0, %7 : vector<16x32xf32>
    %9 = arith.mulf %8, %8 : vector<16x32xf32>
    %cst_6 = arith.constant dense<0.000000e+00> : vector<16xf32>
    %10 = vector.multi_reduction <add>, %9, %cst_6 [1] : vector<16x32xf32> to vector<16xf32>
    %11 = vector.shape_cast %10 : vector<16xf32> to vector<16x1xf32>
    %cst_7 = arith.constant 3.200000e+01 : f32
    %12 = vector.broadcast %cst_7 : f32 to vector<16x1xf32>
    %13 = arith.divf %11, %12 : vector<16x1xf32>
    %14 = vector.broadcast %6 : vector<16x1xf32> to vector<16x32xf32>
    %15 = arith.subf %0, %14 : vector<16x32xf32>
    %cst_8 = arith.constant 9.99999974E-6 : f32
    %16 = vector.broadcast %cst_8 : f32 to vector<16x1xf32>
    %17 = arith.addf %13, %16 : vector<16x1xf32>
    %18 = math.rsqrt %17 : vector<16x1xf32>
    %19 = vector.broadcast %18 : vector<16x1xf32> to vector<16x32xf32>
    %20 = arith.mulf %15, %19 : vector<16x32xf32>
    %21 = vector.broadcast %1 : vector<1x32xf32> to vector<16x32xf32>
    %22 = arith.mulf %20, %21 : vector<16x32xf32>
    %23 = vector.broadcast %2 : vector<1x32xf32> to vector<16x32xf32>
    %24 = arith.addf %22, %23 : vector<16x32xf32>
    %c0_9 = arith.constant 0 : index
    %c0_10 = arith.constant 0 : index
    %25 = vector.load %arg4[%c0_9, %c0_10] : memref<32x128xf32, #tpu.memory_space<vmem>>, vector<32x128xf32>
    %cst_11 = arith.constant dense<0.000000e+00> : vector<16x128xf32>
    %26 = tpu.matmul %24, %25, %cst_11 {dimension_numbers = #tpu.dot_dimension_numbers<[1], [0], [0], [1], [0, 0, 1, 1], [], []>} : vector<16x32xf32>, vector<32x128xf32>, vector<16x128xf32> -> vector<16x128xf32>
    %c0_12 = arith.constant 0 : index
    %c0_13 = arith.constant 0 : index
    %27 = vector.load %arg5[%c0_12, %c0_13] : memref<1x128xf32, #tpu.memory_space<vmem>>, vector<1x128xf32>
    %28 = vector.broadcast %27 : vector<1x128xf32> to vector<16x128xf32>
    %29 = arith.addf %26, %28 : vector<16x128xf32>
    %cst_14 = arith.constant 5.000000e-01 : f32
    %30 = vector.broadcast %cst_14 : f32 to vector<16x128xf32>
    %31 = arith.mulf %30, %29 : vector<16x128xf32>
    %cst_15 = arith.constant 0.707106769 : f32
    %32 = vector.broadcast %cst_15 : f32 to vector<16x128xf32>
    %33 = arith.mulf %29, %32 : vector<16x128xf32>
    %34 = math.erf %33 : vector<16x128xf32>
    %cst_16 = arith.constant 1.000000e+00 : f32
    %35 = vector.broadcast %cst_16 : f32 to vector<16x128xf32>
    %36 = arith.addf %35, %34 : vector<16x128xf32>
    %37 = arith.mulf %31, %36 : vector<16x128xf32>
    %c0_17 = arith.constant 0 : index
    %c0_18 = arith.constant 0 : index
    %38 = vector.load %arg6[%c0_17, %c0_18] : memref<128x32xf32, #tpu.memory_space<vmem>>, vector<128x32xf32>
    %cst_19 = arith.constant dense<0.000000e+00> : vector<16x32xf32>
    %39 = tpu.matmul %37, %38, %cst_19 {dimension_numbers = #tpu.dot_dimension_numbers<[1], [0], [0], [1], [0, 0, 1, 1], [], []>} : vector<16x128xf32>, vector<128x32xf32>, vector<16x32xf32> -> vector<16x32xf32>
    %c0_20 = arith.constant 0 : index
    %c0_21 = arith.constant 0 : index
    %40 = vector.load %arg7[%c0_20, %c0_21] : memref<1x32xf32, #tpu.memory_space<vmem>>, vector<1x32xf32>
    %41 = vector.broadcast %40 : vector<1x32xf32> to vector<16x32xf32>
    %42 = arith.addf %39, %41 : vector<16x32xf32>
    %c0_22 = arith.constant 0 : index
    %c0_23 = arith.constant 0 : index
    %43 = vector.load %arg8[%c0_22, %c0_23] : memref<16x32xf32, #tpu.memory_space<vmem>>, vector<16x32xf32>
    tpu.vector_store %arg8[%c0_22, %c0_23], %42 {strides = array<i32>} : memref<16x32xf32, #tpu.memory_space<vmem>>, vector<16x32xf32>,
    return
  }
  func.func @transform_0(%arg0: i32) -> (i32, i32) {
    %c0_i32 = arith.constant 0 : i32
    %c0_i32_0 = arith.constant 0 : i32
    return %arg0, %c0_i32 : i32, i32
  }
  func.func @transform_1(%arg0: i32) -> (i32, i32) {
    %c0_i32 = arith.constant 0 : i32
    %c0_i32_0 = arith.constant 0 : i32
    %c0_i32_1 = arith.constant 0 : i32
    return %c0_i32, %c0_i32_0 : i32, i32
  }
  func.func @transform_2(%arg0: i32) -> (i32, i32) {
    %c0_i32 = arith.constant 0 : i32
    %c0_i32_0 = arith.constant 0 : i32
    %c0_i32_1 = arith.constant 0 : i32
    return %c0_i32, %c0_i32_0 : i32, i32
  }
  func.func @transform_3(%arg0: i32) -> (i32, i32) {
    %c0_i32 = arith.constant 0 : i32
    %c0_i32_0 = arith.constant 0 : i32
    %c0_i32_1 = arith.constant 0 : i32
    return %c0_i32, %c0_i32_0 : i32, i32
  }
  func.func @transform_4(%arg0: i32) -> (i32, i32) {
    %c0_i32 = arith.constant 0 : i32
    %c0_i32_0 = arith.constant 0 : i32
    %c0_i32_1 = arith.constant 0 : i32
    return %c0_i32, %c0_i32_0 : i32, i32
  }
  func.func @transform_5(%arg0: i32) -> (i32, i32) {
    %c0_i32 = arith.constant 0 : i32
    %c0_i32_0 = arith.constant 0 : i32
    %c0_i32_1 = arith.constant 0 : i32
    return %c0_i32, %c0_i32_0 : i32, i32
  }
  func.func @transform_6(%arg0: i32) -> (i32, i32) {
    %c0_i32 = arith.constant 0 : i32
    %c0_i32_0 = arith.constant 0 : i32
    %c0_i32_1 = arith.constant 0 : i32
    return %c0_i32, %c0_i32_0 : i32, i32
  }
  func.func @transform_7(%arg0: i32) -> (i32, i32) {
    %c0_i32 = arith.constant 0 : i32
    %c0_i32_0 = arith.constant 0 : i32
    return %arg0, %c0_i32 : i32, i32
  }
}

module attributes {stable_mosaic.version = 11 : i64} {
  func.func @_dense_kernel(%arg0: i32, %arg1: memref<128x32xf32, #tpu.memory_space<vmem>>, %arg2: memref<32x64xf32, #tpu.memory_space<vmem>>, %arg3: memref<1x64xf32, #tpu.memory_space<vmem>>, %arg4: memref<128x64xf32, #tpu.memory_space<vmem>>) attributes {dimension_semantics = [#tpu.dimension_semantics<parallel>], iteration_bounds = array<i64: 1>, scalar_prefetch = 0 : i64, scratch_operands = 0 : i64, tpu.core_type = #tpu.core_type<tc>, window_params = [{transform_indices = @transform_0, window_bounds = array<i64: 128, 32>}, {pipeline_mode = #tpu.pipeline_mode<synchronous>, transform_indices = @transform_1, window_bounds = array<i64: 32, 64>}, {pipeline_mode = #tpu.pipeline_mode<synchronous>, transform_indices = @transform_2, window_bounds = array<i64: 1, 64>}, {transform_indices = @transform_3, window_bounds = array<i64: 128, 64>}]} {
    %c0 = arith.constant 0 : index
    %c0_0 = arith.constant 0 : index
    %0 = vector.load %arg1[%c0, %c0_0] : memref<128x32xf32, #tpu.memory_space<vmem>>, vector<128x32xf32>
    %c0_1 = arith.constant 0 : index
    %c0_2 = arith.constant 0 : index
    %1 = vector.load %arg2[%c0_1, %c0_2] : memref<32x64xf32, #tpu.memory_space<vmem>>, vector<32x64xf32>
    %cst = arith.constant dense<0.000000e+00> : vector<128x64xf32>
    %2 = tpu.matmul %0, %1, %cst {dimension_numbers = #tpu.dot_dimension_numbers<[1], [0], [0], [1], [0, 0, 1, 1], [], []>} : vector<128x32xf32>, vector<32x64xf32>, vector<128x64xf32> -> vector<128x64xf32>
    %c0_3 = arith.constant 0 : index
    %c0_4 = arith.constant 0 : index
    %3 = vector.load %arg3[%c0_3, %c0_4] : memref<1x64xf32, #tpu.memory_space<vmem>>, vector<1x64xf32>
    %4 = vector.broadcast %3 : vector<1x64xf32> to vector<128x64xf32>
    %5 = arith.addf %2, %4 : vector<128x64xf32>
    %c0_5 = arith.constant 0 : index
    %c0_6 = arith.constant 0 : index
    %6 = vector.load %arg4[%c0_5, %c0_6] : memref<128x64xf32, #tpu.memory_space<vmem>>, vector<128x64xf32>
    tpu.vector_store %arg4[%c0_5, %c0_6], %5 {strides = array<i32>} : memref<128x64xf32, #tpu.memory_space<vmem>>, vector<128x64xf32>,
    return
  }
  func.func @transform_0(%arg0: i32) -> (i32, i32) {
    %c0_i32 = arith.constant 0 : i32
    %c0_i32_0 = arith.constant 0 : i32
    return %arg0, %c0_i32 : i32, i32
  }
  func.func @transform_1(%arg0: i32) -> (i32, i32) {
    %c0_i32 = arith.constant 0 : i32
    %c0_i32_0 = arith.constant 0 : i32
    %c0_i32_1 = arith.constant 0 : i32
    return %c0_i32, %c0_i32_0 : i32, i32
  }
  func.func @transform_2(%arg0: i32) -> (i32, i32) {
    %c0_i32 = arith.constant 0 : i32
    %c0_i32_0 = arith.constant 0 : i32
    %c0_i32_1 = arith.constant 0 : i32
    return %c0_i32, %c0_i32_0 : i32, i32
  }
  func.func @transform_3(%arg0: i32) -> (i32, i32) {
    %c0_i32 = arith.constant 0 : i32
    %c0_i32_0 = arith.constant 0 : i32
    return %arg0, %c0_i32 : i32, i32
  }
}

module attributes {stable_mosaic.version = 11 : i64} {
  func.func @_gated_residual_kernel(%arg0: i32, %arg1: memref<16x32xf32, #tpu.memory_space<vmem>>, %arg2: memref<16x32xf32, #tpu.memory_space<vmem>>, %arg3: memref<32x1xf32, #tpu.memory_space<vmem>>, %arg4: memref<32x1xf32, #tpu.memory_space<vmem>>, %arg5: memref<16x32xf32, #tpu.memory_space<vmem>>) attributes {dimension_semantics = [#tpu.dimension_semantics<parallel>], iteration_bounds = array<i64: 1>, scalar_prefetch = 0 : i64, scratch_operands = 0 : i64, tpu.core_type = #tpu.core_type<tc>, window_params = [{transform_indices = @transform_0, window_bounds = array<i64: 16, 32>}, {transform_indices = @transform_1, window_bounds = array<i64: 16, 32>}, {pipeline_mode = #tpu.pipeline_mode<synchronous>, transform_indices = @transform_2, window_bounds = array<i64: 32, 1>}, {pipeline_mode = #tpu.pipeline_mode<synchronous>, transform_indices = @transform_3, window_bounds = array<i64: 32, 1>}, {transform_indices = @transform_4, window_bounds = array<i64: 16, 32>}]} {
    %c0 = arith.constant 0 : index
    %c0_0 = arith.constant 0 : index
    %0 = vector.load %arg1[%c0, %c0_0] : memref<16x32xf32, #tpu.memory_space<vmem>>, vector<16x32xf32>
    %c0_1 = arith.constant 0 : index
    %c0_2 = arith.constant 0 : index
    %1 = vector.load %arg2[%c0_1, %c0_2] : memref<16x32xf32, #tpu.memory_space<vmem>>, vector<16x32xf32>
    %c0_3 = arith.constant 0 : index
    %c0_4 = arith.constant 0 : index
    %2 = vector.load %arg3[%c0_3, %c0_4] : memref<32x1xf32, #tpu.memory_space<vmem>>, vector<32x1xf32>
    %cst = arith.constant dense<0.000000e+00> : vector<16x1xf32>
    %3 = tpu.matmul %0, %2, %cst {dimension_numbers = #tpu.dot_dimension_numbers<[1], [0], [0], [1], [0, 0, 1, 1], [], []>} : vector<16x32xf32>, vector<32x1xf32>, vector<16x1xf32> -> vector<16x1xf32>
    %c0_5 = arith.constant 0 : index
    %c0_6 = arith.constant 0 : index
    %4 = vector.load %arg4[%c0_5, %c0_6] : memref<32x1xf32, #tpu.memory_space<vmem>>, vector<32x1xf32>
    %cst_7 = arith.constant dense<0.000000e+00> : vector<16x1xf32>
    %5 = tpu.matmul %1, %4, %cst_7 {dimension_numbers = #tpu.dot_dimension_numbers<[1], [0], [0], [1], [0, 0, 1, 1], [], []>} : vector<16x32xf32>, vector<32x1xf32>, vector<16x1xf32> -> vector<16x1xf32>
    %6 = arith.addf %3, %5 : vector<16x1xf32>
    %7 = arith.negf %6 : vector<16x1xf32>
    %8 = math.exp %7 : vector<16x1xf32>
    %cst_8 = arith.constant 1.000000e+00 : f32
    %9 = vector.broadcast %cst_8 : f32 to vector<16x1xf32>
    %10 = arith.addf %9, %8 : vector<16x1xf32>
    %11 = arith.divf %9, %10 : vector<16x1xf32>
    %12 = vector.broadcast %11 : vector<16x1xf32> to vector<16x32xf32>
    %13 = arith.mulf %0, %12 : vector<16x32xf32>
    %cst_9 = arith.constant 1.000000e+00 : f32
    %14 = vector.broadcast %cst_9 : f32 to vector<16x1xf32>
    %15 = arith.subf %14, %11 : vector<16x1xf32>
    %16 = vector.broadcast %15 : vector<16x1xf32> to vector<16x32xf32>
    %17 = arith.mulf %1, %16 : vector<16x32xf32>
    %18 = arith.addf %13, %17 : vector<16x32xf32>
    %c0_10 = arith.constant 0 : index
    %c0_11 = arith.constant 0 : index
    %19 = vector.load %arg5[%c0_10, %c0_11] : memref<16x32xf32, #tpu.memory_space<vmem>>, vector<16x32xf32>
    tpu.vector_store %arg5[%c0_10, %c0_11], %18 {strides = array<i32>} : memref<16x32xf32, #tpu.memory_space<vmem>>, vector<16x32xf32>,
    return
  }
  func.func @transform_0(%arg0: i32) -> (i32, i32) {
    %c0_i32 = arith.constant 0 : i32
    %c0_i32_0 = arith.constant 0 : i32
    return %arg0, %c0_i32 : i32, i32
  }
  func.func @transform_1(%arg0: i32) -> (i32, i32) {
    %c0_i32 = arith.constant 0 : i32
    %c0_i32_0 = arith.constant 0 : i32
    return %arg0, %c0_i32 : i32, i32
  }
  func.func @transform_2(%arg0: i32) -> (i32, i32) {
    %c0_i32 = arith.constant 0 : i32
    %c0_i32_0 = arith.constant 0 : i32
    %c0_i32_1 = arith.constant 0 : i32
    return %c0_i32, %c0_i32_0 : i32, i32
  }
  func.func @transform_3(%arg0: i32) -> (i32, i32) {
    %c0_i32 = arith.constant 0 : i32
    %c0_i32_0 = arith.constant 0 : i32
    %c0_i32_1 = arith.constant 0 : i32
    return %c0_i32, %c0_i32_0 : i32, i32
  }
  func.func @transform_4(%arg0: i32) -> (i32, i32) {
    %c0_i32 = arith.constant 0 : i32
    %c0_i32_0 = arith.constant 0 : i32
    return %arg0, %c0_i32 : i32, i32
  }
}

</mosaic_0001>

<llo_original>
// kernel: graph_transformer_forward.15
$region0: #{graph_transformer_forward.15}
  #allocation0 [shape = 'u32[]', space=smem, size = 0x4, offset = 0x4, fixed_abs, tag = 'smem constant byte address 0x4 - core index']
  #allocation1 [shape = 'u32[72,128]{1,0:T(1,128)}', space=vmem, size = 0x9000, scoped, tag = 'internal scratch']
  %s0 = inlined_call_operand.vmem [shape: f32[128,32], index: 0, kind: input, shape index: {}]
  %s1 = inlined_call_operand.hbm [shape: f32[32,64], index: 1, kind: input, shape index: {}]
  %s2 = inlined_call_operand.hbm [shape: f32[1,64], index: 2, kind: input, shape index: {}]
  %s3 = inlined_call_operand.vmem [shape: f32[128,64], index: 3, kind: output, shape index: {}]
  %s4 = sld [smem:[#allocation0]]
  $region30: #{graph_transformer_forward.15} parent=0
    _
  %s6 = ssub.s32 1, %s4
  %s7 = scalar_select 0, %s6, %s4
  $region1: #{graph_transformer_forward.15} parent=0
    #allocation2 [shape = 'u8[16384]{0}', space=vmem, size = 0x4000, scoped, tag = 'input window, operand 1, single buffered']
    #allocation3 [shape = 's32[1]{0}', space=sflag, size = 0x4, scoped, tag = 'scoped memory for graph_transformer_forward.15']
    #allocation4 [shape = 'u8[512]{0}', space=vmem, size = 0x400, scoped, tag = 'input window, operand 2, single buffered']
    #allocation5 [shape = 's32[1]{0}', space=sflag, size = 0x4, scoped, tag = 'scoped memory for graph_transformer_forward.15']
    %8 = vsyncpa [#allocation3], 0
    %9 = vsyncpa [#allocation5], 0
    // Predicated region
    $region2: #{graph_transformer_forward.15} parent=1 // pred_check
      _
    $region3: #{graph_transformer_forward.15} parent=1 // pred_check_branch
      %11 = sbr.rel (0) target = $region5
    $region4: #{graph_transformer_forward.15} parent=1 // pred_region
      _
    $region5: #{graph_transformer_forward.15} parent=1 // pred_fallthru
      _
    // Predicated region
    $region6: #{graph_transformer_forward.15} parent=1 // pred_check
      _
    $region7: #{graph_transformer_forward.15} parent=1 // pred_check_branch
      %13 = sbr.rel (0) target = $region9
    $region8: #{graph_transformer_forward.15} parent=1 // pred_region
      %15 = vsyncadd [#allocation3], 0
      %s16 = sshll.u32 %s1, 4
      %s17 = int_to_ptr.hbm [resolvable:$true] %s16
      %s18 = sshll.u32 [#allocation2], 4
      %s19 = int_to_ptr.vmem [resolvable:$true] %s18
      %24 = dma.hbm_to_vmem [thread:$0]  %s17, 512, %s19, [#allocation3], 128, 128, 8
    $region9: #{graph_transformer_forward.15} parent=1 // pred_fallthru
      _
    // Predicated region
    $region10: #{graph_transformer_forward.15} parent=1 // pred_check
      _
    $region11: #{graph_transformer_forward.15} parent=1 // pred_check_branch
      %26 = sbr.rel (0) target = $region13
    $region12: #{graph_transformer_forward.15} parent=1 // pred_region
      %28 = vsyncadd [#allocation5], 0
      %s30 = sshll.u32 %s2, 4
      %s31 = int_to_ptr.hbm [resolvable:$true] %s30
      %s32 = sshll.u32 [#allocation4], 4
      %s33 = int_to_ptr.vmem [resolvable:$true] %s32
      %35 = dma.hbm_to_vmem [thread:$0]  %s31, 16, %s33, [#allocation5]
    $region13: #{graph_transformer_forward.15} parent=1 // pred_fallthru
      _
    // Predicated region
    $region14: #{graph_transformer_forward.15} parent=1 // pred_check
      _
    $region15: #{graph_transformer_forward.15} parent=1 // pred_check_branch
      %37 = sbr.rel (0) target = $region17
    $region16: #{graph_transformer_forward.15} parent=1 // pred_region
      %39 = dma.done [#allocation3], 512
    $region17: #{graph_transformer_forward.15} parent=1 // pred_fallthru
      _
    // Predicated region
    $region18: #{graph_transformer_forward.15} parent=1 // pred_check
      _
    $region19: #{graph_transformer_forward.15} parent=1 // pred_check_branch
      %41 = sbr.rel (0) target = $region21
    $region20: #{graph_transformer_forward.15} parent=1 // pred_region
      %43 = dma.done [#allocation5], 16
    $region21: #{graph_transformer_forward.15} parent=1 // pred_fallthru
      _
    %v44 = vld [vmem:[%s0] sm:$0xff]
    %v45 = vld [vmem:[%s0 + $0x8] sm:$0xff]
    %v46 = vld [vmem:[%s0 + $0x10] sm:$0xff]
    %v47 = vld [vmem:[%s0 + $0x18] sm:$0xff]
    %v48 = vld [vmem:[%s0 + $0x20] sm:$0xff]
    %v49 = vld [vmem:[%s0 + $0x28] sm:$0xff]
    %v50 = vld [vmem:[%s0 + $0x30] sm:$0xff]
    %v51 = vld [vmem:[%s0 + $0x38] sm:$0xff]
    %v52 = vld [vmem:[%s0 + $0x40] sm:$0xff]
    %v53 = vld [vmem:[%s0 + $0x48] sm:$0xff]
    %v54 = vld [vmem:[%s0 + $0x50] sm:$0xff]
    %v55 = vld [vmem:[%s0 + $0x58] sm:$0xff]
    %v56 = vld [vmem:[%s0 + $0x60] sm:$0xff]
    %v57 = vld [vmem:[%s0 + $0x68] sm:$0xff]
    %v58 = vld [vmem:[%s0 + $0x70] sm:$0xff]
    %v59 = vld [vmem:[%s0 + $0x78] sm:$0xff]
    %v60 = vld [vmem:[#allocation2] sm:$0xff]
    %v61 = vld [vmem:[#allocation2 + $0x8] sm:$0xff]
    %v62 = vld [vmem:[#allocation2 + $0x10] sm:$0xff]
    %v63 = vld [vmem:[#allocation2 + $0x18] sm:$0xff]
    %v64 = vld [vmem:[#allocation4] sm:$0x1]
    %v66 = vperm.slane %v64, 0
    %vm68 = vcmask 261120
    %v70 = vsel %vm68, %v44, 0
    %v73 = vsel %vm68, %v45, 0
    %v76 = vsel %vm68, %v46, 0
    %v79 = vsel %vm68, %v47, 0
    %v82 = vsel %vm68, %v48, 0
    %v85 = vsel %vm68, %v49, 0
    %v88 = vsel %vm68, %v50, 0
    %v91 = vsel %vm68, %v51, 0
    %v94 = vsel %vm68, %v52, 0
    %v97 = vsel %vm68, %v53, 0
    %v100 = vsel %vm68, %v54, 0
    %v103 = vsel %vm68, %v55, 0
    %v106 = vsel %vm68, %v56, 0
    %v109 = vsel %vm68, %v57, 0
    %v112 = vsel %vm68, %v58, 0
    %v115 = vsel %vm68, %v59, 0
    %117 = vmatpush.msra.mxu0 0.0
    %118 = vmatpush.msra.mxu0 0.0
    %119 = vmatpush.msra.mxu0 0.0
    %120 = vmatpush.msra.mxu0 0.0
    %121 = vmatpush.msra.mxu0 0.0
    %122 = vmatpush.msra.mxu0 0.0
    %123 = vmatpush.msra.mxu0 0.0
    %124 = vmatpush.msra.mxu0 0.0
    %125 = vmatpush.msra.mxu0 0.0
    %126 = vmatpush.msra.mxu0 0.0
    %127 = vmatpush.msra.mxu0 0.0
    %128 = vmatpush.msra.mxu0 0.0
    %129 = vmatpush.msra.mxu0 %v63
    %130 = vmatpush.msra.mxu0 %v62
    %131 = vmatpush.msra.mxu0 %v61
    %132 = vmatpush.msra.mxu0 %v60
    %133 = vmatmul.f32.gmra.mxu0 %v70
    %v134 = vpop.f32.mrf.mxu0
    %v135 = vadd.f32 %v66, %v134
    %136 = vmatmul.f32.gmra.mxu0 %v73
    %v137 = vpop.f32.mrf.mxu0
    %v138 = vadd.f32 %v66, %v137
    %139 = vmatmul.f32.gmra.mxu0 %v76
    %v140 = vpop.f32.mrf.mxu0
    %v141 = vadd.f32 %v66, %v140
    %142 = vmatmul.f32.gmra.mxu0 %v79
    %v143 = vpop.f32.mrf.mxu0
    %v144 = vadd.f32 %v66, %v143
    %145 = vmatmul.f32.gmra.mxu0 %v82
    %v146 = vpop.f32.mrf.mxu0
    %v147 = vadd.f32 %v66, %v146
    %148 = vmatmul.f32.gmra.mxu0 %v85
    %v149 = vpop.f32.mrf.mxu0
    %v150 = vadd.f32 %v66, %v149
    %151 = vmatmul.f32.gmra.mxu0 %v88
    %v152 = vpop.f32.mrf.mxu0
    %v153 = vadd.f32 %v66, %v152
    %154 = vmatmul.f32.gmra.mxu0 %v91
    %v155 = vpop.f32.mrf.mxu0
    %v156 = vadd.f32 %v66, %v155
    %157 = vmatmul.f32.gmra.mxu0 %v94
    %v158 = vpop.f32.mrf.mxu0
    %v159 = vadd.f32 %v66, %v158
    %160 = vmatmul.f32.gmra.mxu0 %v97
    %v161 = vpop.f32.mrf.mxu0
    %v162 = vadd.f32 %v66, %v161
    %163 = vmatmul.f32.gmra.mxu0 %v100
    %v164 = vpop.f32.mrf.mxu0
    %v165 = vadd.f32 %v66, %v164
    %166 = vmatmul.f32.gmra.mxu0 %v103
    %v167 = vpop.f32.mrf.mxu0
    %v168 = vadd.f32 %v66, %v167
    %169 = vmatmul.f32.gmra.mxu0 %v106
    %v170 = vpop.f32.mrf.mxu0
    %v171 = vadd.f32 %v66, %v170
    %172 = vmatmul.f32.gmra.mxu0 %v109
    %v173 = vpop.f32.mrf.mxu0
    %v174 = vadd.f32 %v66, %v173
    %175 = vmatmul.f32.gmra.mxu0 %v112
    %v176 = vpop.f32.mrf.mxu0
    %v177 = vadd.f32 %v66, %v176
    %178 = vmatmul.f32.gmra.mxu0 %v115
    %v179 = vpop.f32.mrf.mxu0
    %v180 = vadd.f32 %v66, %v179
    %181 = vdwg.mxu0
    %vm182 = vcmask 523264
    %183 = vst.msk [vmem:[%s3] sm:$0xff] %vm182, %v135
    %184 = vst.msk [vmem:[%s3 + $0x8] sm:$0xff] %vm182, %v138
    %185 = vst.msk [vmem:[%s3 + $0x10] sm:$0xff] %vm182, %v141
    %186 = vst.msk [vmem:[%s3 + $0x18] sm:$0xff] %vm182, %v144
    %187 = vst.msk [vmem:[%s3 + $0x20] sm:$0xff] %vm182, %v147
    %188 = vst.msk [vmem:[%s3 + $0x28] sm:$0xff] %vm182, %v150
    %189 = vst.msk [vmem:[%s3 + $0x30] sm:$0xff] %vm182, %v153
    %190 = vst.msk [vmem:[%s3 + $0x38] sm:$0xff] %vm182, %v156
    %191 = vst.msk [vmem:[%s3 + $0x40] sm:$0xff] %vm182, %v159
    %192 = vst.msk [vmem:[%s3 + $0x48] sm:$0xff] %vm182, %v162
    %193 = vst.msk [vmem:[%s3 + $0x50] sm:$0xff] %vm182, %v165
    %194 = vst.msk [vmem:[%s3 + $0x58] sm:$0xff] %vm182, %v168
    %195 = vst.msk [vmem:[%s3 + $0x60] sm:$0xff] %vm182, %v171
    %196 = vst.msk [vmem:[%s3 + $0x68] sm:$0xff] %vm182, %v174
    %197 = vst.msk [vmem:[%s3 + $0x70] sm:$0xff] %vm182, %v177
    %198 = vst.msk [vmem:[%s3 + $0x78] sm:$0xff] %vm182, %v180
    // Predicated region
    $region22: #{graph_transformer_forward.15} parent=1 // pred_check
      _
    $region23: #{graph_transformer_forward.15} parent=1 // pred_check_branch
      %200 = sbr.rel (0) target = $region25
    $region24: #{graph_transformer_forward.15} parent=1 // pred_region
      _
    $region25: #{graph_transformer_forward.15} parent=1 // pred_fallthru
      _
    // Predicated region
    $region26: #{graph_transformer_forward.15} parent=1 // pred_check
      _
    $region27: #{graph_transformer_forward.15} parent=1 // pred_check_branch
      %202 = sbr.rel (0) target = $region29
    $region28: #{graph_transformer_forward.15} parent=1 // pred_region
      _
    $region29: #{graph_transformer_forward.15} parent=1 // pred_fallthru
      _
    %203 = vsyncpa [#allocation3], 1
    %204 = vsyncpa [#allocation5], 1

// kernel: graph_transformer_forward.14
$region0: #{graph_transformer_forward.14}
  #allocation0 [shape = 'u32[]', space=smem, size = 0x4, offset = 0x4, fixed_abs, tag = 'smem constant byte address 0x4 - core index']
  #allocation1 [shape = 'u32[72,128]{1,0:T(1,128)}', space=vmem, size = 0x9000, scoped, tag = 'internal scratch']
  %s0 = inlined_call_operand.hbm [shape: f32[16,32], index: 0, kind: input, shape index: {}]
  %s1 = inlined_call_operand.vmem [shape: f32[1,32], index: 1, kind: input, shape index: {}]
  %s2 = inlined_call_operand.hbm [shape: f32[1,32], index: 2, kind: input, shape index: {}]
  %s3 = inlined_call_operand.vmem [shape: f32[32,192], index: 3, kind: input, shape index: {}]
  %s4 = inlined_call_operand.vmem [shape: f32[1,192], index: 4, kind: input, shape index: {}]
  %s5 = inlined_call_operand.vmem [shape: f32[16,192], index: 5, kind: output, shape index: {}]
  %s6 = sld [smem:[#allocation0]]
  $region38: #{graph_transformer_forward.14} parent=0
    _
  %s8 = ssub.s32 1, %s6
  %s9 = scalar_select 0, %s8, %s6
  $region1: #{graph_transformer_forward.14} parent=0
    #allocation2 [shape = 'u8[8192]{0}', space=vmem, size = 0x2000, scoped, tag = 'input window, operand 0, single buffered']
    #allocation3 [shape = 's32[1]{0}', space=sflag, size = 0x4, scoped, tag = 'scoped memory for graph_transformer_forward.14']
    #allocation4 [shape = 'u8[512]{0}', space=vmem, size = 0x400, scoped, tag = 'input window, operand 2, single buffered']
    #allocation5 [shape = 's32[1]{0}', space=sflag, size = 0x4, scoped, tag = 'scoped memory for graph_transformer_forward.14']
    %10 = vsyncpa [#allocation3], 0
    %11 = vsyncpa [#allocation5], 0
    // Predicated region
    $region2: #{graph_transformer_forward.14} parent=1 // pred_check
      _
    $region3: #{graph_transformer_forward.14} parent=1 // pred_check_branch
      %13 = sbr.rel (0) target = $region5
    $region4: #{graph_transformer_forward.14} parent=1 // pred_region
      %15 = vsyncadd [#allocation3], 0
      %s16 = sshll.u32 %s0, 4
      %s17 = int_to_ptr.hbm [resolvable:$true] %s16
      %s18 = sshll.u32 [#allocation2], 4
      %s19 = int_to_ptr.vmem [resolvable:$true] %s18
      %24 = dma.hbm_to_vmem [thread:$0]  %s17, 256, %s19, [#allocation3], 128, 128, 8
    $region5: #{graph_transformer_forward.14} parent=1 // pred_fallthru
      _
    // Predicated region
    $region6: #{graph_transformer_forward.14} parent=1 // pred_check
      _
    $region7: #{graph_transformer_forward.14} parent=1 // pred_check_branch
      %26 = sbr.rel (0) target = $region9
    $region8: #{graph_transformer_forward.14} parent=1 // pred_region
      _
    $region9: #{graph_transformer_forward.14} parent=1 // pred_fallthru
      _
    // Predicated region
    $region10: #{graph_transformer_forward.14} parent=1 // pred_check
      _
    $region11: #{graph_transformer_forward.14} parent=1 // pred_check_branch
      %28 = sbr.rel (0) target = $region13
    $region12: #{graph_transformer_forward.14} parent=1 // pred_region
      %30 = vsyncadd [#allocation5], 0
      %s32 = sshll.u32 %s2, 4
      %s33 = int_to_ptr.hbm [resolvable:$true] %s32
      %s34 = sshll.u32 [#allocation4], 4
      %s35 = int_to_ptr.vmem [resolvable:$true] %s34
      %37 = dma.hbm_to_vmem [thread:$0]  %s33, 16, %s35, [#allocation5]
    $region13: #{graph_transformer_forward.14} parent=1 // pred_fallthru
      _
    // Predicated region
    $region14: #{graph_transformer_forward.14} parent=1 // pred_check
      _
    $region15: #{graph_transformer_forward.14} parent=1 // pred_check_branch
      %39 = sbr.rel (0) target = $region17
    $region16: #{graph_transformer_forward.14} parent=1 // pred_region
      _
    $region17: #{graph_transformer_forward.14} parent=1 // pred_fallthru
      _
    // Predicated region
    $region18: #{graph_transformer_forward.14} parent=1 // pred_check
      _
    $region19: #{graph_transformer_forward.14} parent=1 // pred_check_branch
      %41 = sbr.rel (0) target = $region21
    $region20: #{graph_transformer_forward.14} parent=1 // pred_region
      _
    $region21: #{graph_transformer_forward.14} parent=1 // pred_fallthru
      _
    // Predicated region
    $region22: #{graph_transformer_forward.14} parent=1 // pred_check
      _
    $region23: #{graph_transformer_forward.14} parent=1 // pred_check_branch
      %43 = sbr.rel (0) target = $region25
    $region24: #{graph_transformer_forward.14} parent=1 // pred_region
      %45 = dma.done [#allocation3], 256
    $region25: #{graph_transformer_forward.14} parent=1 // pred_fallthru
      _
    // Predicated region
    $region26: #{graph_transformer_forward.14} parent=1 // pred_check
      _
    $region27: #{graph_transformer_forward.14} parent=1 // pred_check_branch
      %47 = sbr.rel (0) target = $region29
    $region28: #{graph_transformer_forward.14} parent=1 // pred_region
      %49 = dma.done [#allocation5], 16
    $region29: #{graph_transformer_forward.14} parent=1 // pred_fallthru
      _
    %v50 = vld [vmem:[#allocation2] sm:$0xff]
    %v51 = vld [vmem:[#allocation2 + $0x8] sm:$0xff]
    %v52 = vld [vmem:[%s1] sm:$0x1]
    %v53 = vld [vmem:[#allocation4] sm:$0x1]
    %vm54 = vcmask 261120
    %v55 = vsel %vm54, %v50, 0.0
    %56 = vadd.xlane.f32.xlu0 %v55
    %v57 = vpop.xlane.xlu0 %56
    %v58 = vsel %vm54, %v51, 0.0
    %59 = vadd.xlane.f32.xlu0 %v58
    %v60 = vpop.xlane.xlu0 %59
    %v61 = vrcp.pop 32.0
    %v62 = vmul.f32 32.0, %v61
    %v63 = vsub.f32 1.0, %v62
    %v64 = vmul.f32 %v61, %v63
    %v65 = vadd.f32 %v61, %v64
    %vm66 = vweird.f32 %v61
    %v67 = vsel %vm66, %v61, %v65
    %v68 = vmul.f32 %v57, %v67
    %v69 = vmul.f32 %v60, %v67
    %v70 = vsub.f32 %v50, %v68
    %v71 = vsub.f32 %v51, %v69
    %v72 = vmul.f32 %v70, %v70
    %v73 = vmul.f32 %v71, %v71
    %v74 = vsel %vm54, %v72, 0.0
    %75 = vadd.xlane.f32.xlu0 %v74
    %v76 = vpop.xlane.xlu0 %75
    %v77 = vsel %vm54, %v73, 0.0
    %78 = vadd.xlane.f32.xlu0 %v77
    %v79 = vpop.xlane.xlu0 %78
    %v80 = vmul.f32 %v76, %v67
    %v81 = vmul.f32 %v79, %v67
    %v82 = vadd.f32 %v80, 1e-05
    %v83 = vadd.f32 %v81, 1e-05
    %v84 = vrsqrt.pop %v82
    %v85 = vmul.f32 %v84, %v82
    %v86 = vmul.f32 %v85, %v84
    %v87 = vmul.f32 0.5, %v86
    %v88 = vsub.f32 1.5, %v87
    %v89 = vmul.f32 %v84, %v88
    %vm90 = vweird.f32 %v82
    %vm91 = vweird.f32 %v84
    %vm92 = vmor %vm90, %vm91
    %v93 = vsel %vm92, %v84, %v89
    %v94 = vrsqrt.pop %v83
    %v95 = vmul.f32 %v94, %v83
    %v96 = vmul.f32 %v95, %v94
    %v97 = vmul.f32 0.5, %v96
    %v98 = vsub.f32 1.5, %v97
    %v99 = vmul.f32 %v94, %v98
    %vm100 = vweird.f32 %v83
    %vm101 = vweird.f32 %v94
    %vm102 = vmor %vm100, %vm101
    %v103 = vsel %vm102, %v94, %v99
    %v104 = vmul.f32 %v70, %v93
    %v105 = vmul.f32 %v71, %v103
    %v107 = vperm.slane %v52, 0
    %v109 = vmul.f32 %v104, %v107
    %v110 = vmul.f32 %v105, %v107
    %v112 = vperm.slane %v53, 0
    %v114 = vadd.f32 %v109, %v112
    %v115 = vadd.f32 %v110, %v112
    %v116 = vld [vmem:[%s3] sm:$0xff]
    %v117 = vld [vmem:[%s3 + $0x8] sm:$0xff]
    %v118 = vld [vmem:[%s3 + $0x10] sm:$0xff]
    %v119 = vld [vmem:[%s3 + $0x18] sm:$0xff]
    %v120 = vld [vmem:[%s3 + $0x20] sm:$0xff]
    %v121 = vld [vmem:[%s3 + $0x28] sm:$0xff]
    %v122 = vld [vmem:[%s3 + $0x30] sm:$0xff]
    %v123 = vld [vmem:[%s3 + $0x38] sm:$0xff]
    %v124 = vld [vmem:[%s4] sm:$0x3]
    %v126 = vperm.slane %v124, 0
    %v127 = vperm.slane %v124, 1
    %v131 = vsel %vm54, %v114, 0
    %v134 = vsel %vm54, %v115, 0
    %136 = vmatpush.msra.mxu0 0.0
    %137 = vmatpush.msra.mxu0 0.0
    %138 = vmatpush.msra.mxu0 0.0
    %139 = vmatpush.msra.mxu0 0.0
    %140 = vmatpush.msra.mxu0 0.0
    %141 = vmatpush.msra.mxu0 0.0
    %142 = vmatpush.msra.mxu0 0.0
    %143 = vmatpush.msra.mxu0 0.0
    %144 = vmatpush.msra.mxu0 0.0
    %145 = vmatpush.msra.mxu0 0.0
    %146 = vmatpush.msra.mxu0 0.0
    %147 = vmatpush.msra.mxu0 0.0
    %148 = vmatpush.msra.mxu0 %v122
    %149 = vmatpush.msra.mxu0 %v120
    %150 = vmatpush.msra.mxu0 %v118
    %151 = vmatpush.msra.mxu0 %v116
    %152 = vmatmul.f32.gmra.mxu0 %v131
    %v153 = vpop.f32.mrf.mxu0
    %v154 = vadd.f32 %v126, %v153
    %155 = vmatmul.f32.gmra.mxu0 %v134
    %v156 = vpop.f32.mrf.mxu0
    %v157 = vadd.f32 %v126, %v156
    %158 = vdwg.mxu0
    %159 = vmatpush.msra.mxu0 0.0
    %160 = vmatpush.msra.mxu0 0.0
    %161 = vmatpush.msra.mxu0 0.0
    %162 = vmatpush.msra.mxu0 0.0
    %163 = vmatpush.msra.mxu0 0.0
    %164 = vmatpush.msra.mxu0 0.0
    %165 = vmatpush.msra.mxu0 0.0
    %166 = vmatpush.msra.mxu0 0.0
    %167 = vmatpush.msra.mxu0 0.0
    %168 = vmatpush.msra.mxu0 0.0
    %169 = vmatpush.msra.mxu0 0.0
    %170 = vmatpush.msra.mxu0 0.0
    %171 = vmatpush.msra.mxu0 %v123
    %172 = vmatpush.msra.mxu0 %v121
    %173 = vmatpush.msra.mxu0 %v119
    %174 = vmatpush.msra.mxu0 %v117
    %175 = vmatmul.f32.gmra.mxu0 %v131
    %v176 = vpop.f32.mrf.mxu0
    %v177 = vadd.f32 %v127, %v176
    %178 = vmatmul.f32.gmra.mxu0 %v134
    %v179 = vpop.f32.mrf.mxu0
    %v180 = vadd.f32 %v127, %v179
    %181 = vdwg.mxu0
    %182 = vst [vmem:[%s5] sm:$0xff] %v154
    %vm183 = vcmask 523264
    %184 = vst.msk [vmem:[%s5 + $0x8] sm:$0xff] %vm183, %v177
    %185 = vst [vmem:[%s5 + $0x10] sm:$0xff] %v157
    %186 = vst.msk [vmem:[%s5 + $0x18] sm:$0xff] %vm183, %v180
    // Predicated region
    $region30: #{graph_transformer_forward.14} parent=1 // pred_check
      _
    $region31: #{graph_transformer_forward.14} parent=1 // pred_check_branch
      %188 = sbr.rel (0) target = $region33
    $region32: #{graph_transformer_forward.14} parent=1 // pred_region
      _
    $region33: #{graph_transformer_forward.14} parent=1 // pred_fallthru
      _
    // Predicated region
    $region34: #{graph_transformer_forward.14} parent=1 // pred_check
      _
    $region35: #{graph_transformer_forward.14} parent=1 // pred_check_branch
      %190 = sbr.rel (0) target = $region37
    $region36: #{graph_transformer_forward.14} parent=1 // pred_region
      _
    $region37: #{graph_transformer_forward.14} parent=1 // pred_fallthru
      _
    %191 = vsyncpa [#allocation3], 1
    %192 = vsyncpa [#allocation5], 1

// kernel: graph_transformer_forward.17
$region0: #{graph_transformer_forward.17}
  #allocation0 [shape = 'u32[]', space=smem, size = 0x4, offset = 0x4, fixed_abs, tag = 'smem constant byte address 0x4 - core index']
  #allocation1 [shape = 'u32[72,128]{1,0:T(1,128)}', space=vmem, size = 0x9000, scoped, tag = 'internal scratch']
  %s0 = inlined_call_operand.vmem [shape: f32[16,64], index: 0, kind: input, shape index: {}]
  %s1 = inlined_call_operand.vmem [shape: f32[64,32], index: 1, kind: input, shape index: {}]
  %s2 = inlined_call_operand.vmem [shape: f32[1,32], index: 2, kind: input, shape index: {}]
  %s3 = inlined_call_operand.vmem [shape: f32[16,32], index: 3, kind: output, shape index: {}]
  %s4 = sld [smem:[#allocation0]]
  $region22: #{graph_transformer_forward.17} parent=0
    _
  %s6 = ssub.s32 1, %s4
  %s7 = scalar_select 0, %s6, %s4
  // Predicated region
  $region2: #{graph_transformer_forward.17} parent=0 // pred_check
    _
  $region3: #{graph_transformer_forward.17} parent=0 // pred_check_branch
    %9 = sbr.rel (0) target = $region5
  $region4: #{graph_transformer_forward.17} parent=0 // pred_region
    _
  $region5: #{graph_transformer_forward.17} parent=0 // pred_fallthru
    _
  // Predicated region
  $region6: #{graph_transformer_forward.17} parent=0 // pred_check
    _
  $region7: #{graph_transformer_forward.17} parent=0 // pred_check_branch
    %11 = sbr.rel (0) target = $region9
  $region8: #{graph_transformer_forward.17} parent=0 // pred_region
    _
  $region9: #{graph_transformer_forward.17} parent=0 // pred_fallthru
    _
  // Predicated region
  $region10: #{graph_transformer_forward.17} parent=0 // pred_check
    _
  $region11: #{graph_transformer_forward.17} parent=0 // pred_check_branch
    %13 = sbr.rel (0) target = $region13
  $region12: #{graph_transformer_forward.17} parent=0 // pred_region
    _
  $region13: #{graph_transformer_forward.17} parent=0 // pred_fallthru
    _
  %v14 = vld [vmem:[%s0] sm:$0xff]
  %v15 = vld [vmem:[%s0 + $0x8] sm:$0xff]
  %v16 = vld [vmem:[%s1] sm:$0xff]
  %v17 = vld [vmem:[%s1 + $0x8] sm:$0xff]
  %v18 = vld [vmem:[%s1 + $0x10] sm:$0xff]
  %v19 = vld [vmem:[%s1 + $0x18] sm:$0xff]
  %v20 = vld [vmem:[%s1 + $0x20] sm:$0xff]
  %v21 = vld [vmem:[%s1 + $0x28] sm:$0xff]
  %v22 = vld [vmem:[%s1 + $0x30] sm:$0xff]
  %v23 = vld [vmem:[%s1 + $0x38] sm:$0xff]
  %v24 = vld [vmem:[%s2] sm:$0x1]
  %v26 = vperm.slane %v24, 0
  %vm28 = vcmask 523264
  %v30 = vsel %vm28, %v14, 0
  %v33 = vsel %vm28, %v15, 0
  %35 = vmatpush.msra.mxu0 0.0
  %36 = vmatpush.msra.mxu0 0.0
  %37 = vmatpush.msra.mxu0 0.0
  %38 = vmatpush.msra.mxu0 0.0
  %39 = vmatpush.msra.mxu0 0.0
  %40 = vmatpush.msra.mxu0 0.0
  %41 = vmatpush.msra.mxu0 0.0
  %42 = vmatpush.msra.mxu0 0.0
  %43 = vmatpush.msra.mxu0 %v23
  %44 = vmatpush.msra.mxu0 %v22
  %45 = vmatpush.msra.mxu0 %v21
  %46 = vmatpush.msra.mxu0 %v20
  %47 = vmatpush.msra.mxu0 %v19
  %48 = vmatpush.msra.mxu0 %v18
  %49 = vmatpush.msra.mxu0 %v17
  %50 = vmatpush.msra.mxu0 %v16
  %51 = vmatmul.f32.gmra.mxu0 %v30
  %v52 = vpop.f32.mrf.mxu0
  %v53 = vadd.f32 %v26, %v52
  %54 = vmatmul.f32.gmra.mxu0 %v33
  %v55 = vpop.f32.mrf.mxu0
  %v56 = vadd.f32 %v26, %v55
  %57 = vdwg.mxu0
  %vm58 = vcmask 261120
  %59 = vst.msk [vmem:[%s3] sm:$0xff] %vm58, %v53
  %60 = vst.msk [vmem:[%s3 + $0x8] sm:$0xff] %vm58, %v56
  // Predicated region
  $region14: #{graph_transformer_forward.17} parent=0 // pred_check
    _
  $region15: #{graph_transformer_forward.17} parent=0 // pred_check_branch
    %62 = sbr.rel (0) target = $region17
  $region16: #{graph_transformer_forward.17} parent=0 // pred_region
    _
  $region17: #{graph_transformer_forward.17} parent=0 // pred_fallthru
    _
  // Predicated region
  $region18: #{graph_transformer_forward.17} parent=0 // pred_check
    _
  $region19: #{graph_transformer_forward.17} parent=0 // pred_check_branch
    %64 = sbr.rel (0) target = $region21
  $region20: #{graph_transformer_forward.17} parent=0 // pred_region
    _
  $region21: #{graph_transformer_forward.17} parent=0 // pred_fallthru
    _

// kernel: graph_transformer_forward.18
$region0: #{graph_transformer_forward.18}
  #allocation0 [shape = 'u32[]', space=smem, size = 0x4, offset = 0x4, fixed_abs, tag = 'smem constant byte address 0x4 - core index']
  #allocation1 [shape = 'u32[72,128]{1,0:T(1,128)}', space=vmem, size = 0x9000, scoped, tag = 'internal scratch']
  %s0 = inlined_call_operand.vmem [shape: f32[16,32], index: 0, kind: input, shape index: {}]
  %s1 = inlined_call_operand.vmem [shape: f32[16,32], index: 1, kind: input, shape index: {}]
  %s2 = inlined_call_operand.vmem [shape: f32[32,1], index: 2, kind: input, shape index: {}]
  %s3 = inlined_call_operand.vmem [shape: f32[32,1], index: 3, kind: input, shape index: {}]
  %s4 = inlined_call_operand.vmem [shape: f32[16,32], index: 4, kind: output, shape index: {}]
  %s5 = sld [smem:[#allocation0]]
  $region26: #{graph_transformer_forward.18} parent=0
    _
  %s7 = ssub.s32 1, %s5
  %s8 = scalar_select 0, %s7, %s5
  // Predicated region
  $region2: #{graph_transformer_forward.18} parent=0 // pred_check
    _
  $region3: #{graph_transformer_forward.18} parent=0 // pred_check_branch
    %10 = sbr.rel (0) target = $region5
  $region4: #{graph_transformer_forward.18} parent=0 // pred_region
    _
  $region5: #{graph_transformer_forward.18} parent=0 // pred_fallthru
    _
  // Predicated region
  $region6: #{graph_transformer_forward.18} parent=0 // pred_check
    _
  $region7: #{graph_transformer_forward.18} parent=0 // pred_check_branch
    %12 = sbr.rel (0) target = $region9
  $region8: #{graph_transformer_forward.18} parent=0 // pred_region
    _
  $region9: #{graph_transformer_forward.18} parent=0 // pred_fallthru
    _
  // Predicated region
  $region10: #{graph_transformer_forward.18} parent=0 // pred_check
    _
  $region11: #{graph_transformer_forward.18} parent=0 // pred_check_branch
    %14 = sbr.rel (0) target = $region13
  $region12: #{graph_transformer_forward.18} parent=0 // pred_region
    _
  $region13: #{graph_transformer_forward.18} parent=0 // pred_fallthru
    _
  // Predicated region
  $region14: #{graph_transformer_forward.18} parent=0 // pred_check
    _
  $region15: #{graph_transformer_forward.18} parent=0 // pred_check_branch
    %16 = sbr.rel (0) target = $region17
  $region16: #{graph_transformer_forward.18} parent=0 // pred_region
    _
  $region17: #{graph_transformer_forward.18} parent=0 // pred_fallthru
    _
  %v17 = vld [vmem:[%s0] sm:$0xff]
  %v18 = vld [vmem:[%s0 + $0x8] sm:$0xff]
  %v19 = vld [vmem:[%s1] sm:$0xff]
  %v20 = vld [vmem:[%s1 + $0x8] sm:$0xff]
  %v21 = vld [vmem:[%s2] sm:$0xff]
  %v22 = vld [vmem:[%s2 + $0x8] sm:$0xff]
  %v23 = vld [vmem:[%s2 + $0x10] sm:$0xff]
  %v24 = vld [vmem:[%s2 + $0x18] sm:$0xff]
  %v25 = vld [vmem:[%s3] sm:$0xff]
  %v26 = vld [vmem:[%s3 + $0x8] sm:$0xff]
  %v27 = vld [vmem:[%s3 + $0x10] sm:$0xff]
  %v28 = vld [vmem:[%s3 + $0x18] sm:$0xff]
  %vm29 = vcmask 261120
  %v31 = vsel %vm29, %v19, 0
  %v34 = vsel %vm29, %v20, 0
  %36 = vmatpush.msra.mxu0 0.0
  %37 = vmatpush.msra.mxu0 0.0
  %38 = vmatpush.msra.mxu0 0.0
  %39 = vmatpush.msra.mxu0 0.0
  %40 = vmatpush.msra.mxu0 0.0
  %41 = vmatpush.msra.mxu0 0.0
  %42 = vmatpush.msra.mxu0 0.0
  %43 = vmatpush.msra.mxu0 0.0
  %44 = vmatpush.msra.mxu0 0.0
  %45 = vmatpush.msra.mxu0 0.0
  %46 = vmatpush.msra.mxu0 0.0
  %47 = vmatpush.msra.mxu0 0.0
  %48 = vmatpush.msra.mxu0 %v28
  %49 = vmatpush.msra.mxu0 %v27
  %50 = vmatpush.msra.mxu0 %v26
  %51 = vmatpush.msra.mxu0 %v25
  %52 = vmatmul.f32.gmra.mxu0 %v31
  %v53 = vpop.f32.mrf.mxu0
  %v54 = vadd.f32 0.0, %v53
  %55 = vmatmul.f32.gmra.mxu0 %v34
  %v56 = vpop.f32.mrf.mxu0
  %v57 = vadd.f32 0.0, %v56
  %58 = vdwg.mxu0
  %v60 = vsel %vm29, %v17, 0
  %v63 = vsel %vm29, %v18, 0
  %65 = vmatpush.msra.mxu0 0.0
  %66 = vmatpush.msra.mxu0 0.0
  %67 = vmatpush.msra.mxu0 0.0
  %68 = vmatpush.msra.mxu0 0.0
  %69 = vmatpush.msra.mxu0 0.0
  %70 = vmatpush.msra.mxu0 0.0
  %71 = vmatpush.msra.mxu0 0.0
  %72 = vmatpush.msra.mxu0 0.0
  %73 = vmatpush.msra.mxu0 0.0
  %74 = vmatpush.msra.mxu0 0.0
  %75 = vmatpush.msra.mxu0 0.0
  %76 = vmatpush.msra.mxu0 0.0
  %77 = vmatpush.msra.mxu0 %v24
  %78 = vmatpush.msra.mxu0 %v23
  %79 = vmatpush.msra.mxu0 %v22
  %80 = vmatpush.msra.mxu0 %v21
  %81 = vmatmul.f32.gmra.mxu0 %v60
  %v82 = vpop.f32.mrf.mxu0
  %v83 = vadd.f32 %v54, %v82
  %84 = vmatmul.f32.gmra.mxu0 %v63
  %v85 = vpop.f32.mrf.mxu0
  %v86 = vadd.f32 %v57, %v85
  %87 = vdwg.mxu0
  %v88 = vxor.u32 %v83, 2147483648
  %v89 = vxor.u32 %v86, 2147483648
  %v90 = vmul.f32 %v88, 1.442695
  %v91 = vpow.pop %v90
  %v92 = vmul.f32 %v89, 1.442695
  %v93 = vpow.pop %v92
  %v94 = vadd.f32 %v91, 1.0
  %v95 = vadd.f32 %v93, 1.0
  %v96 = vrcp.pop %v94
  %v97 = vmul.f32 %v94, %v96
  %v98 = vsub.f32 1.0, %v97
  %v99 = vmul.f32 %v96, %v98
  %v100 = vadd.f32 %v96, %v99
  %vm101 = vweird.f32 %v94
  %vm102 = vweird.f32 %v96
  %vm103 = vmor %vm101, %vm102
  %v104 = vsel %vm103, %v96, %v100
  %v105 = vand.u32 2147483647, %v94
  %vm106 = vcmp.eq.f32.partialorder %v105, 8.507059e+37
  %v107 = vand.u32 %v94, 2147483648
  %v108 = vor.u32 1.1754944e-38, %v107
  %v109 = vsel %vm106, %v108, %v104
  %v110 = vmul.f32 1.0, %v109
  %v111 = vrcp.pop %v95
  %v112 = vmul.f32 %v95, %v111
  %v113 = vsub.f32 1.0, %v112
  %v114 = vmul.f32 %v111, %v113
  %v115 = vadd.f32 %v111, %v114
  %vm116 = vweird.f32 %v95
  %vm117 = vweird.f32 %v111
  %vm118 = vmor %vm116, %vm117
  %v119 = vsel %vm118, %v111, %v115
  %v120 = vand.u32 2147483647, %v95
  %vm121 = vcmp.eq.f32.partialorder %v120, 8.507059e+37
  %v122 = vand.u32 %v95, 2147483648
  %v123 = vor.u32 1.1754944e-38, %v122
  %v124 = vsel %vm121, %v123, %v119
  %v125 = vmul.f32 1.0, %v124
  %127 = vset.pattern.permute.xlu0 0
  %128 = vperm.xlu0 %127, %v110
  %v129 = vpop.permute.xlu0 %128
  %132 = vset.pattern.permute.xlu0 0
  %133 = vperm.xlu0 %132, %v125
  %v134 = vpop.permute.xlu0 %133
  %v136 = vmul.f32 %v17, %v129
  %v137 = vmul.f32 %v18, %v134
  %v138 = vsub.f32 1.0, %v110
  %v139 = vsub.f32 1.0, %v125
  %141 = vset.pattern.permute.xlu0 0
  %142 = vperm.xlu0 %141, %v138
  %v143 = vpop.permute.xlu0 %142
  %146 = vset.pattern.permute.xlu0 0
  %147 = vperm.xlu0 %146, %v139
  %v148 = vpop.permute.xlu0 %147
  %v150 = vmul.f32 %v19, %v143
  %v151 = vmul.f32 %v20, %v148
  %v152 = vadd.f32 %v136, %v150
  %v153 = vadd.f32 %v137, %v151
  %154 = vst.msk [vmem:[%s4] sm:$0xff] %vm29, %v152
  %155 = vst.msk [vmem:[%s4 + $0x8] sm:$0xff] %vm29, %v153
  // Predicated region
  $region18: #{graph_transformer_forward.18} parent=0 // pred_check
    _
  $region19: #{graph_transformer_forward.18} parent=0 // pred_check_branch
    %157 = sbr.rel (0) target = $region21
  $region20: #{graph_transformer_forward.18} parent=0 // pred_region
    _
  $region21: #{graph_transformer_forward.18} parent=0 // pred_fallthru
    _
  // Predicated region
  $region22: #{graph_transformer_forward.18} parent=0 // pred_check
    _
  $region23: #{graph_transformer_forward.18} parent=0 // pred_check_branch
    %159 = sbr.rel (0) target = $region25
  $region24: #{graph_transformer_forward.18} parent=0 // pred_region
    _
  $region25: #{graph_transformer_forward.18} parent=0 // pred_fallthru
    _

// kernel: graph_transformer_forward.21
$region0: #{graph_transformer_forward.21}
  #allocation0 [shape = 'u32[]', space=smem, size = 0x4, offset = 0x4, fixed_abs, tag = 'smem constant byte address 0x4 - core index']
  #allocation1 [shape = 'u32[72,128]{1,0:T(1,128)}', space=vmem, size = 0x9000, scoped, tag = 'internal scratch']
  %s0 = inlined_call_operand.vmem [shape: f32[16,32], index: 0, kind: input, shape index: {}]
  %s1 = inlined_call_operand.vmem [shape: f32[1,32], index: 1, kind: input, shape index: {}]
  %s2 = inlined_call_operand.vmem [shape: f32[1,32], index: 2, kind: input, shape index: {}]
  %s3 = inlined_call_operand.vmem [shape: f32[32,192], index: 3, kind: input, shape index: {}]
  %s4 = inlined_call_operand.vmem [shape: f32[1,192], index: 4, kind: input, shape index: {}]
  %s5 = inlined_call_operand.vmem [shape: f32[16,192], index: 5, kind: output, shape index: {}]
  %s6 = sld [smem:[#allocation0]]
  $region30: #{graph_transformer_forward.21} parent=0
    _
  %s8 = ssub.s32 1, %s6
  %s9 = scalar_select 0, %s8, %s6
  // Predicated region
  $region2: #{graph_transformer_forward.21} parent=0 // pred_check
    _
  $region3: #{graph_transformer_forward.21} parent=0 // pred_check_branch
    %11 = sbr.rel (0) target = $region5
  $region4: #{graph_transformer_forward.21} parent=0 // pred_region
    _
  $region5: #{graph_transformer_forward.21} parent=0 // pred_fallthru
    _
  // Predicated region
  $region6: #{graph_transformer_forward.21} parent=0 // pred_check
    _
  $region7: #{graph_transformer_forward.21} parent=0 // pred_check_branch
    %13 = sbr.rel (0) target = $region9
  $region8: #{graph_transformer_forward.21} parent=0 // pred_region
    _
  $region9: #{graph_transformer_forward.21} parent=0 // pred_fallthru
    _
  // Predicated region
  $region10: #{graph_transformer_forward.21} parent=0 // pred_check
    _
  $region11: #{graph_transformer_forward.21} parent=0 // pred_check_branch
    %15 = sbr.rel (0) target = $region13
  $region12: #{graph_transformer_forward.21} parent=0 // pred_region
    _
  $region13: #{graph_transformer_forward.21} parent=0 // pred_fallthru
    _
  // Predicated region
  $region14: #{graph_transformer_forward.21} parent=0 // pred_check
    _
  $region15: #{graph_transformer_forward.21} parent=0 // pred_check_branch
    %17 = sbr.rel (0) target = $region17
  $region16: #{graph_transformer_forward.21} parent=0 // pred_region
    _
  $region17: #{graph_transformer_forward.21} parent=0 // pred_fallthru
    _
  // Predicated region
  $region18: #{graph_transformer_forward.21} parent=0 // pred_check
    _
  $region19: #{graph_transformer_forward.21} parent=0 // pred_check_branch
    %19 = sbr.rel (0) target = $region21
  $region20: #{graph_transformer_forward.21} parent=0 // pred_region
    _
  $region21: #{graph_transformer_forward.21} parent=0 // pred_fallthru
    _
  %v20 = vld [vmem:[%s0] sm:$0xff]
  %v21 = vld [vmem:[%s0 + $0x8] sm:$0xff]
  %v22 = vld [vmem:[%s1] sm:$0x1]
  %v23 = vld [vmem:[%s2] sm:$0x1]
  %vm24 = vcmask 261120
  %v25 = vsel %vm24, %v20, 0.0
  %26 = vadd.xlane.f32.xlu0 %v25
  %v27 = vpop.xlane.xlu0 %26
  %v28 = vsel %vm24, %v21, 0.0
  %29 = vadd.xlane.f32.xlu0 %v28
  %v30 = vpop.xlane.xlu0 %29
  %v31 = vrcp.pop 32.0
  %v32 = vmul.f32 32.0, %v31
  %v33 = vsub.f32 1.0, %v32
  %v34 = vmul.f32 %v31, %v33
  %v35 = vadd.f32 %v31, %v34
  %vm36 = vweird.f32 %v31
  %v37 = vsel %vm36, %v31, %v35
  %v38 = vmul.f32 %v27, %v37
  %v39 = vmul.f32 %v30, %v37
  %v40 = vsub.f32 %v20, %v38
  %v41 = vsub.f32 %v21, %v39
  %v42 = vmul.f32 %v40, %v40
  %v43 = vmul.f32 %v41, %v41
  %v44 = vsel %vm24, %v42, 0.0
  %45 = vadd.xlane.f32.xlu0 %v44
  %v46 = vpop.xlane.xlu0 %45
  %v47 = vsel %vm24, %v43, 0.0
  %48 = vadd.xlane.f32.xlu0 %v47
  %v49 = vpop.xlane.xlu0 %48
  %v50 = vmul.f32 %v46, %v37
  %v51 = vmul.f32 %v49, %v37
  %v52 = vadd.f32 %v50, 1e-05
  %v53 = vadd.f32 %v51, 1e-05
  %v54 = vrsqrt.pop %v52
  %v55 = vmul.f32 %v54, %v52
  %v56 = vmul.f32 %v55, %v54
  %v57 = vmul.f32 0.5, %v56
  %v58 = vsub.f32 1.5, %v57
  %v59 = vmul.f32 %v54, %v58
  %vm60 = vweird.f32 %v52
  %vm61 = vweird.f32 %v54
  %vm62 = vmor %vm60, %vm61
  %v63 = vsel %vm62, %v54, %v59
  %v64 = vrsqrt.pop %v53
  %v65 = vmul.f32 %v64, %v53
  %v66 = vmul.f32 %v65, %v64
  %v67 = vmul.f32 0.5, %v66
  %v68 = vsub.f32 1.5, %v67
  %v69 = vmul.f32 %v64, %v68
  %vm70 = vweird.f32 %v53
  %vm71 = vweird.f32 %v64
  %vm72 = vmor %vm70, %vm71
  %v73 = vsel %vm72, %v64, %v69
  %v74 = vmul.f32 %v40, %v63
  %v75 = vmul.f32 %v41, %v73
  %v77 = vperm.slane %v22, 0
  %v79 = vmul.f32 %v74, %v77
  %v80 = vmul.f32 %v75, %v77
  %v82 = vperm.slane %v23, 0
  %v84 = vadd.f32 %v79, %v82
  %v85 = vadd.f32 %v80, %v82
  %v86 = vld [vmem:[%s3] sm:$0xff]
  %v87 = vld [vmem:[%s3 + $0x8] sm:$0xff]
  %v88 = vld [vmem:[%s3 + $0x10] sm:$0xff]
  %v89 = vld [vmem:[%s3 + $0x18] sm:$0xff]
  %v90 = vld [vmem:[%s3 + $0x20] sm:$0xff]
  %v91 = vld [vmem:[%s3 + $0x28] sm:$0xff]
  %v92 = vld [vmem:[%s3 + $0x30] sm:$0xff]
  %v93 = vld [vmem:[%s3 + $0x38] sm:$0xff]
  %v94 = vld [vmem:[%s4] sm:$0x3]
  %v96 = vperm.slane %v94, 0
  %v97 = vperm.slane %v94, 1
  %v101 = vsel %vm24, %v84, 0
  %v104 = vsel %vm24, %v85, 0
  %106 = vmatpush.msra.mxu0 0.0
  %107 = vmatpush.msra.mxu0 0.0
  %108 = vmatpush.msra.mxu0 0.0
  %109 = vmatpush.msra.mxu0 0.0
  %110 = vmatpush.msra.mxu0 0.0
  %111 = vmatpush.msra.mxu0 0.0
  %112 = vmatpush.msra.mxu0 0.0
  %113 = vmatpush.msra.mxu0 0.0
  %114 = vmatpush.msra.mxu0 0.0
  %115 = vmatpush.msra.mxu0 0.0
  %116 = vmatpush.msra.mxu0 0.0
  %117 = vmatpush.msra.mxu0 0.0
  %118 = vmatpush.msra.mxu0 %v92
  %119 = vmatpush.msra.mxu0 %v90
  %120 = vmatpush.msra.mxu0 %v88
  %121 = vmatpush.msra.mxu0 %v86
  %122 = vmatmul.f32.gmra.mxu0 %v101
  %v123 = vpop.f32.mrf.mxu0
  %v124 = vadd.f32 %v96, %v123
  %125 = vmatmul.f32.gmra.mxu0 %v104
  %v126 = vpop.f32.mrf.mxu0
  %v127 = vadd.f32 %v96, %v126
  %128 = vdwg.mxu0
  %129 = vmatpush.msra.mxu0 0.0
  %130 = vmatpush.msra.mxu0 0.0
  %131 = vmatpush.msra.mxu0 0.0
  %132 = vmatpush.msra.mxu0 0.0
  %133 = vmatpush.msra.mxu0 0.0
  %134 = vmatpush.msra.mxu0 0.0
  %135 = vmatpush.msra.mxu0 0.0
  %136 = vmatpush.msra.mxu0 0.0
  %137 = vmatpush.msra.mxu0 0.0
  %138 = vmatpush.msra.mxu0 0.0
  %139 = vmatpush.msra.mxu0 0.0
  %140 = vmatpush.msra.mxu0 0.0
  %141 = vmatpush.msra.mxu0 %v93
  %142 = vmatpush.msra.mxu0 %v91
  %143 = vmatpush.msra.mxu0 %v89
  %144 = vmatpush.msra.mxu0 %v87
  %145 = vmatmul.f32.gmra.mxu0 %v101
  %v146 = vpop.f32.mrf.mxu0
  %v147 = vadd.f32 %v97, %v146
  %148 = vmatmul.f32.gmra.mxu0 %v104
  %v149 = vpop.f32.mrf.mxu0
  %v150 = vadd.f32 %v97, %v149
  %151 = vdwg.mxu0
  %152 = vst [vmem:[%s5] sm:$0xff] %v124
  %vm153 = vcmask 523264
  %154 = vst.msk [vmem:[%s5 + $0x8] sm:$0xff] %vm153, %v147
  %155 = vst [vmem:[%s5 + $0x10] sm:$0xff] %v127
  %156 = vst.msk [vmem:[%s5 + $0x18] sm:$0xff] %vm153, %v150
  // Predicated region
  $region22: #{graph_transformer_forward.21} parent=0 // pred_check
    _
  $region23: #{graph_transformer_forward.21} parent=0 // pred_check_branch
    %158 = sbr.rel (0) target = $region25
  $region24: #{graph_transformer_forward.21} parent=0 // pred_region
    _
  $region25: #{graph_transformer_forward.21} parent=0 // pred_fallthru
    _
  // Predicated region
  $region26: #{graph_transformer_forward.21} parent=0 // pred_check
    _
  $region27: #{graph_transformer_forward.21} parent=0 // pred_check_branch
    %160 = sbr.rel (0) target = $region29
  $region28: #{graph_transformer_forward.21} parent=0 // pred_region
    _
  $region29: #{graph_transformer_forward.21} parent=0 // pred_fallthru
    _

// kernel: graph_transformer_forward.16
$region0: #{graph_transformer_forward.16}
  #allocation0 [shape = 'u32[]', space=smem, size = 0x4, offset = 0x4, fixed_abs, tag = 'smem constant byte address 0x4 - core index']
  #allocation1 [shape = 'u32[72,128]{1,0:T(1,128)}', space=vmem, size = 0x9000, scoped, tag = 'internal scratch']
  %s0 = inlined_call_operand.vmem [shape: f32[2,8,192], index: 0, kind: input, shape index: {}]
  %s1 = inlined_call_operand.vmem [shape: f32[2,8,8,64], index: 1, kind: input, shape index: {}]
  %s2 = inlined_call_operand.vmem [shape: f32[2,8,8], index: 2, kind: input, shape index: {}]
  %s3 = inlined_call_operand.vmem [shape: f32[2,8,64], index: 3, kind: output, shape index: {}]
  %s4 = sld [smem:[#allocation0]]
  $region45: #{graph_transformer_forward.16} parent=0
    _
  %s6 = ssub.s32 1, %s4
  %s7 = scalar_select 0, %s6, %s4
  loop: start=0, step=1, limit=4
  $region2: #{graph_transformer_forward.16} parent=0 // loop_pre_header
    _
  $region3: #{graph_transformer_forward.16} parent=0 // loop_header
    %s9 = sphi 0, %s13
    %p10 = scmp.ge.s32.totalorder %s9, 4
    %s19 = sphi 0, %s21
    %s22 = sphi 0, %s19
    %s23 = sphi 0, %s22
    %s39 = sphi 0, %s23
    %s45 = sphi 0, %s47
    %s48 = sphi 0, %s45
    %s49 = sphi 0, %s48
    %s65 = sphi 0, %s49
    %s71 = sphi 0, %s73
    %s74 = sphi 0, %s71
    %s75 = sphi 0, %s74
    %s91 = sphi 0, %s75
    %s97 = sphi 0, %s99
    %s100 = sphi 0, %s97
    %s101 = sphi 0, %s100
    %s117 = sphi 0, %s101
  $region4: #{graph_transformer_forward.16} parent=0 // loop_header_branch
    %12 = sbr.rel (%p10) target = $region8
  $region5: #{graph_transformer_forward.16} parent=0 // loop_body
    %s14 = ssub.s32 %s9, 1
    %s15 = ssub.s32 %s9, 2
    %s16 = sadd.s32 %s9, 1
    %s17 = ssub.s32 %s9, %s16
    %p18 = scmp.eq.s32.totalorder %s17, 0
    %s20 = sadd.s32 %s19, 1
    %s21 = scalar_select %p18, %s19, %s20
    %p24 = pneg %p18
    %p25 = scmp.eq.s32.totalorder %s9, 1
    %p26 = por %p24, %p25
    %p27 = scmp.ne.s32.totalorder %s19, %s22
    %p28 = scmp.eq.s32.totalorder %s9, 0
    %p29 = por %p27, %p28
    %p30 = scmp.ne.s32.totalorder %s19, %s22
    %p31 = scmp.eq.s32.totalorder %s14, 1
    %p32 = por %p30, %p31
    %p33 = scmp.ne.s32.totalorder %s22, %s23
    %p34 = scmp.eq.s32.totalorder %s14, 0
    %p35 = por %p33, %p34
    %p36 = scmp.ne.s32.totalorder %s22, %s23
    %p37 = scmp.eq.s32.totalorder %s15, 1
    %p38 = por %p36, %p37
    %p40 = scmp.ne.s32.totalorder %s23, %s39
    %p41 = scmp.eq.s32.totalorder %s15, 0
    %p42 = por %p40, %p41
    %s43 = ssub.s32 %s9, %s16
    %p44 = scmp.eq.s32.totalorder %s43, 0
    %s46 = sadd.s32 %s45, 1
    %s47 = scalar_select %p44, %s45, %s46
    %p50 = pneg %p44
    %p51 = scmp.eq.s32.totalorder %s9, 1
    %p52 = por %p50, %p51
    %p53 = scmp.ne.s32.totalorder %s45, %s48
    %p54 = scmp.eq.s32.totalorder %s9, 0
    %p55 = por %p53, %p54
    %p56 = scmp.ne.s32.totalorder %s45, %s48
    %p57 = scmp.eq.s32.totalorder %s14, 1
    %p58 = por %p56, %p57
    %p59 = scmp.ne.s32.totalorder %s48, %s49
    %p60 = scmp.eq.s32.totalorder %s14, 0
    %p61 = por %p59, %p60
    %p62 = scmp.ne.s32.totalorder %s48, %s49
    %p63 = scmp.eq.s32.totalorder %s15, 1
    %p64 = por %p62, %p63
    %p66 = scmp.ne.s32.totalorder %s49, %s65
    %p67 = scmp.eq.s32.totalorder %s15, 0
    %p68 = por %p66, %p67
    %s69 = ssub.s32 %s9, %s16
    %p70 = scmp.eq.s32.totalorder %s69, 0
    %s72 = sadd.s32 %s71, 1
    %s73 = scalar_select %p70, %s71, %s72
    %p76 = pneg %p70
    %p77 = scmp.eq.s32.totalorder %s9, 1
    %p78 = por %p76, %p77
    %p79 = scmp.ne.s32.totalorder %s71, %s74
    %p80 = scmp.eq.s32.totalorder %s9, 0
    %p81 = por %p79, %p80
    %p82 = scmp.ne.s32.totalorder %s71, %s74
    %p83 = scmp.eq.s32.totalorder %s14, 1
    %p84 = por %p82, %p83
    %p85 = scmp.ne.s32.totalorder %s74, %s75
    %p86 = scmp.eq.s32.totalorder %s14, 0
    %p87 = por %p85, %p86
    %p88 = scmp.ne.s32.totalorder %s74, %s75
    %p89 = scmp.eq.s32.totalorder %s15, 1
    %p90 = por %p88, %p89
    %p92 = scmp.ne.s32.totalorder %s75, %s91
    %p93 = scmp.eq.s32.totalorder %s15, 0
    %p94 = por %p92, %p93
    %s95 = ssub.s32 %s9, %s16
    %p96 = scmp.eq.s32.totalorder %s95, 0
    %s98 = sadd.s32 %s97, 1
    %s99 = scalar_select %p96, %s97, %s98
    %p102 = pneg %p96
    %p103 = scmp.eq.s32.totalorder %s9, 1
    %p104 = por %p102, %p103
    %p105 = scmp.ne.s32.totalorder %s97, %s100
    %p106 = scmp.eq.s32.totalorder %s9, 0
    %p107 = por %p105, %p106
    %p108 = scmp.ne.s32.totalorder %s97, %s100
    %p109 = scmp.eq.s32.totalorder %s14, 1
    %p110 = por %p108, %p109
    %p111 = scmp.ne.s32.totalorder %s100, %s101
    %p112 = scmp.eq.s32.totalorder %s14, 0
    %p113 = por %p111, %p112
    %p114 = scmp.ne.s32.totalorder %s100, %s101
    %p115 = scmp.eq.s32.totalorder %s15, 1
    %p116 = por %p114, %p115
    %p118 = scmp.ne.s32.totalorder %s101, %s117
    %p119 = scmp.eq.s32.totalorder %s15, 0
    %p120 = por %p118, %p119
    %p121 = scmp.le.s32.totalorder 1, %s9
    %p122 = scmp.lt.s32.totalorder %s9, 3
    %p123 = pnand %p121, %p122
    %p124 = pneg %p123
    // Predicated region
    $region9: #{graph_transformer_forward.16} parent=5 // pred_check
      _
    $region10: #{graph_transformer_forward.16} parent=5 // pred_check_branch
      %126 = sbr.rel (%p123) target = $region12
    $region11: #{graph_transformer_forward.16} parent=5 // pred_region
      %s127 = ssub.s32 %s9, 1
    $region12: #{graph_transformer_forward.16} parent=5 // pred_fallthru
      _
    %p128 = scmp.lt.s32.totalorder %s9, 2
    // Predicated region
    $region13: #{graph_transformer_forward.16} parent=5 // pred_check
      %p129 = pneg %p128
    $region14: #{graph_transformer_forward.16} parent=5 // pred_check_branch
      %131 = sbr.rel (%p129) target = $region16
    $region15: #{graph_transformer_forward.16} parent=5 // pred_region
      // Predicated region
      $region17: #{graph_transformer_forward.16} parent=15 // pred_check
        %p132 = pneg %p29
      $region18: #{graph_transformer_forward.16} parent=15 // pred_check_branch
        %134 = sbr.rel (%p132) target = $region20
      $region19: #{graph_transformer_forward.16} parent=15 // pred_region
        %p135 = scmp.lt.s32.totalorder %s9, 1
        %s136 = scalar_select %p135, %s9, 1
        %s137 = smul.addr %s136, 2
        %s138 = smul.addr %s137, 8
        %s139 = scalar_lea.vmem %s0, %s138
      $region20: #{graph_transformer_forward.16} parent=15 // pred_fallthru
        _
      // Predicated region
      $region21: #{graph_transformer_forward.16} parent=15 // pred_check
        %p140 = pneg %p55
      $region22: #{graph_transformer_forward.16} parent=15 // pred_check_branch
        %142 = sbr.rel (%p140) target = $region24
      $region23: #{graph_transformer_forward.16} parent=15 // pred_region
        %p143 = scmp.lt.s32.totalorder %s9, 1
        %s144 = scalar_select %p143, %s9, 1
        %s145 = smul.addr %s144, 8
        %s146 = smul.addr %s145, 8
        %s147 = scalar_lea.vmem %s1, %s146
      $region24: #{graph_transformer_forward.16} parent=15 // pred_fallthru
        _
      // Predicated region
      $region25: #{graph_transformer_forward.16} parent=15 // pred_check
        %p148 = pneg %p81
      $region26: #{graph_transformer_forward.16} parent=15 // pred_check_branch
        %150 = sbr.rel (%p148) target = $region28
      $region27: #{graph_transformer_forward.16} parent=15 // pred_region
        %p151 = scmp.lt.s32.totalorder %s9, 1
        %s152 = scalar_select %p151, %s9, 1
        %s153 = smul.addr %s152, 8
        %s154 = scalar_lea.vmem %s2, %s153
      $region28: #{graph_transformer_forward.16} parent=15 // pred_fallthru
        _
    $region16: #{graph_transformer_forward.16} parent=5 // pred_fallthru
      _
    %p155 = scmp.le.s32.totalorder 1, %s9
    %p156 = scmp.lt.s32.totalorder %s9, 3
    %p157 = pnand %p155, %p156
    %p158 = pneg %p157
    // Predicated region
    $region29: #{graph_transformer_forward.16} parent=5 // pred_check
      _
    $region30: #{graph_transformer_forward.16} parent=5 // pred_check_branch
      %160 = sbr.rel (%p157) target = $region32
    $region31: #{graph_transformer_forward.16} parent=5 // pred_region
      %s161 = ssub.s32 %s9, 1
      %p162 = scmp.lt.s32.totalorder %s14, 1
      %s163 = scalar_select %p162, %s14, 1
      %s164 = smul.addr %s163, 2
      %s165 = smul.addr %s164, 8
      %s166 = scalar_lea.vmem %s0, %s165
      %p167 = pneg %p35
      %p168 = pneg %p32
      %p169 = scmp.lt.s32.totalorder %s14, 1
      %s170 = scalar_select %p169, %s14, 1
      %s171 = smul.addr %s170, 8
      %s172 = smul.addr %s171, 8
      %s173 = scalar_lea.vmem %s1, %s172
      %p174 = pneg %p61
      %p175 = pneg %p58
      %p176 = scmp.lt.s32.totalorder %s14, 1
      %s177 = scalar_select %p176, %s14, 1
      %s178 = smul.addr %s177, 8
      %s179 = scalar_lea.vmem %s2, %s178
      %p180 = pneg %p87
      %p181 = pneg %p84
      %p182 = pneg %p113
      %p183 = pneg %p110
      %p184 = scmp.lt.s32.totalorder %s14, 1
      %s185 = scalar_select %p184, %s14, 1
      %s186 = smul.addr %s185, 8
      %s187 = scalar_lea.vmem %s3, %s186
      %p188 = scmp.lt.s32.totalorder %s14, 1
      %s189 = scalar_select %p188, %s14, 1
      %s190 = smul.addr %s189, 2
      %s191 = smul.addr %s190, 8
      %s192 = scalar_lea.vmem %s0, %s191
      %p193 = scmp.lt.s32.totalorder %s14, 1
      %s194 = scalar_select %p193, %s14, 1
      %s195 = smul.addr %s194, 8
      %s196 = smul.addr %s195, 8
      %s197 = scalar_lea.vmem %s1, %s196
      %p198 = scmp.lt.s32.totalorder %s14, 1
      %s199 = scalar_select %p198, %s14, 1
      %s200 = smul.addr %s199, 8
      %s201 = scalar_lea.vmem %s2, %s200
      %p202 = scmp.lt.s32.totalorder %s14, 1
      %s203 = scalar_select %p202, %s14, 1
      %s204 = smul.addr %s203, 8
      %s205 = scalar_lea.vmem %s3, %s204
      %v206 = vld [vmem:[%s192] sm:$0xff]
      %v207 = vld [vmem:[%s192 + $0x8] sm:$0xff]
      %v208 = vld [vmem:[%s197] sm:$0xff]
      %v209 = vld [vmem:[%s197 + $0x8] sm:$0xff]
      %v210 = vld [vmem:[%s197 + $0x10] sm:$0xff]
      %v211 = vld [vmem:[%s197 + $0x18] sm:$0xff]
      %v212 = vld [vmem:[%s197 + $0x20] sm:$0xff]
      %v213 = vld [vmem:[%s197 + $0x28] sm:$0xff]
      %v214 = vld [vmem:[%s197 + $0x30] sm:$0xff]
      %v215 = vld [vmem:[%s197 + $0x38] sm:$0xff]
      %v216 = vld [vmem:[%s201] sm:$0xff]
      %v218 = vrot.slane %v206, 1
      %v219 = vrot.slane %v206, 2
      %v220 = vrot.slane %v206, 3
      %v221 = vrot.slane %v206, 4
      %v222 = vrot.slane %v206, 5
      %v223 = vrot.slane %v206, 6
      %v224 = vrot.slane %v206, 7
      %v225 = vperm.slane %v206, 0
      %v226 = vperm.slane %v218, 0
      %v227 = vperm.slane %v219, 0
      %v228 = vperm.slane %v220, 0
      %v229 = vperm.slane %v221, 0
      %v230 = vperm.slane %v222, 0
      %v231 = vperm.slane %v223, 0
      %v232 = vperm.slane %v224, 0
      %v241 = vmul.f32 %v225, %v208
      %v242 = vmul.f32 %v226, %v209
      %v243 = vmul.f32 %v227, %v210
      %v244 = vmul.f32 %v228, %v211
      %v245 = vmul.f32 %v229, %v212
      %v246 = vmul.f32 %v230, %v213
      %v247 = vmul.f32 %v231, %v214
      %v248 = vmul.f32 %v232, %v215
      %vm249 = vcmask 130048
      %v250 = vsel %vm249, %v241, 0.0
      %251 = vadd.xlane.f32.xlu0 %v250
      %v252 = vpop.xlane.xlu0 %251
      %v253 = vsel %vm249, %v242, 0.0
      %254 = vadd.xlane.f32.xlu0 %v253
      %v255 = vpop.xlane.xlu0 %254
      %v256 = vsel %vm249, %v243, 0.0
      %257 = vadd.xlane.f32.xlu0 %v256
      %v258 = vpop.xlane.xlu0 %257
      %v259 = vsel %vm249, %v244, 0.0
      %260 = vadd.xlane.f32.xlu0 %v259
      %v261 = vpop.xlane.xlu0 %260
      %v262 = vsel %vm249, %v245, 0.0
      %263 = vadd.xlane.f32.xlu0 %v262
      %v264 = vpop.xlane.xlu0 %263
      %v265 = vsel %vm249, %v246, 0.0
      %266 = vadd.xlane.f32.xlu0 %v265
      %v267 = vpop.xlane.xlu0 %266
      %v268 = vsel %vm249, %v247, 0.0
      %269 = vadd.xlane.f32.xlu0 %v268
      %v270 = vpop.xlane.xlu0 %269
      %v271 = vsel %vm249, %v248, 0.0
      %272 = vadd.xlane.f32.xlu0 %v271
      %v273 = vpop.xlane.xlu0 %272
      %274 = vrot.lane.b32.xlu0 %v206, 64
      %v275 = vpop.permute.xlu0 %274
      %v284 = vlaneseq
      %v285 = vand.u32 %v284, 127
      %v286 = vperm.slane %v252, %v285
      %v287 = vperm.slane %v255, %v285
      %v288 = vperm.slane %v258, %v285
      %v289 = vperm.slane %v261, %v285
      %v290 = vperm.slane %v264, %v285
      %v291 = vperm.slane %v267, %v285
      %v292 = vperm.slane %v270, %v285
      %v293 = vperm.slane %v273, %v285
      %vm294 = vcmask 1041409
      %v295 = vsel %vm294, %v287, %v286
      %vm296 = vcmask 1042434
      %v297 = vsel %vm296, %v288, %v295
      %vm298 = vcmask 1043459
      %v299 = vsel %vm298, %v289, %v297
      %vm300 = vcmask 1044484
      %v301 = vsel %vm300, %v290, %v299
      %vm302 = vcmask 1045509
      %v303 = vsel %vm302, %v291, %v301
      %vm304 = vcmask 1046534
      %v305 = vsel %vm304, %v292, %v303
      %vm306 = vcmask 1047559
      %v307 = vsel %vm306, %v293, %v305
      %v309 = vsel %vm249, %v206, 0
      %v311 = vsel %vm249, %v275, 0
      %313 = vmatpush.xpose.msra.mxu0 0.0
      %314 = vmatpush.xpose.msra.mxu0 0.0
      %315 = vmatpush.xpose.msra.mxu0 0.0
      %316 = vmatpush.xpose.msra.mxu0 0.0
      %317 = vmatpush.xpose.msra.mxu0 0.0
      %318 = vmatpush.xpose.msra.mxu0 0.0
      %319 = vmatpush.xpose.msra.mxu0 0.0
      %320 = vmatpush.xpose.msra.mxu0 0.0
      %321 = vmatpush.xpose.msra.mxu0 0.0
      %322 = vmatpush.xpose.msra.mxu0 0.0
      %323 = vmatpush.xpose.msra.mxu0 0.0
      %324 = vmatpush.xpose.msra.mxu0 0.0
      %325 = vmatpush.xpose.msra.mxu0 0.0
      %326 = vmatpush.xpose.msra.mxu0 0.0
      %327 = vmatpush.xpose.msra.mxu0 0.0
      %328 = vmatpush.xpose.msra.mxu0 %v311
      %329 = vmatmul.f32.gmra.mxu0 %v309
      %v330 = vpop.f32.mrf.mxu0
      %v331 = vadd.f32 %v307, %v330
      %332 = vdwg.mxu0
      %v333 = vmul.f32 %v331, 0.25
      %vm334 = vcmp.gt.f32.partialorder %v216, 0.0
      %v335 = vsel %vm334, %v333, -3.4028235e+38
      %vm336 = vcmask 64512
      %v337 = vsel %vm336, %v335, -inf
      %338 = vmax.xlane.f32.xlu0 %v337
      %v339 = vpop.xlane.xlu0 %338
      %v340 = vsub.f32 %v335, %v339
      %v341 = vmul.f32 %v340, 1.442695
      %v342 = vpow.pop %v341
      %v343 = vsel %vm336, %v342, 0.0
      %344 = vadd.xlane.f32.xlu0 %v343
      %v345 = vpop.xlane.xlu0 %344
      %v346 = vrcp.pop %v345
      %v347 = vmul.f32 %v345, %v346
      %v348 = vsub.f32 1.0, %v347
      %v349 = vmul.f32 %v346, %v348
      %v350 = vadd.f32 %v346, %v349
      %vm351 = vweird.f32 %v345
      %vm352 = vweird.f32 %v346
      %vm353 = vmor %vm351, %vm352
      %v354 = vsel %vm353, %v346, %v350
      %v355 = vand.u32 2147483647, %v345
      %vm356 = vcmp.eq.f32.partialorder %v355, 8.507059e+37
      %v357 = vand.u32 %v345, 2147483648
      %v358 = vor.u32 1.1754944e-38, %v357
      %v359 = vsel %vm356, %v358, %v354
      %v360 = vmul.f32 %v342, %v359
      %v361 = vperm.slane %v360, 0
      %v362 = vlaneseq
      %v363 = vshrl.u32 %v362, 7
      %365 = vset.pattern.permute.xlu0 %v363
      %366 = vperm.xlu0 %365, %v361
      %v367 = vpop.permute.xlu0 %366
      %v368 = vperm.slane %v360, 1
      %v369 = vlaneseq
      %v370 = vshrl.u32 %v369, 7
      %372 = vset.pattern.permute.xlu0 %v370
      %373 = vperm.xlu0 %372, %v368
      %v374 = vpop.permute.xlu0 %373
      %v375 = vperm.slane %v360, 2
      %v376 = vlaneseq
      %v377 = vshrl.u32 %v376, 7
      %379 = vset.pattern.permute.xlu0 %v377
      %380 = vperm.xlu0 %379, %v375
      %v381 = vpop.permute.xlu0 %380
      %v382 = vperm.slane %v360, 3
      %v383 = vlaneseq
      %v384 = vshrl.u32 %v383, 7
      %386 = vset.pattern.permute.xlu0 %v384
      %387 = vperm.xlu0 %386, %v382
      %v388 = vpop.permute.xlu0 %387
      %v389 = vperm.slane %v360, 4
      %v390 = vlaneseq
      %v391 = vshrl.u32 %v390, 7
      %393 = vset.pattern.permute.xlu0 %v391
      %394 = vperm.xlu0 %393, %v389
      %v395 = vpop.permute.xlu0 %394
      %v396 = vperm.slane %v360, 5
      %v397 = vlaneseq
      %v398 = vshrl.u32 %v397, 7
      %400 = vset.pattern.permute.xlu0 %v398
      %401 = vperm.xlu0 %400, %v396
      %v402 = vpop.permute.xlu0 %401
      %v403 = vperm.slane %v360, 6
      %v404 = vlaneseq
      %v405 = vshrl.u32 %v404, 7
      %407 = vset.pattern.permute.xlu0 %v405
      %408 = vperm.xlu0 %407, %v403
      %v409 = vpop.permute.xlu0 %408
      %v410 = vperm.slane %v360, 7
      %v411 = vlaneseq
      %v412 = vshrl.u32 %v411, 7
      %414 = vset.pattern.permute.xlu0 %v412
      %415 = vperm.xlu0 %414, %v410
      %v416 = vpop.permute.xlu0 %415
      %v417 = vmul.f32 %v367, %v208
      %v418 = vmul.f32 %v374, %v209
      %v419 = vmul.f32 %v381, %v210
      %v420 = vmul.f32 %v388, %v211
      %v421 = vmul.f32 %v395, %v212
      %v422 = vmul.f32 %v402, %v213
      %v423 = vmul.f32 %v409, %v214
      %v424 = vmul.f32 %v416, %v215
      %v425 = vsel %vm249, %v417, 0.0
      %v426 = vrot.slane %v425, 4
      %v427 = vadd.f32 %v425, %v426
      %v428 = vrot.slane %v427, 2
      %v429 = vadd.f32 %v427, %v428
      %v430 = vrot.slane %v429, 1
      %v431 = vadd.f32 %v429, %v430
      %v432 = vsel %vm249, %v418, 0.0
      %v433 = vrot.slane %v432, 4
      %v434 = vadd.f32 %v432, %v433
      %v435 = vrot.slane %v434, 2
      %v436 = vadd.f32 %v434, %v435
      %v437 = vrot.slane %v436, 1
      %v438 = vadd.f32 %v436, %v437
      %v439 = vsel %vm249, %v419, 0.0
      %v440 = vrot.slane %v439, 4
      %v441 = vadd.f32 %v439, %v440
      %v442 = vrot.slane %v441, 2
      %v443 = vadd.f32 %v441, %v442
      %v444 = vrot.slane %v443, 1
      %v445 = vadd.f32 %v443, %v444
      %v446 = vsel %vm249, %v420, 0.0
      %v447 = vrot.slane %v446, 4
      %v448 = vadd.f32 %v446, %v447
      %v449 = vrot.slane %v448, 2
      %v450 = vadd.f32 %v448, %v449
      %v451 = vrot.slane %v450, 1
      %v452 = vadd.f32 %v450, %v451
      %v453 = vsel %vm249, %v421, 0.0
      %v454 = vrot.slane %v453, 4
      %v455 = vadd.f32 %v453, %v454
      %v456 = vrot.slane %v455, 2
      %v457 = vadd.f32 %v455, %v456
      %v458 = vrot.slane %v457, 1
      %v459 = vadd.f32 %v457, %v458
      %v460 = vsel %vm249, %v422, 0.0
      %v461 = vrot.slane %v460, 4
      %v462 = vadd.f32 %v460, %v461
      %v463 = vrot.slane %v462, 2
      %v464 = vadd.f32 %v462, %v463
      %v465 = vrot.slane %v464, 1
      %v466 = vadd.f32 %v464, %v465
      %v467 = vsel %vm249, %v423, 0.0
      %v468 = vrot.slane %v467, 4
      %v469 = vadd.f32 %v467, %v468
      %v470 = vrot.slane %v469, 2
      %v471 = vadd.f32 %v469, %v470
      %v472 = vrot.slane %v471, 1
      %v473 = vadd.f32 %v471, %v472
      %v474 = vsel %vm249, %v424, 0.0
      %v475 = vrot.slane %v474, 4
      %v476 = vadd.f32 %v474, %v475
      %v477 = vrot.slane %v476, 2
      %v478 = vadd.f32 %v476, %v477
      %v479 = vrot.slane %v478, 1
      %v480 = vadd.f32 %v478, %v479
      %v489 = vsel %vm294, %v438, %v431
      %v490 = vsel %vm296, %v445, %v489
      %v491 = vsel %vm298, %v452, %v490
      %v492 = vsel %vm300, %v459, %v491
      %v493 = vsel %vm302, %v466, %v492
      %v494 = vsel %vm304, %v473, %v493
      %v495 = vsel %vm306, %v480, %v494
      %v498 = vsel %vm336, %v360, 0
      %500 = vmatpush.msra.mxu0 0.0
      %501 = vmatpush.msra.mxu0 0.0
      %502 = vmatpush.msra.mxu0 0.0
      %503 = vmatpush.msra.mxu0 0.0
      %504 = vmatpush.msra.mxu0 0.0
      %505 = vmatpush.msra.mxu0 0.0
      %506 = vmatpush.msra.mxu0 0.0
      %507 = vmatpush.msra.mxu0 0.0
      %508 = vmatpush.msra.mxu0 0.0
      %509 = vmatpush.msra.mxu0 0.0
      %510 = vmatpush.msra.mxu0 0.0
      %511 = vmatpush.msra.mxu0 0.0
      %512 = vmatpush.msra.mxu0 0.0
      %513 = vmatpush.msra.mxu0 0.0
      %514 = vmatpush.msra.mxu0 0.0
      %515 = vmatpush.msra.mxu0 %v207
      %516 = vmatmul.f32.gmra.mxu0 %v498
      %v517 = vpop.f32.mrf.mxu0
      %v518 = vadd.f32 %v495, %v517
      %519 = vdwg.mxu0
      %528 = vrot.lane.b32.xlu0 %v241, 112
      %v529 = vpop.permute.xlu0 %528
      %530 = vrot.lane.b32.xlu0 %v242, 112
      %v531 = vpop.permute.xlu0 %530
      %532 = vrot.lane.b32.xlu0 %v243, 112
      %v533 = vpop.permute.xlu0 %532
      %534 = vrot.lane.b32.xlu0 %v244, 112
      %v535 = vpop.permute.xlu0 %534
      %536 = vrot.lane.b32.xlu0 %v245, 112
      %v537 = vpop.permute.xlu0 %536
      %538 = vrot.lane.b32.xlu0 %v246, 112
      %v539 = vpop.permute.xlu0 %538
      %540 = vrot.lane.b32.xlu0 %v247, 112
      %v541 = vpop.permute.xlu0 %540
      %542 = vrot.lane.b32.xlu0 %v248, 112
      %v543 = vpop.permute.xlu0 %542
      %v552 = vsel %vm249, %v529, 0.0
      %553 = vadd.xlane.f32.xlu0 %v552
      %v554 = vpop.xlane.xlu0 %553
      %v555 = vsel %vm249, %v531, 0.0
      %556 = vadd.xlane.f32.xlu0 %v555
      %v557 = vpop.xlane.xlu0 %556
      %v558 = vsel %vm249, %v533, 0.0
      %559 = vadd.xlane.f32.xlu0 %v558
      %v560 = vpop.xlane.xlu0 %559
      %v561 = vsel %vm249, %v535, 0.0
      %562 = vadd.xlane.f32.xlu0 %v561
      %v563 = vpop.xlane.xlu0 %562
      %v564 = vsel %vm249, %v537, 0.0
      %565 = vadd.xlane.f32.xlu0 %v564
      %v566 = vpop.xlane.xlu0 %565
      %v567 = vsel %vm249, %v539, 0.0
      %568 = vadd.xlane.f32.xlu0 %v567
      %v569 = vpop.xlane.xlu0 %568
      %v570 = vsel %vm249, %v541, 0.0
      %571 = vadd.xlane.f32.xlu0 %v570
      %v572 = vpop.xlane.xlu0 %571
      %v573 = vsel %vm249, %v543, 0.0
      %574 = vadd.xlane.f32.xlu0 %v573
      %v575 = vpop.xlane.xlu0 %574
      %576 = vrot.lane.b32.xlu0 %v206, 112
      %v577 = vpop.permute.xlu0 %576
      %578 = vrot.lane.b32.xlu0 %v206, 48
      %v579 = vpop.permute.xlu0 %578
      %v588 = vperm.slane %v554, %v285
      %v589 = vperm.slane %v557, %v285
      %v590 = vperm.slane %v560, %v285
      %v591 = vperm.slane %v563, %v285
      %v592 = vperm.slane %v566, %v285
      %v593 = vperm.slane %v569, %v285
      %v594 = vperm.slane %v572, %v285
      %v595 = vperm.slane %v575, %v285
      %v596 = vsel %vm294, %v589, %v588
      %v597 = vsel %vm296, %v590, %v596
      %v598 = vsel %vm298, %v591, %v597
      %v599 = vsel %vm300, %v592, %v598
      %v600 = vsel %vm302, %v593, %v599
      %v601 = vsel %vm304, %v594, %v600
      %v602 = vsel %vm306, %v595, %v601
      %v604 = vsel %vm249, %v577, 0
      %v606 = vsel %vm249, %v579, 0
      %608 = vmatpush.xpose.msra.mxu0 0.0
      %609 = vmatpush.xpose.msra.mxu0 0.0
      %610 = vmatpush.xpose.msra.mxu0 0.0
      %611 = vmatpush.xpose.msra.mxu0 0.0
      %612 = vmatpush.xpose.msra.mxu0 0.0
      %613 = vmatpush.xpose.msra.mxu0 0.0
      %614 = vmatpush.xpose.msra.mxu0 0.0
      %615 = vmatpush.xpose.msra.mxu0 0.0
      %616 = vmatpush.xpose.msra.mxu0 0.0
      %617 = vmatpush.xpose.msra.mxu0 0.0
      %618 = vmatpush.xpose.msra.mxu0 0.0
      %619 = vmatpush.xpose.msra.mxu0 0.0
      %620 = vmatpush.xpose.msra.mxu0 0.0
      %621 = vmatpush.xpose.msra.mxu0 0.0
      %622 = vmatpush.xpose.msra.mxu0 0.0
      %623 = vmatpush.xpose.msra.mxu0 %v606
      %624 = vmatmul.f32.gmra.mxu0 %v604
      %v625 = vpop.f32.mrf.mxu0
      %v626 = vadd.f32 %v602, %v625
      %627 = vdwg.mxu0
      %v628 = vmul.f32 %v626, 0.25
      %v629 = vsel %vm334, %v628, -3.4028235e+38
      %v630 = vsel %vm336, %v629, -inf
      %631 = vmax.xlane.f32.xlu0 %v630
      %v632 = vpop.xlane.xlu0 %631
      %v633 = vsub.f32 %v629, %v632
      %v634 = vmul.f32 %v633, 1.442695
      %v635 = vpow.pop %v634
      %v636 = vsel %vm336, %v635, 0.0
      %637 = vadd.xlane.f32.xlu0 %v636
      %v638 = vpop.xlane.xlu0 %637
      %v639 = vrcp.pop %v638
      %v640 = vmul.f32 %v638, %v639
      %v641 = vsub.f32 1.0, %v640
      %v642 = vmul.f32 %v639, %v641
      %v643 = vadd.f32 %v639, %v642
      %vm644 = vweird.f32 %v638
      %vm645 = vweird.f32 %v639
      %vm646 = vmor %vm644, %vm645
      %v647 = vsel %vm646, %v639, %v643
      %v648 = vand.u32 2147483647, %v638
      %vm649 = vcmp.eq.f32.partialorder %v648, 8.507059e+37
      %v650 = vand.u32 %v638, 2147483648
      %v651 = vor.u32 1.1754944e-38, %v650
      %v652 = vsel %vm649, %v651, %v647
      %v653 = vmul.f32 %v635, %v652
      %v654 = vperm.slane %v653, 0
      %v655 = vlaneseq
      %v656 = vshrl.u32 %v655, 7
      %658 = vset.pattern.permute.xlu0 %v656
      %659 = vperm.xlu0 %658, %v654
      %v660 = vpop.permute.xlu0 %659
      %v661 = vperm.slane %v653, 1
      %v662 = vlaneseq
      %v663 = vshrl.u32 %v662, 7
      %665 = vset.pattern.permute.xlu0 %v663
      %666 = vperm.xlu0 %665, %v661
      %v667 = vpop.permute.xlu0 %666
      %v668 = vperm.slane %v653, 2
      %v669 = vlaneseq
      %v670 = vshrl.u32 %v669, 7
      %672 = vset.pattern.permute.xlu0 %v670
      %673 = vperm.xlu0 %672, %v668
      %v674 = vpop.permute.xlu0 %673
      %v675 = vperm.slane %v653, 3
      %v676 = vlaneseq
      %v677 = vshrl.u32 %v676, 7
      %679 = vset.pattern.permute.xlu0 %v677
      %680 = vperm.xlu0 %679, %v675
      %v681 = vpop.permute.xlu0 %680
      %v682 = vperm.slane %v653, 4
      %v683 = vlaneseq
      %v684 = vshrl.u32 %v683, 7
      %686 = vset.pattern.permute.xlu0 %v684
      %687 = vperm.xlu0 %686, %v682
      %v688 = vpop.permute.xlu0 %687
      %v689 = vperm.slane %v653, 5
      %v690 = vlaneseq
      %v691 = vshrl.u32 %v690, 7
      %693 = vset.pattern.permute.xlu0 %v691
      %694 = vperm.xlu0 %693, %v689
      %v695 = vpop.permute.xlu0 %694
      %v696 = vperm.slane %v653, 6
      %v697 = vlaneseq
      %v698 = vshrl.u32 %v697, 7
      %700 = vset.pattern.permute.xlu0 %v698
      %701 = vperm.xlu0 %700, %v696
      %v702 = vpop.permute.xlu0 %701
      %v703 = vperm.slane %v653, 7
      %v704 = vlaneseq
      %v705 = vshrl.u32 %v704, 7
      %707 = vset.pattern.permute.xlu0 %v705
      %708 = vperm.xlu0 %707, %v703
      %v709 = vpop.permute.xlu0 %708
      %v710 = vmul.f32 %v660, %v208
      %v711 = vmul.f32 %v667, %v209
      %v712 = vmul.f32 %v674, %v210
      %v713 = vmul.f32 %v681, %v211
      %v714 = vmul.f32 %v688, %v212
      %v715 = vmul.f32 %v695, %v213
      %v716 = vmul.f32 %v702, %v214
      %v717 = vmul.f32 %v709, %v215
      %vm718 = vcmask 261248
      %v719 = vsel %vm718, %v710, 0.0
      %v720 = vrot.slane %v719, 4
      %v721 = vadd.f32 %v719, %v720
      %v722 = vrot.slane %v721, 2
      %v723 = vadd.f32 %v721, %v722
      %v724 = vrot.slane %v723, 1
      %v725 = vadd.f32 %v723, %v724
      %v726 = vsel %vm718, %v711, 0.0
      %v727 = vrot.slane %v726, 4
      %v728 = vadd.f32 %v726, %v727
      %v729 = vrot.slane %v728, 2
      %v730 = vadd.f32 %v728, %v729
      %v731 = vrot.slane %v730, 1
      %v732 = vadd.f32 %v730, %v731
      %v733 = vsel %vm718, %v712, 0.0
      %v734 = vrot.slane %v733, 4
      %v735 = vadd.f32 %v733, %v734
      %v736 = vrot.slane %v735, 2
      %v737 = vadd.f32 %v735, %v736
      %v738 = vrot.slane %v737, 1
      %v739 = vadd.f32 %v737, %v738
      %v740 = vsel %vm718, %v713, 0.0
      %v741 = vrot.slane %v740, 4
      %v742 = vadd.f32 %v740, %v741
      %v743 = vrot.slane %v742, 2
      %v744 = vadd.f32 %v742, %v743
      %v745 = vrot.slane %v744, 1
      %v746 = vadd.f32 %v744, %v745
      %v747 = vsel %vm718, %v714, 0.0
      %v748 = vrot.slane %v747, 4
      %v749 = vadd.f32 %v747, %v748
      %v750 = vrot.slane %v749, 2
      %v751 = vadd.f32 %v749, %v750
      %v752 = vrot.slane %v751, 1
      %v753 = vadd.f32 %v751, %v752
      %v754 = vsel %vm718, %v715, 0.0
      %v755 = vrot.slane %v754, 4
      %v756 = vadd.f32 %v754, %v755
      %v757 = vrot.slane %v756, 2
      %v758 = vadd.f32 %v756, %v757
      %v759 = vrot.slane %v758, 1
      %v760 = vadd.f32 %v758, %v759
      %v761 = vsel %vm718, %v716, 0.0
      %v762 = vrot.slane %v761, 4
      %v763 = vadd.f32 %v761, %v762
      %v764 = vrot.slane %v763, 2
      %v765 = vadd.f32 %v763, %v764
      %v766 = vrot.slane %v765, 1
      %v767 = vadd.f32 %v765, %v766
      %v768 = vsel %vm718, %v717, 0.0
      %v769 = vrot.slane %v768, 4
      %v770 = vadd.f32 %v768, %v769
      %v771 = vrot.slane %v770, 2
      %v772 = vadd.f32 %v770, %v771
      %v773 = vrot.slane %v772, 1
      %v774 = vadd.f32 %v772, %v773
      %776 = vrot.lane.b32.xlu0 %v207, 112
      %v777 = vpop.permute.xlu0 %776
      %v787 = vsel %vm294, %v732, %v725
      %v788 = vsel %vm296, %v739, %v787
      %v789 = vsel %vm298, %v746, %v788
      %v790 = vsel %vm300, %v753, %v789
      %v791 = vsel %vm302, %v760, %v790
      %v792 = vsel %vm304, %v767, %v791
      %v793 = vsel %vm306, %v774, %v792
      %794 = vrot.lane.b32.xlu0 %v793, 112
      %v795 = vpop.permute.xlu0 %794
      %v798 = vsel %vm336, %v653, 0
      %800 = vmatpush.msra.mxu0 0.0
      %801 = vmatpush.msra.mxu0 0.0
      %802 = vmatpush.msra.mxu0 0.0
      %803 = vmatpush.msra.mxu0 0.0
      %804 = vmatpush.msra.mxu0 0.0
      %805 = vmatpush.msra.mxu0 0.0
      %806 = vmatpush.msra.mxu0 0.0
      %807 = vmatpush.msra.mxu0 0.0
      %808 = vmatpush.msra.mxu0 0.0
      %809 = vmatpush.msra.mxu0 0.0
      %810 = vmatpush.msra.mxu0 0.0
      %811 = vmatpush.msra.mxu0 0.0
      %812 = vmatpush.msra.mxu0 0.0
      %813 = vmatpush.msra.mxu0 0.0
      %814 = vmatpush.msra.mxu0 0.0
      %815 = vmatpush.msra.mxu0 %v777
      %816 = vmatmul.f32.gmra.mxu0 %v798
      %v817 = vpop.f32.mrf.mxu0
      %v818 = vadd.f32 %v795, %v817
      %819 = vdwg.mxu0
      %820 = vrot.lane.b32.xlu0 %v241, 96
      %v821 = vpop.permute.xlu0 %820
      %822 = vrot.lane.b32.xlu0 %v242, 96
      %v823 = vpop.permute.xlu0 %822
      %824 = vrot.lane.b32.xlu0 %v243, 96
      %v825 = vpop.permute.xlu0 %824
      %826 = vrot.lane.b32.xlu0 %v244, 96
      %v827 = vpop.permute.xlu0 %826
      %828 = vrot.lane.b32.xlu0 %v245, 96
      %v829 = vpop.permute.xlu0 %828
      %830 = vrot.lane.b32.xlu0 %v246, 96
      %v831 = vpop.permute.xlu0 %830
      %832 = vrot.lane.b32.xlu0 %v247, 96
      %v833 = vpop.permute.xlu0 %832
      %834 = vrot.lane.b32.xlu0 %v248, 96
      %v835 = vpop.permute.xlu0 %834
      %v844 = vsel %vm249, %v821, 0.0
      %845 = vadd.xlane.f32.xlu0 %v844
      %v846 = vpop.xlane.xlu0 %845
      %v847 = vsel %vm249, %v823, 0.0
      %848 = vadd.xlane.f32.xlu0 %v847
      %v849 = vpop.xlane.xlu0 %848
      %v850 = vsel %vm249, %v825, 0.0
      %851 = vadd.xlane.f32.xlu0 %v850
      %v852 = vpop.xlane.xlu0 %851
      %v853 = vsel %vm249, %v827, 0.0
      %854 = vadd.xlane.f32.xlu0 %v853
      %v855 = vpop.xlane.xlu0 %854
      %v856 = vsel %vm249, %v829, 0.0
      %857 = vadd.xlane.f32.xlu0 %v856
      %v858 = vpop.xlane.xlu0 %857
      %v859 = vsel %vm249, %v831, 0.0
      %860 = vadd.xlane.f32.xlu0 %v859
      %v861 = vpop.xlane.xlu0 %860
      %v862 = vsel %vm249, %v833, 0.0
      %863 = vadd.xlane.f32.xlu0 %v862
      %v864 = vpop.xlane.xlu0 %863
      %v865 = vsel %vm249, %v835, 0.0
      %866 = vadd.xlane.f32.xlu0 %v865
      %v867 = vpop.xlane.xlu0 %866
      %868 = vrot.lane.b32.xlu0 %v206, 96
      %v869 = vpop.permute.xlu0 %868
      %870 = vrot.lane.b32.xlu0 %v206, 32
      %v871 = vpop.permute.xlu0 %870
      %v880 = vperm.slane %v846, %v285
      %v881 = vperm.slane %v849, %v285
      %v882 = vperm.slane %v852, %v285
      %v883 = vperm.slane %v855, %v285
      %v884 = vperm.slane %v858, %v285
      %v885 = vperm.slane %v861, %v285
      %v886 = vperm.slane %v864, %v285
      %v887 = vperm.slane %v867, %v285
      %v888 = vsel %vm294, %v881, %v880
      %v889 = vsel %vm296, %v882, %v888
      %v890 = vsel %vm298, %v883, %v889
      %v891 = vsel %vm300, %v884, %v890
      %v892 = vsel %vm302, %v885, %v891
      %v893 = vsel %vm304, %v886, %v892
      %v894 = vsel %vm306, %v887, %v893
      %v896 = vsel %vm249, %v869, 0
      %v898 = vsel %vm249, %v871, 0
      %900 = vmatpush.xpose.msra.mxu0 0.0
      %901 = vmatpush.xpose.msra.mxu0 0.0
      %902 = vmatpush.xpose.msra.mxu0 0.0
      %903 = vmatpush.xpose.msra.mxu0 0.0
      %904 = vmatpush.xpose.msra.mxu0 0.0
      %905 = vmatpush.xpose.msra.mxu0 0.0
      %906 = vmatpush.xpose.msra.mxu0 0.0
      %907 = vmatpush.xpose.msra.mxu0 0.0
      %908 = vmatpush.xpose.msra.mxu0 0.0
      %909 = vmatpush.xpose.msra.mxu0 0.0
      %910 = vmatpush.xpose.msra.mxu0 0.0
      %911 = vmatpush.xpose.msra.mxu0 0.0
      %912 = vmatpush.xpose.msra.mxu0 0.0
      %913 = vmatpush.xpose.msra.mxu0 0.0
      %914 = vmatpush.xpose.msra.mxu0 0.0
      %915 = vmatpush.xpose.msra.mxu0 %v898
      %916 = vmatmul.f32.gmra.mxu0 %v896
      %v917 = vpop.f32.mrf.mxu0
      %v918 = vadd.f32 %v894, %v917
      %919 = vdwg.mxu0
      %v920 = vmul.f32 %v918, 0.25
      %v921 = vsel %vm334, %v920, -3.4028235e+38
      %v922 = vsel %vm336, %v921, -inf
      %923 = vmax.xlane.f32.xlu0 %v922
      %v924 = vpop.xlane.xlu0 %923
      %v925 = vsub.f32 %v921, %v924
      %v926 = vmul.f32 %v925, 1.442695
      %v927 = vpow.pop %v926
      %v928 = vsel %vm336, %v927, 0.0
      %929 = vadd.xlane.f32.xlu0 %v928
      %v930 = vpop.xlane.xlu0 %929
      %v931 = vrcp.pop %v930
      %v932 = vmul.f32 %v930, %v931
      %v933 = vsub.f32 1.0, %v932
      %v934 = vmul.f32 %v931, %v933
      %v935 = vadd.f32 %v931, %v934
      %vm936 = vweird.f32 %v930
      %vm937 = vweird.f32 %v931
      %vm938 = vmor %vm936, %vm937
      %v939 = vsel %vm938, %v931, %v935
      %v940 = vand.u32 2147483647, %v930
      %vm941 = vcmp.eq.f32.partialorder %v940, 8.507059e+37
      %v942 = vand.u32 %v930, 2147483648
      %v943 = vor.u32 1.1754944e-38, %v942
      %v944 = vsel %vm941, %v943, %v939
      %v945 = vmul.f32 %v927, %v944
      %v946 = vperm.slane %v945, 0
      %v947 = vlaneseq
      %v948 = vshrl.u32 %v947, 7
      %950 = vset.pattern.permute.xlu0 %v948
      %951 = vperm.xlu0 %950, %v946
      %v952 = vpop.permute.xlu0 %951
      %v953 = vperm.slane %v945, 1
      %v954 = vlaneseq
      %v955 = vshrl.u32 %v954, 7
      %957 = vset.pattern.permute.xlu0 %v955
      %958 = vperm.xlu0 %957, %v953
      %v959 = vpop.permute.xlu0 %958
      %v960 = vperm.slane %v945, 2
      %v961 = vlaneseq
      %v962 = vshrl.u32 %v961, 7
      %964 = vset.pattern.permute.xlu0 %v962
      %965 = vperm.xlu0 %964, %v960
      %v966 = vpop.permute.xlu0 %965
      %v967 = vperm.slane %v945, 3
      %v968 = vlaneseq
      %v969 = vshrl.u32 %v968, 7
      %971 = vset.pattern.permute.xlu0 %v969
      %972 = vperm.xlu0 %971, %v967
      %v973 = vpop.permute.xlu0 %972
      %v974 = vperm.slane %v945, 4
      %v975 = vlaneseq
      %v976 = vshrl.u32 %v975, 7
      %978 = vset.pattern.permute.xlu0 %v976
      %979 = vperm.xlu0 %978, %v974
      %v980 = vpop.permute.xlu0 %979
      %v981 = vperm.slane %v945, 5
      %v982 = vlaneseq
      %v983 = vshrl.u32 %v982, 7
      %985 = vset.pattern.permute.xlu0 %v983
      %986 = vperm.xlu0 %985, %v981
      %v987 = vpop.permute.xlu0 %986
      %v988 = vperm.slane %v945, 6
      %v989 = vlaneseq
      %v990 = vshrl.u32 %v989, 7
      %992 = vset.pattern.permute.xlu0 %v990
      %993 = vperm.xlu0 %992, %v988
      %v994 = vpop.permute.xlu0 %993
      %v995 = vperm.slane %v945, 7
      %v996 = vlaneseq
      %v997 = vshrl.u32 %v996, 7
      %999 = vset.pattern.permute.xlu0 %v997
      %1000 = vperm.xlu0 %999, %v995
      %v1001 = vpop.permute.xlu0 %1000
      %v1002 = vmul.f32 %v952, %v208
      %v1003 = vmul.f32 %v959, %v209
      %v1004 = vmul.f32 %v966, %v210
      %v1005 = vmul.f32 %v973, %v211
      %v1006 = vmul.f32 %v980, %v212
      %v1007 = vmul.f32 %v987, %v213
      %v1008 = vmul.f32 %v994, %v214
      %v1009 = vmul.f32 %v1001, %v215
      %vm1010 = vcmask 392448
      %v1011 = vsel %vm1010, %v1002, 0.0
      %v1012 = vrot.slane %v1011, 4
      %v1013 = vadd.f32 %v1011, %v1012
      %v1014 = vrot.slane %v1013, 2
      %v1015 = vadd.f32 %v1013, %v1014
      %v1016 = vrot.slane %v1015, 1
      %v1017 = vadd.f32 %v1015, %v1016
      %v1018 = vsel %vm1010, %v1003, 0.0
      %v1019 = vrot.slane %v1018, 4
      %v1020 = vadd.f32 %v1018, %v1019
      %v1021 = vrot.slane %v1020, 2
      %v1022 = vadd.f32 %v1020, %v1021
      %v1023 = vrot.slane %v1022, 1
      %v1024 = vadd.f32 %v1022, %v1023
      %v1025 = vsel %vm1010, %v1004, 0.0
      %v1026 = vrot.slane %v1025, 4
      %v1027 = vadd.f32 %v1025, %v1026
      %v1028 = vrot.slane %v1027, 2
      %v1029 = vadd.f32 %v1027, %v1028
      %v1030 = vrot.slane %v1029, 1
      %v1031 = vadd.f32 %v1029, %v1030
      %v1032 = vsel %vm1010, %v1005, 0.0
      %v1033 = vrot.slane %v1032, 4
      %v1034 = vadd.f32 %v1032, %v1033
      %v1035 = vrot.slane %v1034, 2
      %v1036 = vadd.f32 %v1034, %v1035
      %v1037 = vrot.slane %v1036, 1
      %v1038 = vadd.f32 %v1036, %v1037
      %v1039 = vsel %vm1010, %v1006, 0.0
      %v1040 = vrot.slane %v1039, 4
      %v1041 = vadd.f32 %v1039, %v1040
      %v1042 = vrot.slane %v1041, 2
      %v1043 = vadd.f32 %v1041, %v1042
      %v1044 = vrot.slane %v1043, 1
      %v1045 = vadd.f32 %v1043, %v1044
      %v1046 = vsel %vm1010, %v1007, 0.0
      %v1047 = vrot.slane %v1046, 4
      %v1048 = vadd.f32 %v1046, %v1047
      %v1049 = vrot.slane %v1048, 2
      %v1050 = vadd.f32 %v1048, %v1049
      %v1051 = vrot.slane %v1050, 1
      %v1052 = vadd.f32 %v1050, %v1051
      %v1053 = vsel %vm1010, %v1008, 0.0
      %v1054 = vrot.slane %v1053, 4
      %v1055 = vadd.f32 %v1053, %v1054
      %v1056 = vrot.slane %v1055, 2
      %v1057 = vadd.f32 %v1055, %v1056
      %v1058 = vrot.slane %v1057, 1
      %v1059 = vadd.f32 %v1057, %v1058
      %v1060 = vsel %vm1010, %v1009, 0.0
      %v1061 = vrot.slane %v1060, 4
      %v1062 = vadd.f32 %v1060, %v1061
      %v1063 = vrot.slane %v1062, 2
      %v1064 = vadd.f32 %v1062, %v1063
      %v1065 = vrot.slane %v1064, 1
      %v1066 = vadd.f32 %v1064, %v1065
      %1067 = vrot.lane.b32.xlu0 %v207, 96
      %v1068 = vpop.permute.xlu0 %1067
      %v1078 = vsel %vm294, %v1024, %v1017
      %v1079 = vsel %vm296, %v1031, %v1078
      %v1080 = vsel %vm298, %v1038, %v1079
      %v1081 = vsel %vm300, %v1045, %v1080
      %v1082 = vsel %vm302, %v1052, %v1081
      %v1083 = vsel %vm304, %v1059, %v1082
      %v1084 = vsel %vm306, %v1066, %v1083
      %1085 = vrot.lane.b32.xlu0 %v1084, 96
      %v1086 = vpop.permute.xlu0 %1085
      %v1089 = vsel %vm336, %v945, 0
      %1091 = vmatpush.msra.mxu0 0.0
      %1092 = vmatpush.msra.mxu0 0.0
      %1093 = vmatpush.msra.mxu0 0.0
      %1094 = vmatpush.msra.mxu0 0.0
      %1095 = vmatpush.msra.mxu0 0.0
      %1096 = vmatpush.msra.mxu0 0.0
      %1097 = vmatpush.msra.mxu0 0.0
      %1098 = vmatpush.msra.mxu0 0.0
      %1099 = vmatpush.msra.mxu0 0.0
      %1100 = vmatpush.msra.mxu0 0.0
      %1101 = vmatpush.msra.mxu0 0.0
      %1102 = vmatpush.msra.mxu0 0.0
      %1103 = vmatpush.msra.mxu0 0.0
      %1104 = vmatpush.msra.mxu0 0.0
      %1105 = vmatpush.msra.mxu0 0.0
      %1106 = vmatpush.msra.mxu0 %v1068
      %1107 = vmatmul.f32.gmra.mxu0 %v1089
      %v1108 = vpop.f32.mrf.mxu0
      %v1109 = vadd.f32 %v1086, %v1108
      %1110 = vdwg.mxu0
      %1111 = vrot.lane.b32.xlu0 %v241, 80
      %v1112 = vpop.permute.xlu0 %1111
      %1113 = vrot.lane.b32.xlu0 %v242, 80
      %v1114 = vpop.permute.xlu0 %1113
      %1115 = vrot.lane.b32.xlu0 %v243, 80
      %v1116 = vpop.permute.xlu0 %1115
      %1117 = vrot.lane.b32.xlu0 %v244, 80
      %v1118 = vpop.permute.xlu0 %1117
      %1119 = vrot.lane.b32.xlu0 %v245, 80
      %v1120 = vpop.permute.xlu0 %1119
      %1121 = vrot.lane.b32.xlu0 %v246, 80
      %v1122 = vpop.permute.xlu0 %1121
      %1123 = vrot.lane.b32.xlu0 %v247, 80
      %v1124 = vpop.permute.xlu0 %1123
      %1125 = vrot.lane.b32.xlu0 %v248, 80
      %v1126 = vpop.permute.xlu0 %1125
      %v1135 = vsel %vm249, %v1112, 0.0
      %1136 = vadd.xlane.f32.xlu0 %v1135
      %v1137 = vpop.xlane.xlu0 %1136
      %v1138 = vsel %vm249, %v1114, 0.0
      %1139 = vadd.xlane.f32.xlu0 %v1138
      %v1140 = vpop.xlane.xlu0 %1139
      %v1141 = vsel %vm249, %v1116, 0.0
      %1142 = vadd.xlane.f32.xlu0 %v1141
      %v1143 = vpop.xlane.xlu0 %1142
      %v1144 = vsel %vm249, %v1118, 0.0
      %1145 = vadd.xlane.f32.xlu0 %v1144
      %v1146 = vpop.xlane.xlu0 %1145
      %v1147 = vsel %vm249, %v1120, 0.0
      %1148 = vadd.xlane.f32.xlu0 %v1147
      %v1149 = vpop.xlane.xlu0 %1148
      %v1150 = vsel %vm249, %v1122, 0.0
      %1151 = vadd.xlane.f32.xlu0 %v1150
      %v1152 = vpop.xlane.xlu0 %1151
      %v1153 = vsel %vm249, %v1124, 0.0
      %1154 = vadd.xlane.f32.xlu0 %v1153
      %v1155 = vpop.xlane.xlu0 %1154
      %v1156 = vsel %vm249, %v1126, 0.0
      %1157 = vadd.xlane.f32.xlu0 %v1156
      %v1158 = vpop.xlane.xlu0 %1157
      %1159 = vrot.lane.b32.xlu0 %v206, 80
      %v1160 = vpop.permute.xlu0 %1159
      %1161 = vrot.lane.b32.xlu0 %v206, 16
      %v1162 = vpop.permute.xlu0 %1161
      %v1171 = vperm.slane %v1137, %v285
      %v1172 = vperm.slane %v1140, %v285
      %v1173 = vperm.slane %v1143, %v285
      %v1174 = vperm.slane %v1146, %v285
      %v1175 = vperm.slane %v1149, %v285
      %v1176 = vperm.slane %v1152, %v285
      %v1177 = vperm.slane %v1155, %v285
      %v1178 = vperm.slane %v1158, %v285
      %v1179 = vsel %vm294, %v1172, %v1171
      %v1180 = vsel %vm296, %v1173, %v1179
      %v1181 = vsel %vm298, %v1174, %v1180
      %v1182 = vsel %vm300, %v1175, %v1181
      %v1183 = vsel %vm302, %v1176, %v1182
      %v1184 = vsel %vm304, %v1177, %v1183
      %v1185 = vsel %vm306, %v1178, %v1184
      %v1187 = vsel %vm249, %v1160, 0
      %v1189 = vsel %vm249, %v1162, 0
      %1191 = vmatpush.xpose.msra.mxu0 0.0
      %1192 = vmatpush.xpose.msra.mxu0 0.0
      %1193 = vmatpush.xpose.msra.mxu0 0.0
      %1194 = vmatpush.xpose.msra.mxu0 0.0
      %1195 = vmatpush.xpose.msra.mxu0 0.0
      %1196 = vmatpush.xpose.msra.mxu0 0.0
      %1197 = vmatpush.xpose.msra.mxu0 0.0
      %1198 = vmatpush.xpose.msra.mxu0 0.0
      %1199 = vmatpush.xpose.msra.mxu0 0.0
      %1200 = vmatpush.xpose.msra.mxu0 0.0
      %1201 = vmatpush.xpose.msra.mxu0 0.0
      %1202 = vmatpush.xpose.msra.mxu0 0.0
      %1203 = vmatpush.xpose.msra.mxu0 0.0
      %1204 = vmatpush.xpose.msra.mxu0 0.0
      %1205 = vmatpush.xpose.msra.mxu0 0.0
      %1206 = vmatpush.xpose.msra.mxu0 %v1189
      %1207 = vmatmul.f32.gmra.mxu0 %v1187
      %v1208 = vpop.f32.mrf.mxu0
      %v1209 = vadd.f32 %v1185, %v1208
      %1210 = vdwg.mxu0
      %v1211 = vmul.f32 %v1209, 0.25
      %v1212 = vsel %vm334, %v1211, -3.4028235e+38
      %v1213 = vsel %vm336, %v1212, -inf
      %1214 = vmax.xlane.f32.xlu0 %v1213
      %v1215 = vpop.xlane.xlu0 %1214
      %v1216 = vsub.f32 %v1212, %v1215
      %v1217 = vmul.f32 %v1216, 1.442695
      %v1218 = vpow.pop %v1217
      %v1219 = vsel %vm336, %v1218, 0.0
      %1220 = vadd.xlane.f32.xlu0 %v1219
      %v1221 = vpop.xlane.xlu0 %1220
      %v1222 = vrcp.pop %v1221
      %v1223 = vmul.f32 %v1221, %v1222
      %v1224 = vsub.f32 1.0, %v1223
      %v1225 = vmul.f32 %v1222, %v1224
      %v1226 = vadd.f32 %v1222, %v1225
      %vm1227 = vweird.f32 %v1221
      %vm1228 = vweird.f32 %v1222
      %vm1229 = vmor %vm1227, %vm1228
      %v1230 = vsel %vm1229, %v1222, %v1226
      %v1231 = vand.u32 2147483647, %v1221
      %vm1232 = vcmp.eq.f32.partialorder %v1231, 8.507059e+37
      %v1233 = vand.u32 %v1221, 2147483648
      %v1234 = vor.u32 1.1754944e-38, %v1233
      %v1235 = vsel %vm1232, %v1234, %v1230
      %v1236 = vmul.f32 %v1218, %v1235
      %v1237 = vperm.slane %v1236, 0
      %v1238 = vlaneseq
      %v1239 = vshrl.u32 %v1238, 7
      %1241 = vset.pattern.permute.xlu0 %v1239
      %1242 = vperm.xlu0 %1241, %v1237
      %v1243 = vpop.permute.xlu0 %1242
      %v1244 = vperm.slane %v1236, 1
      %v1245 = vlaneseq
      %v1246 = vshrl.u32 %v1245, 7
      %1248 = vset.pattern.permute.xlu0 %v1246
      %1249 = vperm.xlu0 %1248, %v1244
      %v1250 = vpop.permute.xlu0 %1249
      %v1251 = vperm.slane %v1236, 2
      %v1252 = vlaneseq
      %v1253 = vshrl.u32 %v1252, 7
      %1255 = vset.pattern.permute.xlu0 %v1253
      %1256 = vperm.xlu0 %1255, %v1251
      %v1257 = vpop.permute.xlu0 %1256
      %v1258 = vperm.slane %v1236, 3
      %v1259 = vlaneseq
      %v1260 = vshrl.u32 %v1259, 7
      %1262 = vset.pattern.permute.xlu0 %v1260
      %1263 = vperm.xlu0 %1262, %v1258
      %v1264 = vpop.permute.xlu0 %1263
      %v1265 = vperm.slane %v1236, 4
      %v1266 = vlaneseq
      %v1267 = vshrl.u32 %v1266, 7
      %1269 = vset.pattern.permute.xlu0 %v1267
      %1270 = vperm.xlu0 %1269, %v1265
      %v1271 = vpop.permute.xlu0 %1270
      %v1272 = vperm.slane %v1236, 5
      %v1273 = vlaneseq
      %v1274 = vshrl.u32 %v1273, 7
      %1276 = vset.pattern.permute.xlu0 %v1274
      %1277 = vperm.xlu0 %1276, %v1272
      %v1278 = vpop.permute.xlu0 %1277
      %v1279 = vperm.slane %v1236, 6
      %v1280 = vlaneseq
      %v1281 = vshrl.u32 %v1280, 7
      %1283 = vset.pattern.permute.xlu0 %v1281
      %1284 = vperm.xlu0 %1283, %v1279
      %v1285 = vpop.permute.xlu0 %1284
      %v1286 = vperm.slane %v1236, 7
      %v1287 = vlaneseq
      %v1288 = vshrl.u32 %v1287, 7
      %1290 = vset.pattern.permute.xlu0 %v1288
      %1291 = vperm.xlu0 %1290, %v1286
      %v1292 = vpop.permute.xlu0 %1291
      %v1293 = vmul.f32 %v1243, %v208
      %v1294 = vmul.f32 %v1250, %v209
      %v1295 = vmul.f32 %v1257, %v210
      %v1296 = vmul.f32 %v1264, %v211
      %v1297 = vmul.f32 %v1271, %v212
      %v1298 = vmul.f32 %v1278, %v213
      %v1299 = vmul.f32 %v1285, %v214
      %v1300 = vmul.f32 %v1292, %v215
      %vm1301 = vcmask 523648
      %v1302 = vsel %vm1301, %v1293, 0.0
      %v1303 = vrot.slane %v1302, 4
      %v1304 = vadd.f32 %v1302, %v1303
      %v1305 = vrot.slane %v1304, 2
      %v1306 = vadd.f32 %v1304, %v1305
      %v1307 = vrot.slane %v1306, 1
      %v1308 = vadd.f32 %v1306, %v1307
      %v1309 = vsel %vm1301, %v1294, 0.0
      %v1310 = vrot.slane %v1309, 4
      %v1311 = vadd.f32 %v1309, %v1310
      %v1312 = vrot.slane %v1311, 2
      %v1313 = vadd.f32 %v1311, %v1312
      %v1314 = vrot.slane %v1313, 1
      %v1315 = vadd.f32 %v1313, %v1314
      %v1316 = vsel %vm1301, %v1295, 0.0
      %v1317 = vrot.slane %v1316, 4
      %v1318 = vadd.f32 %v1316, %v1317
      %v1319 = vrot.slane %v1318, 2
      %v1320 = vadd.f32 %v1318, %v1319
      %v1321 = vrot.slane %v1320, 1
      %v1322 = vadd.f32 %v1320, %v1321
      %v1323 = vsel %vm1301, %v1296, 0.0
      %v1324 = vrot.slane %v1323, 4
      %v1325 = vadd.f32 %v1323, %v1324
      %v1326 = vrot.slane %v1325, 2
      %v1327 = vadd.f32 %v1325, %v1326
      %v1328 = vrot.slane %v1327, 1
      %v1329 = vadd.f32 %v1327, %v1328
      %v1330 = vsel %vm1301, %v1297, 0.0
      %v1331 = vrot.slane %v1330, 4
      %v1332 = vadd.f32 %v1330, %v1331
      %v1333 = vrot.slane %v1332, 2
      %v1334 = vadd.f32 %v1332, %v1333
      %v1335 = vrot.slane %v1334, 1
      %v1336 = vadd.f32 %v1334, %v1335
      %v1337 = vsel %vm1301, %v1298, 0.0
      %v1338 = vrot.slane %v1337, 4
      %v1339 = vadd.f32 %v1337, %v1338
      %v1340 = vrot.slane %v1339, 2
      %v1341 = vadd.f32 %v1339, %v1340
      %v1342 = vrot.slane %v1341, 1
      %v1343 = vadd.f32 %v1341, %v1342
      %v1344 = vsel %vm1301, %v1299, 0.0
      %v1345 = vrot.slane %v1344, 4
      %v1346 = vadd.f32 %v1344, %v1345
      %v1347 = vrot.slane %v1346, 2
      %v1348 = vadd.f32 %v1346, %v1347
      %v1349 = vrot.slane %v1348, 1
      %v1350 = vadd.f32 %v1348, %v1349
      %v1351 = vsel %vm1301, %v1300, 0.0
      %v1352 = vrot.slane %v1351, 4
      %v1353 = vadd.f32 %v1351, %v1352
      %v1354 = vrot.slane %v1353, 2
      %v1355 = vadd.f32 %v1353, %v1354
      %v1356 = vrot.slane %v1355, 1
      %v1357 = vadd.f32 %v1355, %v1356
      %1358 = vrot.lane.b32.xlu0 %v207, 80
      %v1359 = vpop.permute.xlu0 %1358
      %v1369 = vsel %vm294, %v1315, %v1308
      %v1370 = vsel %vm296, %v1322, %v1369
      %v1371 = vsel %vm298, %v1329, %v1370
      %v1372 = vsel %vm300, %v1336, %v1371
      %v1373 = vsel %vm302, %v1343, %v1372
      %v1374 = vsel %vm304, %v1350, %v1373
      %v1375 = vsel %vm306, %v1357, %v1374
      %1376 = vrot.lane.b32.xlu0 %v1375, 80
      %v1377 = vpop.permute.xlu0 %1376
      %v1380 = vsel %vm336, %v1236, 0
      %1382 = vmatpush.msra.mxu0 0.0
      %1383 = vmatpush.msra.mxu0 0.0
      %1384 = vmatpush.msra.mxu0 0.0
      %1385 = vmatpush.msra.mxu0 0.0
      %1386 = vmatpush.msra.mxu0 0.0
      %1387 = vmatpush.msra.mxu0 0.0
      %1388 = vmatpush.msra.mxu0 0.0
      %1389 = vmatpush.msra.mxu0 0.0
      %1390 = vmatpush.msra.mxu0 0.0
      %1391 = vmatpush.msra.mxu0 0.0
      %1392 = vmatpush.msra.mxu0 0.0
      %1393 = vmatpush.msra.mxu0 0.0
      %1394 = vmatpush.msra.mxu0 0.0
      %1395 = vmatpush.msra.mxu0 0.0
      %1396 = vmatpush.msra.mxu0 0.0
      %1397 = vmatpush.msra.mxu0 %v1359
      %1398 = vmatmul.f32.gmra.mxu0 %v1380
      %v1399 = vpop.f32.mrf.mxu0
      %v1400 = vadd.f32 %v1377, %v1399
      %1401 = vdwg.mxu0
      %1403 = vrot.lane.b32.xlu0 %v818, 16
      %v1404 = vpop.permute.xlu0 %1403
      %1407 = vrot.lane.b32.xlu0 %v1109, 32
      %v1408 = vpop.permute.xlu0 %1407
      %1411 = vrot.lane.b32.xlu0 %v1400, 48
      %v1412 = vpop.permute.xlu0 %1411
      %v1414 = vsel %vm249, %v518, %v1404
      %vm1415 = vcmask 261120
      %v1416 = vsel %vm1415, %v1414, %v1408
      %vm1417 = vcmask 392192
      %v1418 = vsel %vm1417, %v1416, %v1412
      %vm1419 = vcmask 523264
      %1420 = vst.msk [vmem:[%s205] sm:$0xff] %vm1419, %v1418
      %p1421 = scmp.lt.s32.totalorder %s14, 1
      %s1422 = scalar_select %p1421, %s14, 1
      %s1423 = smul.addr %s1422, 8
      %s1424 = scalar_lea.vmem %s3, %s1423
      // Predicated region
      $region33: #{graph_transformer_forward.16} parent=31 // pred_check
        %p1425 = pneg %p110
      $region34: #{graph_transformer_forward.16} parent=31 // pred_check_branch
        %1427 = sbr.rel (%p1425) target = $region36
      $region35: #{graph_transformer_forward.16} parent=31 // pred_region
        _
      $region36: #{graph_transformer_forward.16} parent=31 // pred_fallthru
        _
    $region32: #{graph_transformer_forward.16} parent=5 // pred_fallthru
      _
    %p1428 = scmp.le.s32.totalorder 2, %s9
    // Predicated region
    $region37: #{graph_transformer_forward.16} parent=5 // pred_check
      %p1429 = pneg %p1428
    $region38: #{graph_transformer_forward.16} parent=5 // pred_check_branch
      %1431 = sbr.rel (%p1429) target = $region40
    $region39: #{graph_transformer_forward.16} parent=5 // pred_region
      %s1432 = ssub.s32 %s9, 2
      // Predicated region
      $region41: #{graph_transformer_forward.16} parent=39 // pred_check
        %p1433 = pneg %p116
      $region42: #{graph_transformer_forward.16} parent=39 // pred_check_branch
        %1435 = sbr.rel (%p1433) target = $region44
      $region43: #{graph_transformer_forward.16} parent=39 // pred_region
        %p1436 = scmp.lt.s32.totalorder %s15, 1
        %s1437 = scalar_select %p1436, %s15, 1
        %s1438 = smul.addr %s1437, 8
        %s1439 = scalar_lea.vmem %s3, %s1438
      $region44: #{graph_transformer_forward.16} parent=39 // pred_fallthru
        _
    $region40: #{graph_transformer_forward.16} parent=5 // pred_fallthru
      _
  $region6: #{graph_transformer_forward.16} parent=0 // loop_footer
    %s13 = sadd.s32 1, %s9
  $region7: #{graph_transformer_forward.16} parent=0 // loop_footer_branch
    %8 = sbr.rel target = $region3
  $region8: #{graph_transformer_forward.16} parent=0 // loop_exit
    _

// kernel: graph_transformer_forward.19
$region0: #{graph_transformer_forward.19}
  #allocation0 [shape = 'u32[]', space=smem, size = 0x4, offset = 0x4, fixed_abs, tag = 'smem constant byte address 0x4 - core index']
  #allocation1 [shape = 'u32[72,128]{1,0:T(1,128)}', space=vmem, size = 0x9000, scoped, tag = 'internal scratch']
  %s0 = inlined_call_operand.vmem [shape: f32[16,32], index: 0, kind: input, shape index: {}]
  %s1 = inlined_call_operand.vmem [shape: f32[1,32], index: 1, kind: input, shape index: {}]
  %s2 = inlined_call_operand.vmem [shape: f32[1,32], index: 2, kind: input, shape index: {}]
  %s3 = inlined_call_operand.vmem [shape: f32[32,128], index: 3, kind: input, shape index: {}]
  %s4 = inlined_call_operand.vmem [shape: f32[1,128], index: 4, kind: input, shape index: {}]
  %s5 = inlined_call_operand.vmem [shape: f32[128,32], index: 5, kind: input, shape index: {}]
  %s6 = inlined_call_operand.vmem [shape: f32[1,32], index: 6, kind: input, shape index: {}]
  %s7 = inlined_call_operand.vmem [shape: f32[16,32], index: 7, kind: output, shape index: {}]
  %s8 = sld [smem:[#allocation0]]
  $region38: #{graph_transformer_forward.19} parent=0
    _
  %s10 = ssub.s32 1, %s8
  %s11 = scalar_select 0, %s10, %s8
  // Predicated region
  $region2: #{graph_transformer_forward.19} parent=0 // pred_check
    _
  $region3: #{graph_transformer_forward.19} parent=0 // pred_check_branch
    %13 = sbr.rel (0) target = $region5
  $region4: #{graph_transformer_forward.19} parent=0 // pred_region
    _
  $region5: #{graph_transformer_forward.19} parent=0 // pred_fallthru
    _
  // Predicated region
  $region6: #{graph_transformer_forward.19} parent=0 // pred_check
    _
  $region7: #{graph_transformer_forward.19} parent=0 // pred_check_branch
    %15 = sbr.rel (0) target = $region9
  $region8: #{graph_transformer_forward.19} parent=0 // pred_region
    _
  $region9: #{graph_transformer_forward.19} parent=0 // pred_fallthru
    _
  // Predicated region
  $region10: #{graph_transformer_forward.19} parent=0 // pred_check
    _
  $region11: #{graph_transformer_forward.19} parent=0 // pred_check_branch
    %17 = sbr.rel (0) target = $region13
  $region12: #{graph_transformer_forward.19} parent=0 // pred_region
    _
  $region13: #{graph_transformer_forward.19} parent=0 // pred_fallthru
    _
  // Predicated region
  $region14: #{graph_transformer_forward.19} parent=0 // pred_check
    _
  $region15: #{graph_transformer_forward.19} parent=0 // pred_check_branch
    %19 = sbr.rel (0) target = $region17
  $region16: #{graph_transformer_forward.19} parent=0 // pred_region
    _
  $region17: #{graph_transformer_forward.19} parent=0 // pred_fallthru
    _
  // Predicated region
  $region18: #{graph_transformer_forward.19} parent=0 // pred_check
    _
  $region19: #{graph_transformer_forward.19} parent=0 // pred_check_branch
    %21 = sbr.rel (0) target = $region21
  $region20: #{graph_transformer_forward.19} parent=0 // pred_region
    _
  $region21: #{graph_transformer_forward.19} parent=0 // pred_fallthru
    _
  // Predicated region
  $region22: #{graph_transformer_forward.19} parent=0 // pred_check
    _
  $region23: #{graph_transformer_forward.19} parent=0 // pred_check_branch
    %23 = sbr.rel (0) target = $region25
  $region24: #{graph_transformer_forward.19} parent=0 // pred_region
    _
  $region25: #{graph_transformer_forward.19} parent=0 // pred_fallthru
    _
  // Predicated region
  $region26: #{graph_transformer_forward.19} parent=0 // pred_check
    _
  $region27: #{graph_transformer_forward.19} parent=0 // pred_check_branch
    %25 = sbr.rel (0) target = $region29
  $region28: #{graph_transformer_forward.19} parent=0 // pred_region
    _
  $region29: #{graph_transformer_forward.19} parent=0 // pred_fallthru
    _
  %v26 = vld [vmem:[%s0] sm:$0xff]
  %v27 = vld [vmem:[%s0 + $0x8] sm:$0xff]
  %v28 = vld [vmem:[%s1] sm:$0x1]
  %v29 = vld [vmem:[%s2] sm:$0x1]
  %vm30 = vcmask 261120
  %v31 = vsel %vm30, %v26, 0.0
  %32 = vadd.xlane.f32.xlu0 %v31
  %v33 = vpop.xlane.xlu0 %32
  %v34 = vsel %vm30, %v27, 0.0
  %35 = vadd.xlane.f32.xlu0 %v34
  %v36 = vpop.xlane.xlu0 %35
  %v37 = vrcp.pop 32.0
  %v38 = vmul.f32 32.0, %v37
  %v39 = vsub.f32 1.0, %v38
  %v40 = vmul.f32 %v37, %v39
  %v41 = vadd.f32 %v37, %v40
  %vm42 = vweird.f32 %v37
  %v43 = vsel %vm42, %v37, %v41
  %v44 = vmul.f32 %v33, %v43
  %v45 = vmul.f32 %v36, %v43
  %v46 = vsub.f32 %v26, %v44
  %v47 = vsub.f32 %v27, %v45
  %v48 = vmul.f32 %v46, %v46
  %v49 = vmul.f32 %v47, %v47
  %v50 = vsel %vm30, %v48, 0.0
  %51 = vadd.xlane.f32.xlu0 %v50
  %v52 = vpop.xlane.xlu0 %51
  %v53 = vsel %vm30, %v49, 0.0
  %54 = vadd.xlane.f32.xlu0 %v53
  %v55 = vpop.xlane.xlu0 %54
  %v56 = vmul.f32 %v52, %v43
  %v57 = vmul.f32 %v55, %v43
  %v58 = vadd.f32 %v56, 1e-05
  %v59 = vadd.f32 %v57, 1e-05
  %v60 = vrsqrt.pop %v58
  %v61 = vmul.f32 %v60, %v58
  %v62 = vmul.f32 %v61, %v60
  %v63 = vmul.f32 0.5, %v62
  %v64 = vsub.f32 1.5, %v63
  %v65 = vmul.f32 %v60, %v64
  %vm66 = vweird.f32 %v58
  %vm67 = vweird.f32 %v60
  %vm68 = vmor %vm66, %vm67
  %v69 = vsel %vm68, %v60, %v65
  %v70 = vrsqrt.pop %v59
  %v71 = vmul.f32 %v70, %v59
  %v72 = vmul.f32 %v71, %v70
  %v73 = vmul.f32 0.5, %v72
  %v74 = vsub.f32 1.5, %v73
  %v75 = vmul.f32 %v70, %v74
  %vm76 = vweird.f32 %v59
  %vm77 = vweird.f32 %v70
  %vm78 = vmor %vm76, %vm77
  %v79 = vsel %vm78, %v70, %v75
  %v80 = vmul.f32 %v46, %v69
  %v81 = vmul.f32 %v47, %v79
  %v83 = vperm.slane %v28, 0
  %v85 = vmul.f32 %v80, %v83
  %v86 = vmul.f32 %v81, %v83
  %v88 = vperm.slane %v29, 0
  %v90 = vadd.f32 %v85, %v88
  %v91 = vadd.f32 %v86, %v88
  %v92 = vld [vmem:[%s3] sm:$0xff]
  %v93 = vld [vmem:[%s3 + $0x8] sm:$0xff]
  %v94 = vld [vmem:[%s3 + $0x10] sm:$0xff]
  %v95 = vld [vmem:[%s3 + $0x18] sm:$0xff]
  %v96 = vld [vmem:[%s4] sm:$0x1]
  %v98 = vperm.slane %v96, 0
  %v101 = vsel %vm30, %v90, 0
  %v104 = vsel %vm30, %v91, 0
  %106 = vmatpush.msra.mxu0 0.0
  %107 = vmatpush.msra.mxu0 0.0
  %108 = vmatpush.msra.mxu0 0.0
  %109 = vmatpush.msra.mxu0 0.0
  %110 = vmatpush.msra.mxu0 0.0
  %111 = vmatpush.msra.mxu0 0.0
  %112 = vmatpush.msra.mxu0 0.0
  %113 = vmatpush.msra.mxu0 0.0
  %114 = vmatpush.msra.mxu0 0.0
  %115 = vmatpush.msra.mxu0 0.0
  %116 = vmatpush.msra.mxu0 0.0
  %117 = vmatpush.msra.mxu0 0.0
  %118 = vmatpush.msra.mxu0 %v95
  %119 = vmatpush.msra.mxu0 %v94
  %120 = vmatpush.msra.mxu0 %v93
  %121 = vmatpush.msra.mxu0 %v92
  %122 = vmatmul.f32.gmra.mxu0 %v101
  %v123 = vpop.f32.mrf.mxu0
  %v124 = vadd.f32 %v98, %v123
  %125 = vmatmul.f32.gmra.mxu0 %v104
  %v126 = vpop.f32.mrf.mxu0
  %v127 = vadd.f32 %v98, %v126
  %128 = vdwg.mxu0
  %v129 = vmul.f32 %v124, 0.5
  %v130 = vmul.f32 %v127, 0.5
  %v131 = vmul.f32 %v124, 0.70710677
  %v132 = vmul.f32 %v127, 0.70710677
  %v133 = vmul.f32 %v131, %v131
  %v134 = vmin.f32 16.0, %v133
  %v135 = vmul.f32 %v134, 2.1237322e-06
  %v136 = vadd.f32 %v135, 0.00028619796
  %v137 = vmul.f32 %v134, %v136
  %v138 = vadd.f32 %v137, 0.0036580483
  %v139 = vmul.f32 %v134, %v138
  %v140 = vadd.f32 %v139, 0.05243302
  %v141 = vmul.f32 %v134, %v140
  %v142 = vadd.f32 %v141, 0.18741608
  %v143 = vmul.f32 %v134, %v142
  %v144 = vadd.f32 %v143, 1.1283791
  %v145 = vmul.f32 %v131, %v144
  %v146 = vmul.f32 %v134, 3.8918573e-05
  %v147 = vadd.f32 %v146, 0.001143296
  %v148 = vmul.f32 %v134, %v147
  %v149 = vadd.f32 %v148, 0.014752088
  %v150 = vmul.f32 %v134, %v149
  %v151 = vadd.f32 %v150, 0.112945676
  %v152 = vmul.f32 %v134, %v151
  %v153 = vadd.f32 %v152, 0.4994258
  %v154 = vmul.f32 %v134, %v153
  %v155 = vadd.f32 %v154, 1.0
  %v156 = vrcp.pop %v155
  %v157 = vmul.f32 %v155, %v156
  %v158 = vsub.f32 1.0, %v157
  %v159 = vmul.f32 %v156, %v158
  %v160 = vadd.f32 %v156, %v159
  %vm161 = vweird.f32 %v155
  %vm162 = vweird.f32 %v156
  %vm163 = vmor %vm161, %vm162
  %v164 = vsel %vm163, %v156, %v160
  %v165 = vand.u32 2147483647, %v155
  %vm166 = vcmp.eq.f32.partialorder %v165, 8.507059e+37
  %v167 = vand.u32 %v155, 2147483648
  %v168 = vor.u32 1.1754944e-38, %v167
  %v169 = vsel %vm166, %v168, %v164
  %v170 = vmul.f32 %v145, %v169
  %v171 = vmin.f32 %v170, 1.0
  %v172 = vmax.f32 %v171, -1.0
  %v173 = vmul.f32 %v132, %v132
  %v174 = vmin.f32 16.0, %v173
  %v175 = vmul.f32 %v174, 2.1237322e-06
  %v176 = vadd.f32 %v175, 0.00028619796
  %v177 = vmul.f32 %v174, %v176
  %v178 = vadd.f32 %v177, 0.0036580483
  %v179 = vmul.f32 %v174, %v178
  %v180 = vadd.f32 %v179, 0.05243302
  %v181 = vmul.f32 %v174, %v180
  %v182 = vadd.f32 %v181, 0.18741608
  %v183 = vmul.f32 %v174, %v182
  %v184 = vadd.f32 %v183, 1.1283791
  %v185 = vmul.f32 %v132, %v184
  %v186 = vmul.f32 %v174, 3.8918573e-05
  %v187 = vadd.f32 %v186, 0.001143296
  %v188 = vmul.f32 %v174, %v187
  %v189 = vadd.f32 %v188, 0.014752088
  %v190 = vmul.f32 %v174, %v189
  %v191 = vadd.f32 %v190, 0.112945676
  %v192 = vmul.f32 %v174, %v191
  %v193 = vadd.f32 %v192, 0.4994258
  %v194 = vmul.f32 %v174, %v193
  %v195 = vadd.f32 %v194, 1.0
  %v196 = vrcp.pop %v195
  %v197 = vmul.f32 %v195, %v196
  %v198 = vsub.f32 1.0, %v197
  %v199 = vmul.f32 %v196, %v198
  %v200 = vadd.f32 %v196, %v199
  %vm201 = vweird.f32 %v195
  %vm202 = vweird.f32 %v196
  %vm203 = vmor %vm201, %vm202
  %v204 = vsel %vm203, %v196, %v200
  %v205 = vand.u32 2147483647, %v195
  %vm206 = vcmp.eq.f32.partialorder %v205, 8.507059e+37
  %v207 = vand.u32 %v195, 2147483648
  %v208 = vor.u32 1.1754944e-38, %v207
  %v209 = vsel %vm206, %v208, %v204
  %v210 = vmul.f32 %v185, %v209
  %v211 = vmin.f32 %v210, 1.0
  %v212 = vmax.f32 %v211, -1.0
  %v213 = vadd.f32 %v172, 1.0
  %v214 = vadd.f32 %v212, 1.0
  %v215 = vmul.f32 %v129, %v213
  %v216 = vmul.f32 %v130, %v214
  %v217 = vld [vmem:[%s5] sm:$0xff]
  %v218 = vld [vmem:[%s5 + $0x8] sm:$0xff]
  %v219 = vld [vmem:[%s5 + $0x10] sm:$0xff]
  %v220 = vld [vmem:[%s5 + $0x18] sm:$0xff]
  %v221 = vld [vmem:[%s5 + $0x20] sm:$0xff]
  %v222 = vld [vmem:[%s5 + $0x28] sm:$0xff]
  %v223 = vld [vmem:[%s5 + $0x30] sm:$0xff]
  %v224 = vld [vmem:[%s5 + $0x38] sm:$0xff]
  %v225 = vld [vmem:[%s5 + $0x40] sm:$0xff]
  %v226 = vld [vmem:[%s5 + $0x48] sm:$0xff]
  %v227 = vld [vmem:[%s5 + $0x50] sm:$0xff]
  %v228 = vld [vmem:[%s5 + $0x58] sm:$0xff]
  %v229 = vld [vmem:[%s5 + $0x60] sm:$0xff]
  %v230 = vld [vmem:[%s5 + $0x68] sm:$0xff]
  %v231 = vld [vmem:[%s5 + $0x70] sm:$0xff]
  %v232 = vld [vmem:[%s5 + $0x78] sm:$0xff]
  %v233 = vld [vmem:[%s6] sm:$0x1]
  %v235 = vperm.slane %v233, 0
  %237 = vmatpush.msra.mxu0 %v232
  %238 = vmatpush.msra.mxu0 %v231
  %239 = vmatpush.msra.mxu0 %v230
  %240 = vmatpush.msra.mxu0 %v229
  %241 = vmatpush.msra.mxu0 %v228
  %242 = vmatpush.msra.mxu0 %v227
  %243 = vmatpush.msra.mxu0 %v226
  %244 = vmatpush.msra.mxu0 %v225
  %245 = vmatpush.msra.mxu0 %v224
  %246 = vmatpush.msra.mxu0 %v223
  %247 = vmatpush.msra.mxu0 %v222
  %248 = vmatpush.msra.mxu0 %v221
  %249 = vmatpush.msra.mxu0 %v220
  %250 = vmatpush.msra.mxu0 %v219
  %251 = vmatpush.msra.mxu0 %v218
  %252 = vmatpush.msra.mxu0 %v217
  %253 = vmatmul.f32.gmra.mxu0 %v215
  %v254 = vpop.f32.mrf.mxu0
  %v255 = vadd.f32 %v235, %v254
  %256 = vmatmul.f32.gmra.mxu0 %v216
  %v257 = vpop.f32.mrf.mxu0
  %v258 = vadd.f32 %v235, %v257
  %259 = vdwg.mxu0
  %260 = vst.msk [vmem:[%s7] sm:$0xff] %vm30, %v255
  %261 = vst.msk [vmem:[%s7 + $0x8] sm:$0xff] %vm30, %v258
  // Predicated region
  $region30: #{graph_transformer_forward.19} parent=0 // pred_check
    _
  $region31: #{graph_transformer_forward.19} parent=0 // pred_check_branch
    %263 = sbr.rel (0) target = $region33
  $region32: #{graph_transformer_forward.19} parent=0 // pred_region
    _
  $region33: #{graph_transformer_forward.19} parent=0 // pred_fallthru
    _
  // Predicated region
  $region34: #{graph_transformer_forward.19} parent=0 // pred_check
    _
  $region35: #{graph_transformer_forward.19} parent=0 // pred_check_branch
    %265 = sbr.rel (0) target = $region37
  $region36: #{graph_transformer_forward.19} parent=0 // pred_region
    _
  $region37: #{graph_transformer_forward.19} parent=0 // pred_fallthru
    _

// kernel: graph_transformer_forward.22
$region0: #{graph_transformer_forward.22}
  #allocation0 [shape = 'u32[]', space=smem, size = 0x4, offset = 0x4, fixed_abs, tag = 'smem constant byte address 0x4 - core index']
  #allocation1 [shape = 'u32[72,128]{1,0:T(1,128)}', space=vmem, size = 0x9000, scoped, tag = 'internal scratch']
  %s0 = inlined_call_operand.vmem [shape: f32[128,32], index: 0, kind: input, shape index: {}]
  %s1 = inlined_call_operand.vmem [shape: f32[32,64], index: 1, kind: input, shape index: {}]
  %s2 = inlined_call_operand.vmem [shape: f32[1,64], index: 2, kind: input, shape index: {}]
  %s3 = inlined_call_operand.vmem [shape: f32[128,64], index: 3, kind: output, shape index: {}]
  %s4 = sld [smem:[#allocation0]]
  $region22: #{graph_transformer_forward.22} parent=0
    _
  %s6 = ssub.s32 1, %s4
  %s7 = scalar_select 0, %s6, %s4
  // Predicated region
  $region2: #{graph_transformer_forward.22} parent=0 // pred_check
    _
  $region3: #{graph_transformer_forward.22} parent=0 // pred_check_branch
    %9 = sbr.rel (0) target = $region5
  $region4: #{graph_transformer_forward.22} parent=0 // pred_region
    _
  $region5: #{graph_transformer_forward.22} parent=0 // pred_fallthru
    _
  // Predicated region
  $region6: #{graph_transformer_forward.22} parent=0 // pred_check
    _
  $region7: #{graph_transformer_forward.22} parent=0 // pred_check_branch
    %11 = sbr.rel (0) target = $region9
  $region8: #{graph_transformer_forward.22} parent=0 // pred_region
    _
  $region9: #{graph_transformer_forward.22} parent=0 // pred_fallthru
    _
  // Predicated region
  $region10: #{graph_transformer_forward.22} parent=0 // pred_check
    _
  $region11: #{graph_transformer_forward.22} parent=0 // pred_check_branch
    %13 = sbr.rel (0) target = $region13
  $region12: #{graph_transformer_forward.22} parent=0 // pred_region
    _
  $region13: #{graph_transformer_forward.22} parent=0 // pred_fallthru
    _
  %v14 = vld [vmem:[%s0] sm:$0xff]
  %v15 = vld [vmem:[%s0 + $0x8] sm:$0xff]
  %v16 = vld [vmem:[%s0 + $0x10] sm:$0xff]
  %v17 = vld [vmem:[%s0 + $0x18] sm:$0xff]
  %v18 = vld [vmem:[%s0 + $0x20] sm:$0xff]
  %v19 = vld [vmem:[%s0 + $0x28] sm:$0xff]
  %v20 = vld [vmem:[%s0 + $0x30] sm:$0xff]
  %v21 = vld [vmem:[%s0 + $0x38] sm:$0xff]
  %v22 = vld [vmem:[%s0 + $0x40] sm:$0xff]
  %v23 = vld [vmem:[%s0 + $0x48] sm:$0xff]
  %v24 = vld [vmem:[%s0 + $0x50] sm:$0xff]
  %v25 = vld [vmem:[%s0 + $0x58] sm:$0xff]
  %v26 = vld [vmem:[%s0 + $0x60] sm:$0xff]
  %v27 = vld [vmem:[%s0 + $0x68] sm:$0xff]
  %v28 = vld [vmem:[%s0 + $0x70] sm:$0xff]
  %v29 = vld [vmem:[%s0 + $0x78] sm:$0xff]
  %v30 = vld [vmem:[%s1] sm:$0xff]
  %v31 = vld [vmem:[%s1 + $0x8] sm:$0xff]
  %v32 = vld [vmem:[%s1 + $0x10] sm:$0xff]
  %v33 = vld [vmem:[%s1 + $0x18] sm:$0xff]
  %v34 = vld [vmem:[%s2] sm:$0x1]
  %v36 = vperm.slane %v34, 0
  %vm38 = vcmask 261120
  %v40 = vsel %vm38, %v14, 0
  %v43 = vsel %vm38, %v15, 0
  %v46 = vsel %vm38, %v16, 0
  %v49 = vsel %vm38, %v17, 0
  %v52 = vsel %vm38, %v18, 0
  %v55 = vsel %vm38, %v19, 0
  %v58 = vsel %vm38, %v20, 0
  %v61 = vsel %vm38, %v21, 0
  %v64 = vsel %vm38, %v22, 0
  %v67 = vsel %vm38, %v23, 0
  %v70 = vsel %vm38, %v24, 0
  %v73 = vsel %vm38, %v25, 0
  %v76 = vsel %vm38, %v26, 0
  %v79 = vsel %vm38, %v27, 0
  %v82 = vsel %vm38, %v28, 0
  %v85 = vsel %vm38, %v29, 0
  %87 = vmatpush.msra.mxu0 0.0
  %88 = vmatpush.msra.mxu0 0.0
  %89 = vmatpush.msra.mxu0 0.0
  %90 = vmatpush.msra.mxu0 0.0
  %91 = vmatpush.msra.mxu0 0.0
  %92 = vmatpush.msra.mxu0 0.0
  %93 = vmatpush.msra.mxu0 0.0
  %94 = vmatpush.msra.mxu0 0.0
  %95 = vmatpush.msra.mxu0 0.0
  %96 = vmatpush.msra.mxu0 0.0
  %97 = vmatpush.msra.mxu0 0.0
  %98 = vmatpush.msra.mxu0 0.0
  %99 = vmatpush.msra.mxu0 %v33
  %100 = vmatpush.msra.mxu0 %v32
  %101 = vmatpush.msra.mxu0 %v31
  %102 = vmatpush.msra.mxu0 %v30
  %103 = vmatmul.f32.gmra.mxu0 %v40
  %v104 = vpop.f32.mrf.mxu0
  %v105 = vadd.f32 %v36, %v104
  %106 = vmatmul.f32.gmra.mxu0 %v43
  %v107 = vpop.f32.mrf.mxu0
  %v108 = vadd.f32 %v36, %v107
  %109 = vmatmul.f32.gmra.mxu0 %v46
  %v110 = vpop.f32.mrf.mxu0
  %v111 = vadd.f32 %v36, %v110
  %112 = vmatmul.f32.gmra.mxu0 %v49
  %v113 = vpop.f32.mrf.mxu0
  %v114 = vadd.f32 %v36, %v113
  %115 = vmatmul.f32.gmra.mxu0 %v52
  %v116 = vpop.f32.mrf.mxu0
  %v117 = vadd.f32 %v36, %v116
  %118 = vmatmul.f32.gmra.mxu0 %v55
  %v119 = vpop.f32.mrf.mxu0
  %v120 = vadd.f32 %v36, %v119
  %121 = vmatmul.f32.gmra.mxu0 %v58
  %v122 = vpop.f32.mrf.mxu0
  %v123 = vadd.f32 %v36, %v122
  %124 = vmatmul.f32.gmra.mxu0 %v61
  %v125 = vpop.f32.mrf.mxu0
  %v126 = vadd.f32 %v36, %v125
  %127 = vmatmul.f32.gmra.mxu0 %v64
  %v128 = vpop.f32.mrf.mxu0
  %v129 = vadd.f32 %v36, %v128
  %130 = vmatmul.f32.gmra.mxu0 %v67
  %v131 = vpop.f32.mrf.mxu0
  %v132 = vadd.f32 %v36, %v131
  %133 = vmatmul.f32.gmra.mxu0 %v70
  %v134 = vpop.f32.mrf.mxu0
  %v135 = vadd.f32 %v36, %v134
  %136 = vmatmul.f32.gmra.mxu0 %v73
  %v137 = vpop.f32.mrf.mxu0
  %v138 = vadd.f32 %v36, %v137
  %139 = vmatmul.f32.gmra.mxu0 %v76
  %v140 = vpop.f32.mrf.mxu0
  %v141 = vadd.f32 %v36, %v140
  %142 = vmatmul.f32.gmra.mxu0 %v79
  %v143 = vpop.f32.mrf.mxu0
  %v144 = vadd.f32 %v36, %v143
  %145 = vmatmul.f32.gmra.mxu0 %v82
  %v146 = vpop.f32.mrf.mxu0
  %v147 = vadd.f32 %v36, %v146
  %148 = vmatmul.f32.gmra.mxu0 %v85
  %v149 = vpop.f32.mrf.mxu0
  %v150 = vadd.f32 %v36, %v149
  %151 = vdwg.mxu0
  %vm152 = vcmask 523264
  %153 = vst.msk [vmem:[%s3] sm:$0xff] %vm152, %v105
  %154 = vst.msk [vmem:[%s3 + $0x8] sm:$0xff] %vm152, %v108
  %155 = vst.msk [vmem:[%s3 + $0x10] sm:$0xff] %vm152, %v111
  %156 = vst.msk [vmem:[%s3 + $0x18] sm:$0xff] %vm152, %v114
  %157 = vst.msk [vmem:[%s3 + $0x20] sm:$0xff] %vm152, %v117
  %158 = vst.msk [vmem:[%s3 + $0x28] sm:$0xff] %vm152, %v120
  %159 = vst.msk [vmem:[%s3 + $0x30] sm:$0xff] %vm152, %v123
  %160 = vst.msk [vmem:[%s3 + $0x38] sm:$0xff] %vm152, %v126
  %161 = vst.msk [vmem:[%s3 + $0x40] sm:$0xff] %vm152, %v129
  %162 = vst.msk [vmem:[%s3 + $0x48] sm:$0xff] %vm152, %v132
  %163 = vst.msk [vmem:[%s3 + $0x50] sm:$0xff] %vm152, %v135
  %164 = vst.msk [vmem:[%s3 + $0x58] sm:$0xff] %vm152, %v138
  %165 = vst.msk [vmem:[%s3 + $0x60] sm:$0xff] %vm152, %v141
  %166 = vst.msk [vmem:[%s3 + $0x68] sm:$0xff] %vm152, %v144
  %167 = vst.msk [vmem:[%s3 + $0x70] sm:$0xff] %vm152, %v147
  %168 = vst.msk [vmem:[%s3 + $0x78] sm:$0xff] %vm152, %v150
  // Predicated region
  $region14: #{graph_transformer_forward.22} parent=0 // pred_check
    _
  $region15: #{graph_transformer_forward.22} parent=0 // pred_check_branch
    %170 = sbr.rel (0) target = $region17
  $region16: #{graph_transformer_forward.22} parent=0 // pred_region
    _
  $region17: #{graph_transformer_forward.22} parent=0 // pred_fallthru
    _
  // Predicated region
  $region18: #{graph_transformer_forward.22} parent=0 // pred_check
    _
  $region19: #{graph_transformer_forward.22} parent=0 // pred_check_branch
    %172 = sbr.rel (0) target = $region21
  $region20: #{graph_transformer_forward.22} parent=0 // pred_region
    _
  $region21: #{graph_transformer_forward.22} parent=0 // pred_fallthru
    _

// kernel: graph_transformer_forward.27
$region0: #{graph_transformer_forward.27}
  #allocation0 [shape = 'u32[]', space=smem, size = 0x4, offset = 0x4, fixed_abs, tag = 'smem constant byte address 0x4 - core index']
  #allocation1 [shape = 'u32[72,128]{1,0:T(1,128)}', space=vmem, size = 0x9000, scoped, tag = 'internal scratch']
  %s0 = inlined_call_operand.vmem [shape: f32[16,32], index: 0, kind: input, shape index: {}]
  %s1 = inlined_call_operand.vmem [shape: f32[16,32], index: 1, kind: input, shape index: {}]
  %s2 = inlined_call_operand.vmem [shape: f32[32,1], index: 2, kind: input, shape index: {}]
  %s3 = inlined_call_operand.vmem [shape: f32[32,1], index: 3, kind: input, shape index: {}]
  %s4 = inlined_call_operand.hbm [shape: f32[16,32], index: 4, kind: output, shape index: {}]
  %s5 = sld [smem:[#allocation0]]
  $region26: #{graph_transformer_forward.27} parent=0
    _
  %s7 = ssub.s32 1, %s5
  %s8 = scalar_select 0, %s7, %s5
  $region1: #{graph_transformer_forward.27} parent=0
    #allocation2 [shape = 'u8[8192]{0}', space=vmem, size = 0x2000, scoped, tag = 'output window, operand 0, single buffered']
    #allocation3 [shape = 's32[1]{0}', space=sflag, size = 0x4, scoped, tag = 'scoped memory for graph_transformer_forward.27']
    %9 = vsyncpa [#allocation3], 0
    // Predicated region
    $region2: #{graph_transformer_forward.27} parent=1 // pred_check
      _
    $region3: #{graph_transformer_forward.27} parent=1 // pred_check_branch
      %11 = sbr.rel (0) target = $region5
    $region4: #{graph_transformer_forward.27} parent=1 // pred_region
      _
    $region5: #{graph_transformer_forward.27} parent=1 // pred_fallthru
      _
    // Predicated region
    $region6: #{graph_transformer_forward.27} parent=1 // pred_check
      _
    $region7: #{graph_transformer_forward.27} parent=1 // pred_check_branch
      %13 = sbr.rel (0) target = $region9
    $region8: #{graph_transformer_forward.27} parent=1 // pred_region
      _
    $region9: #{graph_transformer_forward.27} parent=1 // pred_fallthru
      _
    // Predicated region
    $region10: #{graph_transformer_forward.27} parent=1 // pred_check
      _
    $region11: #{graph_transformer_forward.27} parent=1 // pred_check_branch
      %15 = sbr.rel (0) target = $region13
    $region12: #{graph_transformer_forward.27} parent=1 // pred_region
      _
    $region13: #{graph_transformer_forward.27} parent=1 // pred_fallthru
      _
    // Predicated region
    $region14: #{graph_transformer_forward.27} parent=1 // pred_check
      _
    $region15: #{graph_transformer_forward.27} parent=1 // pred_check_branch
      %17 = sbr.rel (0) target = $region17
    $region16: #{graph_transformer_forward.27} parent=1 // pred_region
      _
    $region17: #{graph_transformer_forward.27} parent=1 // pred_fallthru
      _
    %v18 = vld [vmem:[%s0] sm:$0xff]
    %v19 = vld [vmem:[%s0 + $0x8] sm:$0xff]
    %v20 = vld [vmem:[%s1] sm:$0xff]
    %v21 = vld [vmem:[%s1 + $0x8] sm:$0xff]
    %v22 = vld [vmem:[%s2] sm:$0xff]
    %v23 = vld [vmem:[%s2 + $0x8] sm:$0xff]
    %v24 = vld [vmem:[%s2 + $0x10] sm:$0xff]
    %v25 = vld [vmem:[%s2 + $0x18] sm:$0xff]
    %v26 = vld [vmem:[%s3] sm:$0xff]
    %v27 = vld [vmem:[%s3 + $0x8] sm:$0xff]
    %v28 = vld [vmem:[%s3 + $0x10] sm:$0xff]
    %v29 = vld [vmem:[%s3 + $0x18] sm:$0xff]
    %vm30 = vcmask 261120
    %v32 = vsel %vm30, %v20, 0
    %v35 = vsel %vm30, %v21, 0
    %37 = vmatpush.msra.mxu0 0.0
    %38 = vmatpush.msra.mxu0 0.0
    %39 = vmatpush.msra.mxu0 0.0
    %40 = vmatpush.msra.mxu0 0.0
    %41 = vmatpush.msra.mxu0 0.0
    %42 = vmatpush.msra.mxu0 0.0
    %43 = vmatpush.msra.mxu0 0.0
    %44 = vmatpush.msra.mxu0 0.0
    %45 = vmatpush.msra.mxu0 0.0
    %46 = vmatpush.msra.mxu0 0.0
    %47 = vmatpush.msra.mxu0 0.0
    %48 = vmatpush.msra.mxu0 0.0
    %49 = vmatpush.msra.mxu0 %v29
    %50 = vmatpush.msra.mxu0 %v28
    %51 = vmatpush.msra.mxu0 %v27
    %52 = vmatpush.msra.mxu0 %v26
    %53 = vmatmul.f32.gmra.mxu0 %v32
    %v54 = vpop.f32.mrf.mxu0
    %v55 = vadd.f32 0.0, %v54
    %56 = vmatmul.f32.gmra.mxu0 %v35
    %v57 = vpop.f32.mrf.mxu0
    %v58 = vadd.f32 0.0, %v57
    %59 = vdwg.mxu0
    %v61 = vsel %vm30, %v18, 0
    %v64 = vsel %vm30, %v19, 0
    %66 = vmatpush.msra.mxu0 0.0
    %67 = vmatpush.msra.mxu0 0.0
    %68 = vmatpush.msra.mxu0 0.0
    %69 = vmatpush.msra.mxu0 0.0
    %70 = vmatpush.msra.mxu0 0.0
    %71 = vmatpush.msra.mxu0 0.0
    %72 = vmatpush.msra.mxu0 0.0
    %73 = vmatpush.msra.mxu0 0.0
    %74 = vmatpush.msra.mxu0 0.0
    %75 = vmatpush.msra.mxu0 0.0
    %76 = vmatpush.msra.mxu0 0.0
    %77 = vmatpush.msra.mxu0 0.0
    %78 = vmatpush.msra.mxu0 %v25
    %79 = vmatpush.msra.mxu0 %v24
    %80 = vmatpush.msra.mxu0 %v23
    %81 = vmatpush.msra.mxu0 %v22
    %82 = vmatmul.f32.gmra.mxu0 %v61
    %v83 = vpop.f32.mrf.mxu0
    %v84 = vadd.f32 %v55, %v83
    %85 = vmatmul.f32.gmra.mxu0 %v64
    %v86 = vpop.f32.mrf.mxu0
    %v87 = vadd.f32 %v58, %v86
    %88 = vdwg.mxu0
    %v89 = vxor.u32 %v84, 2147483648
    %v90 = vxor.u32 %v87, 2147483648
    %v91 = vmul.f32 %v89, 1.442695
    %v92 = vpow.pop %v91
    %v93 = vmul.f32 %v90, 1.442695
    %v94 = vpow.pop %v93
    %v95 = vadd.f32 %v92, 1.0
    %v96 = vadd.f32 %v94, 1.0
    %v97 = vrcp.pop %v95
    %v98 = vmul.f32 %v95, %v97
    %v99 = vsub.f32 1.0, %v98
    %v100 = vmul.f32 %v97, %v99
    %v101 = vadd.f32 %v97, %v100
    %vm102 = vweird.f32 %v95
    %vm103 = vweird.f32 %v97
    %vm104 = vmor %vm102, %vm103
    %v105 = vsel %vm104, %v97, %v101
    %v106 = vand.u32 2147483647, %v95
    %vm107 = vcmp.eq.f32.partialorder %v106, 8.507059e+37
    %v108 = vand.u32 %v95, 2147483648
    %v109 = vor.u32 1.1754944e-38, %v108
    %v110 = vsel %vm107, %v109, %v105
    %v111 = vmul.f32 1.0, %v110
    %v112 = vrcp.pop %v96
    %v113 = vmul.f32 %v96, %v112
    %v114 = vsub.f32 1.0, %v113
    %v115 = vmul.f32 %v112, %v114
    %v116 = vadd.f32 %v112, %v115
    %vm117 = vweird.f32 %v96
    %vm118 = vweird.f32 %v112
    %vm119 = vmor %vm117, %vm118
    %v120 = vsel %vm119, %v112, %v116
    %v121 = vand.u32 2147483647, %v96
    %vm122 = vcmp.eq.f32.partialorder %v121, 8.507059e+37
    %v123 = vand.u32 %v96, 2147483648
    %v124 = vor.u32 1.1754944e-38, %v123
    %v125 = vsel %vm122, %v124, %v120
    %v126 = vmul.f32 1.0, %v125
    %128 = vset.pattern.permute.xlu0 0
    %129 = vperm.xlu0 %128, %v111
    %v130 = vpop.permute.xlu0 %129
    %133 = vset.pattern.permute.xlu0 0
    %134 = vperm.xlu0 %133, %v126
    %v135 = vpop.permute.xlu0 %134
    %v137 = vmul.f32 %v18, %v130
    %v138 = vmul.f32 %v19, %v135
    %v139 = vsub.f32 1.0, %v111
    %v140 = vsub.f32 1.0, %v126
    %142 = vset.pattern.permute.xlu0 0
    %143 = vperm.xlu0 %142, %v139
    %v144 = vpop.permute.xlu0 %143
    %147 = vset.pattern.permute.xlu0 0
    %148 = vperm.xlu0 %147, %v140
    %v149 = vpop.permute.xlu0 %148
    %v151 = vmul.f32 %v20, %v144
    %v152 = vmul.f32 %v21, %v149
    %v153 = vadd.f32 %v137, %v151
    %v154 = vadd.f32 %v138, %v152
    %155 = vst.msk [vmem:[#allocation2] sm:$0xff] %vm30, %v153
    %156 = vst.msk [vmem:[#allocation2 + $0x8] sm:$0xff] %vm30, %v154
    // Predicated region
    $region18: #{graph_transformer_forward.27} parent=1 // pred_check
      _
    $region19: #{graph_transformer_forward.27} parent=1 // pred_check_branch
      %158 = sbr.rel (0) target = $region21
    $region20: #{graph_transformer_forward.27} parent=1 // pred_region
      %160 = vsyncadd [#allocation3], 0
      %s161 = sshll.u32 [#allocation2], 4
      %s162 = int_to_ptr.vmem [resolvable:$true] %s161
      %s163 = sshll.u32 %s4, 4
      %s164 = int_to_ptr.hbm [resolvable:$true] %s163
      %169 = dma.vmem_to_hbm [thread:$0]  %s162, 256, %s164, [#allocation3], 128, 128, 8
    $region21: #{graph_transformer_forward.27} parent=1 // pred_fallthru
      _
    // Predicated region
    $region22: #{graph_transformer_forward.27} parent=1 // pred_check
      _
    $region23: #{graph_transformer_forward.27} parent=1 // pred_check_branch
      %171 = sbr.rel (0) target = $region25
    $region24: #{graph_transformer_forward.27} parent=1 // pred_region
      %173 = dma.done [#allocation3], 256
    $region25: #{graph_transformer_forward.27} parent=1 // pred_fallthru
      _
    %174 = vsyncpa [#allocation3], 1

</llo_original>
